<compile_context>
chip_gen: v7x
topology: tpu7x:2x2x1
jax: 0.10.0
libtpu: 0.0.40
codegen_flags: <defaults>
</compile_context>

<pallas_src>
import functools
import math

import jax
import jax.numpy as jnp
from jax.experimental import pallas as pl
from jax.experimental.pallas import tpu as pltpu


LOGIT_PAD = 128   # lane-dense output slab width

CFG = dict(vocab_size=100, hidden=32, n_layers=2, n_heads=4,
           intermediate=64, max_pos=16, type_vocab=2, num_labels=2)


# ----------------------------- fused Pallas kernel -------------------------

def _bert_forward_kernel(emb_ref, mask_ref, misc_ref,
                         wqkv_ref, wo_ref, w1_ref, w2_ref, lvec_ref,
                         pooler_ref, cls_ref, o_ref,
                         *, B, S, H, nH, Dh, L, I, eps):
    """Single grid step: whole batch (B*S, H) slab resident in VMEM/vregs."""
    f32 = jnp.float32
    bf16 = jnp.bfloat16

    def layer_norm(x, g, b):
        mu = jnp.mean(x, axis=-1, keepdims=True)
        var = jnp.mean(jnp.square(x - mu), axis=-1, keepdims=True)
        return (x - mu) * jax.lax.rsqrt(var + eps) * g + b

    # Hoisted: one (S, S) additive mask bias per sequence.
    mask_mats = [jnp.broadcast_to(mask_ref[b:b + 1, :], (S, S))
                 for b in range(B)]

    # --- embeddings LayerNorm (no residual) ---
    misc = misc_ref[...]                                   # (2, H): [gamma; beta]
    h = layer_norm(emb_ref[...], misc[0:1, :], misc[1:2, :])   # (B*S, H) f32

    # --- encoder layers (static unroll, all weights VMEM-resident) ---
    for l in range(L):
        vec = lvec_ref[l]                                  # (4, W) f32
        bqkv = vec[0:1, 0:3 * H]
        bo = vec[1:2, 0:H]
        ln1g = vec[1:2, H:2 * H]
        ln1b = vec[1:2, 2 * H:3 * H]
        b1 = vec[2:3, 0:I]
        b2 = vec[3:4, 0:H]
        ln2g = vec[3:4, H:2 * H]
        ln2b = vec[3:4, 2 * H:3 * H]

        wqkv = wqkv_ref[l]                                 # (H, 3H) bf16
        wo = wo_ref[l]                                     # (H, H)  bf16

        # Fused QKV projection on the whole slab; 1/sqrt(Dh) is pre-folded
        # into the Q columns/bias (prepare_params).
        qkv = jnp.dot(h.astype(bf16), wqkv,
                      preferred_element_type=f32) + bqkv   # (B*S, 3H) f32

        # Multi-head attention, per sequence / per head (static unroll).
        seq_blocks = []
        for b in range(B):
            qkv_b = qkv[b * S:(b + 1) * S, :]              # (S, 3H)
            acc = None
            for hh in range(nH):
                lo = hh * Dh
                qh = qkv_b[:, lo:lo + Dh]                  # (S, Dh)
                kh = qkv_b[:, H + lo:H + lo + Dh]
                vh = qkv_b[:, 2 * H + lo:2 * H + lo + Dh]
                # Contract dim 1 of both operands (no materialized K^T).
                s = jax.lax.dot_general(qh, kh, (((1,), (1,)), ((), ())),
                                        preferred_element_type=f32)
                s = s + mask_mats[b]
                s = s - jnp.max(s, axis=-1, keepdims=True)
                p = jnp.exp(s)
                p = p * pl.reciprocal(jnp.sum(p, axis=-1, keepdims=True),
                                      approx=True)
                ctx = jnp.dot(p, vh, preferred_element_type=f32)   # (S, Dh)
                # Accumulate through the matching sublane rows of W_o instead
                # of a lane-axis head concat.
                contrib = jnp.dot(ctx.astype(bf16), wo[lo:lo + Dh, :],
                                  preferred_element_type=f32)      # (S, H)
                acc = contrib if acc is None else acc + contrib
            seq_blocks.append(acc)
        attn_out = jnp.concatenate(seq_blocks, axis=0) + bo         # (B*S, H)

        h1 = layer_norm(attn_out + h, ln1g, ln1b)

        ff = jnp.dot(h1.astype(bf16), w1_ref[l],
                     preferred_element_type=f32) + b1
        # tanh-GELU (EUP slot); tiny numeric deviation vs HF's exact erf GELU.
        ff = jax.nn.gelu(ff, approximate=True)
        ff = jnp.dot(ff.astype(bf16), w2_ref[l],
                     preferred_element_type=f32) + b2
        h = layer_norm(ff + h1, ln2g, ln2b)

    # --- pooler on each sequence's [CLS] token, then classifier ---
    cls_rows = jnp.concatenate([h[b * S:b * S + 1, :] for b in range(B)],
                               axis=0)                               # (B, H)
    pooled = jnp.tanh(jnp.dot(cls_rows, pooler_ref[0:H, :],
                              preferred_element_type=f32)
                      + pooler_ref[H:H + 1, :])
    # nn.Dropout(0.1) -> identity at inference.
    logits = (jnp.dot(pooled, cls_ref[0:H, :], preferred_element_type=f32)
              + cls_ref[H:H + 1, :])                                 # (B, 128)
    o_ref[...] = logits.astype(o_ref.dtype)


# ----------------------------- params & packing ---------------------------

def init_params(key, cfg):
    H, I = cfg["hidden"], cfg["intermediate"]
    keys = iter(jax.random.split(key, 64))

    def nrm(shape):
        return 0.02 * jax.random.normal(next(keys), shape, jnp.float32)

    params = dict(
        word_emb=nrm((cfg["vocab_size"], H)),
        pos_emb=nrm((cfg["max_pos"], H)),
        type_emb=nrm((cfg["type_vocab"], H)),
        emb_ln_g=jnp.ones((H,), jnp.float32),
        emb_ln_b=jnp.zeros((H,), jnp.float32),
        pooler_w=nrm((H, H)),
        pooler_b=jnp.zeros((H,), jnp.float32),
        cls_w=nrm((H, cfg["num_labels"])),
        cls_b=jnp.zeros((cfg["num_labels"],), jnp.float32),
        layers=[],
    )
    for _ in range(cfg["n_layers"]):
        params["layers"].append(dict(
            wq=nrm((H, H)), bq=jnp.zeros((H,), jnp.float32),
            wk=nrm((H, H)), bk=jnp.zeros((H,), jnp.float32),
            wv=nrm((H, H)), bv=jnp.zeros((H,), jnp.float32),
            wo=nrm((H, H)), bo=jnp.zeros((H,), jnp.float32),
            ln1_g=jnp.ones((H,), jnp.float32), ln1_b=jnp.zeros((H,), jnp.float32),
            w1=nrm((H, I)), b1=jnp.zeros((I,), jnp.float32),
            w2=nrm((I, H)), b2=jnp.zeros((H,), jnp.float32),
            ln2_g=jnp.ones((H,), jnp.float32), ln2_b=jnp.zeros((H,), jnp.float32),
        ))
    return params


def prepare_params(params, cfg):
    """One-time weight packing: QKV fusion (+scale fold), per-layer vector
    slabs, pooler/classifier w|b slabs, bf16 casts for MXU operands."""
    H, I = cfg["hidden"], cfg["intermediate"]
    nH = cfg["n_heads"]
    Dh = H // nH
    NL = cfg["num_labels"]
    scale = 1.0 / math.sqrt(Dh)
    W = max(3 * H, I)

    def pad_row(v):
        return jnp.zeros((W,), jnp.float32).at[:v.shape[0]].set(v)

    wqkv, wo, w1, w2, lvec = [], [], [], [], []
    for lp in params["layers"]:
        wqkv.append(jnp.concatenate([lp["wq"] * scale, lp["wk"], lp["wv"]],
                                    axis=1))                        # (H, 3H)
        wo.append(lp["wo"])
        w1.append(lp["w1"])
        w2.append(lp["w2"])
        lvec.append(jnp.stack([
            pad_row(jnp.concatenate([lp["bq"] * scale, lp["bk"], lp["bv"]])),
            pad_row(jnp.concatenate([lp["bo"], lp["ln1_g"], lp["ln1_b"]])),
            pad_row(lp["b1"]),
            pad_row(jnp.concatenate([lp["b2"], lp["ln2_g"], lp["ln2_b"]])),
        ]))                                                          # (4, W)

    pooler = jnp.zeros((H + 8, H), jnp.float32)
    pooler = pooler.at[:H, :].set(params["pooler_w"])
    pooler = pooler.at[H, :].set(params["pooler_b"])

    clsp = jnp.zeros((H + 8, LOGIT_PAD), jnp.float32)
    clsp = clsp.at[:H, :NL].set(params["cls_w"])
    clsp = clsp.at[H, :NL].set(params["cls_b"])

    return dict(
        word_emb=params["word_emb"],
        pos_emb=params["pos_emb"],
        type_emb=params["type_emb"],
        misc=jnp.stack([params["emb_ln_g"], params["emb_ln_b"]]),    # (2, H)
        wqkv=jnp.stack(wqkv).astype(jnp.bfloat16),                   # (L, H, 3H)
        wo=jnp.stack(wo).astype(jnp.bfloat16),                       # (L, H, H)
        w1=jnp.stack(w1).astype(jnp.bfloat16),                       # (L, H, I)
        w2=jnp.stack(w2).astype(jnp.bfloat16),                       # (L, I, H)
        lvec=jnp.stack(lvec),                                        # (L, 4, W)
        pooler=pooler,                                               # (H+8, H)
        cls=clsp,                                                    # (H+8, 128)
    )


# ------------------------------ forward (jit) ------------------------------

def make_forward(cfg):
    nH = cfg["n_heads"]
    NL = cfg["num_labels"]

    @jax.jit
    def forward(pk, input_ids, attention_mask, token_type_ids):
        B, S = input_ids.shape
        H = pk["word_emb"].shape[1]
        L = pk["wqkv"].shape[0]
        I = pk["w1"].shape[2]
        Dh = H // nH
        W = pk["lvec"].shape[2]

        # BERT embedding gathers (JAX glue; tiny).
        emb = (pk["word_emb"][input_ids]
               + pk["pos_emb"][:S][None, :, :]
               + pk["type_emb"][token_type_ids]).astype(jnp.float32)
        emb = emb.reshape(B * S, H)

        # Extended attention mask as additive bias, (B, S).
        mask_bias = (1.0 - attention_mask.astype(jnp.float32)) * (-10000.0)

        kernel = functools.partial(_bert_forward_kernel, B=B, S=S, H=H, nH=nH,
                                   Dh=Dh, L=L, I=I, eps=1e-12)

        spec2 = lambda s: pl.BlockSpec(s, lambda i: (0, 0))
        spec3 = lambda s: pl.BlockSpec(s, lambda i: (0, 0, 0))

        out = pl.pallas_call(
            kernel,
            out_shape=jax.ShapeDtypeStruct((B, LOGIT_PAD), jnp.float32),
            grid=(1,),
            in_specs=[
                spec2((B * S, H)),                # emb slab
                spec2((B, S)),                    # mask bias
                spec2((2, H)),                    # emb LayerNorm gamma/beta
                spec3((L, H, 3 * H)),             # fused QKV weights (bf16)
                spec3((L, H, H)),                 # attn out proj (bf16)
                spec3((L, H, I)),                 # FFN in (bf16)
                spec3((L, I, H)),                 # FFN out (bf16)
                spec3((L, 4, W)),                 # per-layer bias/LN slab (f32)
                spec2((H + 8, H)),                # pooler w|b
                spec2((H + 8, LOGIT_PAD)),        # classifier w|b (lane padded)
            ],
            out_specs=spec2((B, LOGIT_PAD)),
            compiler_params=pltpu.CompilerParams(
                dimension_semantics=("arbitrary",)),
        )(emb, mask_bias, pk["misc"], pk["wqkv"], pk["wo"], pk["w1"],
          pk["w2"], pk["lvec"], pk["pooler"], pk["cls"])

        return out[:, :NL]

    return forward


# ------------------------------- main -------------------------------------

if __name__ == "__main__":
    B, S = 2, 8
    root = jax.random.PRNGKey(0)
    k_param, k_ids = jax.random.split(root, 2)

    params = init_params(k_param, CFG)
    packed = prepare_params(params, CFG)
    forward = make_forward(CFG)

    input_ids = jax.random.randint(k_ids, (B, S), 0, CFG["vocab_size"],
                                   dtype=jnp.int32)
    token_type_ids = jnp.concatenate(
        [jnp.zeros((B, S // 2), jnp.int32), jnp.ones((B, S // 2), jnp.int32)],
        axis=1)
    attention_mask = jnp.ones((B, S), jnp.float32)
    attention_mask = attention_mask.at[1, S - 2:].set(0.0)  # pad tail of row 1

    logits = forward(packed, input_ids, attention_mask, token_type_ids)
    logits = jax.block_until_ready(logits)
    assert logits.shape == (B, 2), logits.shape
    assert bool(jnp.all(jnp.isfinite(logits)))
    print("KERNEL_OK")
</pallas_src>

<mosaic_0001>
module attributes {stable_mosaic.version = 11 : i64} {
  func.func @_bert_forward_kernel(%arg0: i32, %arg1: memref<16x32xf32, #tpu.memory_space<vmem>>, %arg2: memref<2x8xf32, #tpu.memory_space<vmem>>, %arg3: memref<2x32xf32, #tpu.memory_space<vmem>>, %arg4: memref<2x32x96xbf16, #tpu.memory_space<vmem>>, %arg5: memref<2x32x32xbf16, #tpu.memory_space<vmem>>, %arg6: memref<2x32x64xbf16, #tpu.memory_space<vmem>>, %arg7: memref<2x64x32xbf16, #tpu.memory_space<vmem>>, %arg8: memref<2x4x96xf32, #tpu.memory_space<vmem>>, %arg9: memref<40x32xf32, #tpu.memory_space<vmem>>, %arg10: memref<40x128xf32, #tpu.memory_space<vmem>>, %arg11: memref<2x128xf32, #tpu.memory_space<vmem>>) attributes {dimension_semantics = [#tpu.dimension_semantics<arbitrary>], iteration_bounds = array<i64: 1>, scalar_prefetch = 0 : i64, scratch_operands = 0 : i64, tpu.core_type = #tpu.core_type<tc>, window_params = [{pipeline_mode = #tpu.pipeline_mode<synchronous>, transform_indices = @transform_0, window_bounds = array<i64: 16, 32>}, {pipeline_mode = #tpu.pipeline_mode<synchronous>, transform_indices = @transform_1, window_bounds = array<i64: 2, 8>}, {pipeline_mode = #tpu.pipeline_mode<synchronous>, transform_indices = @transform_2, window_bounds = array<i64: 2, 32>}, {pipeline_mode = #tpu.pipeline_mode<synchronous>, transform_indices = @transform_3, window_bounds = array<i64: 2, 32, 96>}, {pipeline_mode = #tpu.pipeline_mode<synchronous>, transform_indices = @transform_4, window_bounds = array<i64: 2, 32, 32>}, {pipeline_mode = #tpu.pipeline_mode<synchronous>, transform_indices = @transform_5, window_bounds = array<i64: 2, 32, 64>}, {pipeline_mode = #tpu.pipeline_mode<synchronous>, transform_indices = @transform_6, window_bounds = array<i64: 2, 64, 32>}, {pipeline_mode = #tpu.pipeline_mode<synchronous>, transform_indices = @transform_7, window_bounds = array<i64: 2, 4, 96>}, {pipeline_mode = #tpu.pipeline_mode<synchronous>, transform_indices = @transform_8, window_bounds = array<i64: 40, 32>}, {pipeline_mode = #tpu.pipeline_mode<synchronous>, transform_indices = @transform_9, window_bounds = array<i64: 40, 128>}, {pipeline_mode = #tpu.pipeline_mode<synchronous>, transform_indices = @transform_10, window_bounds = array<i64: 2, 128>}]} {
    %c0 = arith.constant 0 : index
    %c0_0 = arith.constant 0 : index
    %0 = vector.load %arg2[%c0, %c0_0] : memref<2x8xf32, #tpu.memory_space<vmem>>, vector<1x8xf32>
    %1 = vector.shape_cast %0 : vector<1x8xf32> to vector<1x8xf32>
    %2 = vector.broadcast %1 : vector<1x8xf32> to vector<8x8xf32>
    %c1 = arith.constant 1 : index
    %c0_1 = arith.constant 0 : index
    %3 = vector.load %arg2[%c1, %c0_1] : memref<2x8xf32, #tpu.memory_space<vmem>>, vector<1x8xf32>
    %4 = vector.shape_cast %3 : vector<1x8xf32> to vector<1x8xf32>
    %5 = vector.broadcast %4 : vector<1x8xf32> to vector<8x8xf32>
    %c0_2 = arith.constant 0 : index
    %c0_3 = arith.constant 0 : index
    %6 = vector.load %arg3[%c0_2, %c0_3] : memref<2x32xf32, #tpu.memory_space<vmem>>, vector<2x32xf32>
    %c0_4 = arith.constant 0 : index
    %c0_5 = arith.constant 0 : index
    %7 = vector.load %arg1[%c0_4, %c0_5] : memref<16x32xf32, #tpu.memory_space<vmem>>, vector<16x32xf32>
    %8 = vector.extract_strided_slice %6 {offsets = [0, 0], sizes = [1, 32], strides = [1, 1]} : vector<2x32xf32> to vector<1x32xf32>
    %9 = vector.extract_strided_slice %6 {offsets = [1, 0], sizes = [1, 32], strides = [1, 1]} : vector<2x32xf32> to vector<1x32xf32>
    %cst = arith.constant dense<0.000000e+00> : vector<16xf32>
    %10 = vector.multi_reduction <add>, %7, %cst [1] : vector<16x32xf32> to vector<16xf32>
    %11 = vector.shape_cast %10 : vector<16xf32> to vector<16x1xf32>
    %cst_6 = arith.constant 3.200000e+01 : f32
    %12 = vector.broadcast %cst_6 : f32 to vector<16x1xf32>
    %13 = arith.divf %11, %12 : vector<16x1xf32>
    %14 = vector.broadcast %13 : vector<16x1xf32> to vector<16x32xf32>
    %15 = arith.subf %7, %14 : vector<16x32xf32>
    %16 = arith.mulf %15, %15 : vector<16x32xf32>
    %cst_7 = arith.constant dense<0.000000e+00> : vector<16xf32>
    %17 = vector.multi_reduction <add>, %16, %cst_7 [1] : vector<16x32xf32> to vector<16xf32>
    %18 = vector.shape_cast %17 : vector<16xf32> to vector<16x1xf32>
    %cst_8 = arith.constant 3.200000e+01 : f32
    %19 = vector.broadcast %cst_8 : f32 to vector<16x1xf32>
    %20 = arith.divf %18, %19 : vector<16x1xf32>
    %21 = vector.broadcast %13 : vector<16x1xf32> to vector<16x32xf32>
    %22 = arith.subf %7, %21 : vector<16x32xf32>
    %cst_9 = arith.constant 9.99999996E-13 : f32
    %23 = vector.broadcast %cst_9 : f32 to vector<16x1xf32>
    %24 = arith.addf %20, %23 : vector<16x1xf32>
    %25 = math.rsqrt %24 : vector<16x1xf32>
    %26 = vector.broadcast %25 : vector<16x1xf32> to vector<16x32xf32>
    %27 = arith.mulf %22, %26 : vector<16x32xf32>
    %28 = vector.broadcast %8 : vector<1x32xf32> to vector<16x32xf32>
    %29 = arith.mulf %27, %28 : vector<16x32xf32>
    %30 = vector.broadcast %9 : vector<1x32xf32> to vector<16x32xf32>
    %31 = arith.addf %29, %30 : vector<16x32xf32>
    %c0_10 = arith.constant 0 : index
    %c0_11 = arith.constant 0 : index
    %c0_12 = arith.constant 0 : index
    %32 = vector.load %arg8[%c0_10, %c0_11, %c0_12] : memref<2x4x96xf32, #tpu.memory_space<vmem>>, vector<1x4x96xf32>
    %33 = vector.shape_cast %32 : vector<1x4x96xf32> to vector<4x96xf32>
    %34 = vector.extract_strided_slice %33 {offsets = [0, 0], sizes = [1, 96], strides = [1, 1]} : vector<4x96xf32> to vector<1x96xf32>
    %35 = vector.extract_strided_slice %33 {offsets = [1, 0], sizes = [1, 32], strides = [1, 1]} : vector<4x96xf32> to vector<1x32xf32>
    %36 = vector.extract_strided_slice %33 {offsets = [1, 32], sizes = [1, 32], strides = [1, 1]} : vector<4x96xf32> to vector<1x32xf32>
    %37 = vector.extract_strided_slice %33 {offsets = [1, 64], sizes = [1, 32], strides = [1, 1]} : vector<4x96xf32> to vector<1x32xf32>
    %38 = vector.extract_strided_slice %33 {offsets = [2, 0], sizes = [1, 64], strides = [1, 1]} : vector<4x96xf32> to vector<1x64xf32>
    %39 = vector.extract_strided_slice %33 {offsets = [3, 0], sizes = [1, 32], strides = [1, 1]} : vector<4x96xf32> to vector<1x32xf32>
    %40 = vector.extract_strided_slice %33 {offsets = [3, 32], sizes = [1, 32], strides = [1, 1]} : vector<4x96xf32> to vector<1x32xf32>
    %41 = vector.extract_strided_slice %33 {offsets = [3, 64], sizes = [1, 32], strides = [1, 1]} : vector<4x96xf32> to vector<1x32xf32>
    %c0_13 = arith.constant 0 : index
    %c0_14 = arith.constant 0 : index
    %c0_15 = arith.constant 0 : index
    %42 = vector.load %arg4[%c0_13, %c0_14, %c0_15] : memref<2x32x96xbf16, #tpu.memory_space<vmem>>, vector<1x32x96xbf16>
    %43 = vector.shape_cast %42 : vector<1x32x96xbf16> to vector<32x96xbf16>
    %c0_16 = arith.constant 0 : index
    %c0_17 = arith.constant 0 : index
    %c0_18 = arith.constant 0 : index
    %44 = vector.load %arg5[%c0_16, %c0_17, %c0_18] : memref<2x32x32xbf16, #tpu.memory_space<vmem>>, vector<1x32x32xbf16>
    %45 = vector.shape_cast %44 : vector<1x32x32xbf16> to vector<32x32xbf16>
    %46 = arith.truncf %31 : vector<16x32xf32> to vector<16x32xbf16>
    %cst_19 = arith.constant dense<0.000000e+00> : vector<16x96xf32>
    %47 = tpu.matmul %46, %43, %cst_19 {dimension_numbers = #tpu.dot_dimension_numbers<[1], [0], [0], [1], [0, 0, 1, 1], [], []>} : vector<16x32xbf16>, vector<32x96xbf16>, vector<16x96xf32> -> vector<16x96xf32>
    %48 = vector.broadcast %34 : vector<1x96xf32> to vector<16x96xf32>
    %49 = arith.addf %47, %48 : vector<16x96xf32>
    %50 = vector.extract_strided_slice %49 {offsets = [0, 0], sizes = [8, 96], strides = [1, 1]} : vector<16x96xf32> to vector<8x96xf32>
    %51 = vector.extract_strided_slice %50 {offsets = [0, 0], sizes = [8, 8], strides = [1, 1]} : vector<8x96xf32> to vector<8x8xf32>
    %52 = vector.extract_strided_slice %50 {offsets = [0, 32], sizes = [8, 8], strides = [1, 1]} : vector<8x96xf32> to vector<8x8xf32>
    %53 = vector.extract_strided_slice %50 {offsets = [0, 64], sizes = [8, 8], strides = [1, 1]} : vector<8x96xf32> to vector<8x8xf32>
    %cst_20 = arith.constant dense<0.000000e+00> : vector<8x8xf32>
    %54 = tpu.matmul %51, %52, %cst_20 {dimension_numbers = #tpu.dot_dimension_numbers<[1], [1], [0], [0], [0, 0, 1, 0], [], []>} : vector<8x8xf32>, vector<8x8xf32>, vector<8x8xf32> -> vector<8x8xf32>
    %55 = arith.addf %54, %2 : vector<8x8xf32>
    %cst_21 = arith.constant dense<0xFF800000> : vector<8xf32>
    %56 = vector.multi_reduction <maximumf>, %55, %cst_21 [1] : vector<8x8xf32> to vector<8xf32>
    %57 = vector.shape_cast %56 : vector<8xf32> to vector<8x1xf32>
    %58 = vector.broadcast %57 : vector<8x1xf32> to vector<8x8xf32>
    %59 = arith.subf %55, %58 : vector<8x8xf32>
    %60 = math.exp %59 : vector<8x8xf32>
    %cst_22 = arith.constant dense<0.000000e+00> : vector<8xf32>
    %61 = vector.multi_reduction <add>, %60, %cst_22 [1] : vector<8x8xf32> to vector<8xf32>
    %62 = vector.shape_cast %61 : vector<8xf32> to vector<8x1xf32>
    %63 = tpu.reciprocal %62 {approx = true} : vector<8x1xf32> -> vector<8x1xf32>
    %64 = vector.broadcast %63 : vector<8x1xf32> to vector<8x8xf32>
    %65 = arith.mulf %60, %64 : vector<8x8xf32>
    %cst_23 = arith.constant dense<0.000000e+00> : vector<8x8xf32>
    %66 = tpu.matmul %65, %53, %cst_23 {dimension_numbers = #tpu.dot_dimension_numbers<[1], [0], [0], [1], [0, 0, 1, 1], [], []>} : vector<8x8xf32>, vector<8x8xf32>, vector<8x8xf32> -> vector<8x8xf32>
    %67 = arith.truncf %66 : vector<8x8xf32> to vector<8x8xbf16>
    %68 = vector.extract_strided_slice %45 {offsets = [0, 0], sizes = [8, 32], strides = [1, 1]} : vector<32x32xbf16> to vector<8x32xbf16>
    %cst_24 = arith.constant dense<0.000000e+00> : vector<8x32xf32>
    %69 = tpu.matmul %67, %68, %cst_24 {dimension_numbers = #tpu.dot_dimension_numbers<[1], [0], [0], [1], [0, 0, 1, 1], [], []>} : vector<8x8xbf16>, vector<8x32xbf16>, vector<8x32xf32> -> vector<8x32xf32>
    %70 = vector.extract_strided_slice %50 {offsets = [0, 8], sizes = [8, 8], strides = [1, 1]} : vector<8x96xf32> to vector<8x8xf32>
    %71 = vector.extract_strided_slice %50 {offsets = [0, 40], sizes = [8, 8], strides = [1, 1]} : vector<8x96xf32> to vector<8x8xf32>
    %72 = vector.extract_strided_slice %50 {offsets = [0, 72], sizes = [8, 8], strides = [1, 1]} : vector<8x96xf32> to vector<8x8xf32>
    %cst_25 = arith.constant dense<0.000000e+00> : vector<8x8xf32>
    %73 = tpu.matmul %70, %71, %cst_25 {dimension_numbers = #tpu.dot_dimension_numbers<[1], [1], [0], [0], [0, 0, 1, 0], [], []>} : vector<8x8xf32>, vector<8x8xf32>, vector<8x8xf32> -> vector<8x8xf32>
    %74 = arith.addf %73, %2 : vector<8x8xf32>
    %cst_26 = arith.constant dense<0xFF800000> : vector<8xf32>
    %75 = vector.multi_reduction <maximumf>, %74, %cst_26 [1] : vector<8x8xf32> to vector<8xf32>
    %76 = vector.shape_cast %75 : vector<8xf32> to vector<8x1xf32>
    %77 = vector.broadcast %76 : vector<8x1xf32> to vector<8x8xf32>
    %78 = arith.subf %74, %77 : vector<8x8xf32>
    %79 = math.exp %78 : vector<8x8xf32>
    %cst_27 = arith.constant dense<0.000000e+00> : vector<8xf32>
    %80 = vector.multi_reduction <add>, %79, %cst_27 [1] : vector<8x8xf32> to vector<8xf32>
    %81 = vector.shape_cast %80 : vector<8xf32> to vector<8x1xf32>
    %82 = tpu.reciprocal %81 {approx = true} : vector<8x1xf32> -> vector<8x1xf32>
    %83 = vector.broadcast %82 : vector<8x1xf32> to vector<8x8xf32>
    %84 = arith.mulf %79, %83 : vector<8x8xf32>
    %cst_28 = arith.constant dense<0.000000e+00> : vector<8x8xf32>
    %85 = tpu.matmul %84, %72, %cst_28 {dimension_numbers = #tpu.dot_dimension_numbers<[1], [0], [0], [1], [0, 0, 1, 1], [], []>} : vector<8x8xf32>, vector<8x8xf32>, vector<8x8xf32> -> vector<8x8xf32>
    %86 = arith.truncf %85 : vector<8x8xf32> to vector<8x8xbf16>
    %87 = vector.extract_strided_slice %45 {offsets = [8, 0], sizes = [8, 32], strides = [1, 1]} : vector<32x32xbf16> to vector<8x32xbf16>
    %cst_29 = arith.constant dense<0.000000e+00> : vector<8x32xf32>
    %88 = tpu.matmul %86, %87, %cst_29 {dimension_numbers = #tpu.dot_dimension_numbers<[1], [0], [0], [1], [0, 0, 1, 1], [], []>} : vector<8x8xbf16>, vector<8x32xbf16>, vector<8x32xf32> -> vector<8x32xf32>
    %89 = arith.addf %69, %88 : vector<8x32xf32>
    %90 = vector.extract_strided_slice %50 {offsets = [0, 16], sizes = [8, 8], strides = [1, 1]} : vector<8x96xf32> to vector<8x8xf32>
    %91 = vector.extract_strided_slice %50 {offsets = [0, 48], sizes = [8, 8], strides = [1, 1]} : vector<8x96xf32> to vector<8x8xf32>
    %92 = vector.extract_strided_slice %50 {offsets = [0, 80], sizes = [8, 8], strides = [1, 1]} : vector<8x96xf32> to vector<8x8xf32>
    %cst_30 = arith.constant dense<0.000000e+00> : vector<8x8xf32>
    %93 = tpu.matmul %90, %91, %cst_30 {dimension_numbers = #tpu.dot_dimension_numbers<[1], [1], [0], [0], [0, 0, 1, 0], [], []>} : vector<8x8xf32>, vector<8x8xf32>, vector<8x8xf32> -> vector<8x8xf32>
    %94 = arith.addf %93, %2 : vector<8x8xf32>
    %cst_31 = arith.constant dense<0xFF800000> : vector<8xf32>
    %95 = vector.multi_reduction <maximumf>, %94, %cst_31 [1] : vector<8x8xf32> to vector<8xf32>
    %96 = vector.shape_cast %95 : vector<8xf32> to vector<8x1xf32>
    %97 = vector.broadcast %96 : vector<8x1xf32> to vector<8x8xf32>
    %98 = arith.subf %94, %97 : vector<8x8xf32>
    %99 = math.exp %98 : vector<8x8xf32>
    %cst_32 = arith.constant dense<0.000000e+00> : vector<8xf32>
    %100 = vector.multi_reduction <add>, %99, %cst_32 [1] : vector<8x8xf32> to vector<8xf32>
    %101 = vector.shape_cast %100 : vector<8xf32> to vector<8x1xf32>
    %102 = tpu.reciprocal %101 {approx = true} : vector<8x1xf32> -> vector<8x1xf32>
    %103 = vector.broadcast %102 : vector<8x1xf32> to vector<8x8xf32>
    %104 = arith.mulf %99, %103 : vector<8x8xf32>
    %cst_33 = arith.constant dense<0.000000e+00> : vector<8x8xf32>
    %105 = tpu.matmul %104, %92, %cst_33 {dimension_numbers = #tpu.dot_dimension_numbers<[1], [0], [0], [1], [0, 0, 1, 1], [], []>} : vector<8x8xf32>, vector<8x8xf32>, vector<8x8xf32> -> vector<8x8xf32>
    %106 = arith.truncf %105 : vector<8x8xf32> to vector<8x8xbf16>
    %107 = vector.extract_strided_slice %45 {offsets = [16, 0], sizes = [8, 32], strides = [1, 1]} : vector<32x32xbf16> to vector<8x32xbf16>
    %cst_34 = arith.constant dense<0.000000e+00> : vector<8x32xf32>
    %108 = tpu.matmul %106, %107, %cst_34 {dimension_numbers = #tpu.dot_dimension_numbers<[1], [0], [0], [1], [0, 0, 1, 1], [], []>} : vector<8x8xbf16>, vector<8x32xbf16>, vector<8x32xf32> -> vector<8x32xf32>
    %109 = arith.addf %89, %108 : vector<8x32xf32>
    %110 = vector.extract_strided_slice %50 {offsets = [0, 24], sizes = [8, 8], strides = [1, 1]} : vector<8x96xf32> to vector<8x8xf32>
    %111 = vector.extract_strided_slice %50 {offsets = [0, 56], sizes = [8, 8], strides = [1, 1]} : vector<8x96xf32> to vector<8x8xf32>
    %112 = vector.extract_strided_slice %50 {offsets = [0, 88], sizes = [8, 8], strides = [1, 1]} : vector<8x96xf32> to vector<8x8xf32>
    %cst_35 = arith.constant dense<0.000000e+00> : vector<8x8xf32>
    %113 = tpu.matmul %110, %111, %cst_35 {dimension_numbers = #tpu.dot_dimension_numbers<[1], [1], [0], [0], [0, 0, 1, 0], [], []>} : vector<8x8xf32>, vector<8x8xf32>, vector<8x8xf32> -> vector<8x8xf32>
    %114 = arith.addf %113, %2 : vector<8x8xf32>
    %cst_36 = arith.constant dense<0xFF800000> : vector<8xf32>
    %115 = vector.multi_reduction <maximumf>, %114, %cst_36 [1] : vector<8x8xf32> to vector<8xf32>
    %116 = vector.shape_cast %115 : vector<8xf32> to vector<8x1xf32>
    %117 = vector.broadcast %116 : vector<8x1xf32> to vector<8x8xf32>
    %118 = arith.subf %114, %117 : vector<8x8xf32>
    %119 = math.exp %118 : vector<8x8xf32>
    %cst_37 = arith.constant dense<0.000000e+00> : vector<8xf32>
    %120 = vector.multi_reduction <add>, %119, %cst_37 [1] : vector<8x8xf32> to vector<8xf32>
    %121 = vector.shape_cast %120 : vector<8xf32> to vector<8x1xf32>
    %122 = tpu.reciprocal %121 {approx = true} : vector<8x1xf32> -> vector<8x1xf32>
    %123 = vector.broadcast %122 : vector<8x1xf32> to vector<8x8xf32>
    %124 = arith.mulf %119, %123 : vector<8x8xf32>
    %cst_38 = arith.constant dense<0.000000e+00> : vector<8x8xf32>
    %125 = tpu.matmul %124, %112, %cst_38 {dimension_numbers = #tpu.dot_dimension_numbers<[1], [0], [0], [1], [0, 0, 1, 1], [], []>} : vector<8x8xf32>, vector<8x8xf32>, vector<8x8xf32> -> vector<8x8xf32>
    %126 = arith.truncf %125 : vector<8x8xf32> to vector<8x8xbf16>
    %127 = vector.extract_strided_slice %45 {offsets = [24, 0], sizes = [8, 32], strides = [1, 1]} : vector<32x32xbf16> to vector<8x32xbf16>
    %cst_39 = arith.constant dense<0.000000e+00> : vector<8x32xf32>
    %128 = tpu.matmul %126, %127, %cst_39 {dimension_numbers = #tpu.dot_dimension_numbers<[1], [0], [0], [1], [0, 0, 1, 1], [], []>} : vector<8x8xbf16>, vector<8x32xbf16>, vector<8x32xf32> -> vector<8x32xf32>
    %129 = arith.addf %109, %128 : vector<8x32xf32>
    %130 = vector.extract_strided_slice %49 {offsets = [8, 0], sizes = [8, 96], strides = [1, 1]} : vector<16x96xf32> to vector<8x96xf32>
    %131 = vector.extract_strided_slice %130 {offsets = [0, 0], sizes = [8, 8], strides = [1, 1]} : vector<8x96xf32> to vector<8x8xf32>
    %132 = vector.extract_strided_slice %130 {offsets = [0, 32], sizes = [8, 8], strides = [1, 1]} : vector<8x96xf32> to vector<8x8xf32>
    %133 = vector.extract_strided_slice %130 {offsets = [0, 64], sizes = [8, 8], strides = [1, 1]} : vector<8x96xf32> to vector<8x8xf32>
    %cst_40 = arith.constant dense<0.000000e+00> : vector<8x8xf32>
    %134 = tpu.matmul %131, %132, %cst_40 {dimension_numbers = #tpu.dot_dimension_numbers<[1], [1], [0], [0], [0, 0, 1, 0], [], []>} : vector<8x8xf32>, vector<8x8xf32>, vector<8x8xf32> -> vector<8x8xf32>
    %135 = arith.addf %134, %5 : vector<8x8xf32>
    %cst_41 = arith.constant dense<0xFF800000> : vector<8xf32>
    %136 = vector.multi_reduction <maximumf>, %135, %cst_41 [1] : vector<8x8xf32> to vector<8xf32>
    %137 = vector.shape_cast %136 : vector<8xf32> to vector<8x1xf32>
    %138 = vector.broadcast %137 : vector<8x1xf32> to vector<8x8xf32>
    %139 = arith.subf %135, %138 : vector<8x8xf32>
    %140 = math.exp %139 : vector<8x8xf32>
    %cst_42 = arith.constant dense<0.000000e+00> : vector<8xf32>
    %141 = vector.multi_reduction <add>, %140, %cst_42 [1] : vector<8x8xf32> to vector<8xf32>
    %142 = vector.shape_cast %141 : vector<8xf32> to vector<8x1xf32>
    %143 = tpu.reciprocal %142 {approx = true} : vector<8x1xf32> -> vector<8x1xf32>
    %144 = vector.broadcast %143 : vector<8x1xf32> to vector<8x8xf32>
    %145 = arith.mulf %140, %144 : vector<8x8xf32>
    %cst_43 = arith.constant dense<0.000000e+00> : vector<8x8xf32>
    %146 = tpu.matmul %145, %133, %cst_43 {dimension_numbers = #tpu.dot_dimension_numbers<[1], [0], [0], [1], [0, 0, 1, 1], [], []>} : vector<8x8xf32>, vector<8x8xf32>, vector<8x8xf32> -> vector<8x8xf32>
    %147 = arith.truncf %146 : vector<8x8xf32> to vector<8x8xbf16>
    %148 = vector.extract_strided_slice %45 {offsets = [0, 0], sizes = [8, 32], strides = [1, 1]} : vector<32x32xbf16> to vector<8x32xbf16>
    %cst_44 = arith.constant dense<0.000000e+00> : vector<8x32xf32>
    %149 = tpu.matmul %147, %148, %cst_44 {dimension_numbers = #tpu.dot_dimension_numbers<[1], [0], [0], [1], [0, 0, 1, 1], [], []>} : vector<8x8xbf16>, vector<8x32xbf16>, vector<8x32xf32> -> vector<8x32xf32>
    %150 = vector.extract_strided_slice %130 {offsets = [0, 8], sizes = [8, 8], strides = [1, 1]} : vector<8x96xf32> to vector<8x8xf32>
    %151 = vector.extract_strided_slice %130 {offsets = [0, 40], sizes = [8, 8], strides = [1, 1]} : vector<8x96xf32> to vector<8x8xf32>
    %152 = vector.extract_strided_slice %130 {offsets = [0, 72], sizes = [8, 8], strides = [1, 1]} : vector<8x96xf32> to vector<8x8xf32>
    %cst_45 = arith.constant dense<0.000000e+00> : vector<8x8xf32>
    %153 = tpu.matmul %150, %151, %cst_45 {dimension_numbers = #tpu.dot_dimension_numbers<[1], [1], [0], [0], [0, 0, 1, 0], [], []>} : vector<8x8xf32>, vector<8x8xf32>, vector<8x8xf32> -> vector<8x8xf32>
    %154 = arith.addf %153, %5 : vector<8x8xf32>
    %cst_46 = arith.constant dense<0xFF800000> : vector<8xf32>
    %155 = vector.multi_reduction <maximumf>, %154, %cst_46 [1] : vector<8x8xf32> to vector<8xf32>
    %156 = vector.shape_cast %155 : vector<8xf32> to vector<8x1xf32>
    %157 = vector.broadcast %156 : vector<8x1xf32> to vector<8x8xf32>
    %158 = arith.subf %154, %157 : vector<8x8xf32>
    %159 = math.exp %158 : vector<8x8xf32>
    %cst_47 = arith.constant dense<0.000000e+00> : vector<8xf32>
    %160 = vector.multi_reduction <add>, %159, %cst_47 [1] : vector<8x8xf32> to vector<8xf32>
    %161 = vector.shape_cast %160 : vector<8xf32> to vector<8x1xf32>
    %162 = tpu.reciprocal %161 {approx = true} : vector<8x1xf32> -> vector<8x1xf32>
    %163 = vector.broadcast %162 : vector<8x1xf32> to vector<8x8xf32>
    %164 = arith.mulf %159, %163 : vector<8x8xf32>
    %cst_48 = arith.constant dense<0.000000e+00> : vector<8x8xf32>
    %165 = tpu.matmul %164, %152, %cst_48 {dimension_numbers = #tpu.dot_dimension_numbers<[1], [0], [0], [1], [0, 0, 1, 1], [], []>} : vector<8x8xf32>, vector<8x8xf32>, vector<8x8xf32> -> vector<8x8xf32>
    %166 = arith.truncf %165 : vector<8x8xf32> to vector<8x8xbf16>
    %167 = vector.extract_strided_slice %45 {offsets = [8, 0], sizes = [8, 32], strides = [1, 1]} : vector<32x32xbf16> to vector<8x32xbf16>
    %cst_49 = arith.constant dense<0.000000e+00> : vector<8x32xf32>
    %168 = tpu.matmul %166, %167, %cst_49 {dimension_numbers = #tpu.dot_dimension_numbers<[1], [0], [0], [1], [0, 0, 1, 1], [], []>} : vector<8x8xbf16>, vector<8x32xbf16>, vector<8x32xf32> -> vector<8x32xf32>
    %169 = arith.addf %149, %168 : vector<8x32xf32>
    %170 = vector.extract_strided_slice %130 {offsets = [0, 16], sizes = [8, 8], strides = [1, 1]} : vector<8x96xf32> to vector<8x8xf32>
    %171 = vector.extract_strided_slice %130 {offsets = [0, 48], sizes = [8, 8], strides = [1, 1]} : vector<8x96xf32> to vector<8x8xf32>
    %172 = vector.extract_strided_slice %130 {offsets = [0, 80], sizes = [8, 8], strides = [1, 1]} : vector<8x96xf32> to vector<8x8xf32>
    %cst_50 = arith.constant dense<0.000000e+00> : vector<8x8xf32>
    %173 = tpu.matmul %170, %171, %cst_50 {dimension_numbers = #tpu.dot_dimension_numbers<[1], [1], [0], [0], [0, 0, 1, 0], [], []>} : vector<8x8xf32>, vector<8x8xf32>, vector<8x8xf32> -> vector<8x8xf32>
    %174 = arith.addf %173, %5 : vector<8x8xf32>
    %cst_51 = arith.constant dense<0xFF800000> : vector<8xf32>
    %175 = vector.multi_reduction <maximumf>, %174, %cst_51 [1] : vector<8x8xf32> to vector<8xf32>
    %176 = vector.shape_cast %175 : vector<8xf32> to vector<8x1xf32>
    %177 = vector.broadcast %176 : vector<8x1xf32> to vector<8x8xf32>
    %178 = arith.subf %174, %177 : vector<8x8xf32>
    %179 = math.exp %178 : vector<8x8xf32>
    %cst_52 = arith.constant dense<0.000000e+00> : vector<8xf32>
    %180 = vector.multi_reduction <add>, %179, %cst_52 [1] : vector<8x8xf32> to vector<8xf32>
    %181 = vector.shape_cast %180 : vector<8xf32> to vector<8x1xf32>
    %182 = tpu.reciprocal %181 {approx = true} : vector<8x1xf32> -> vector<8x1xf32>
    %183 = vector.broadcast %182 : vector<8x1xf32> to vector<8x8xf32>
    %184 = arith.mulf %179, %183 : vector<8x8xf32>
    %cst_53 = arith.constant dense<0.000000e+00> : vector<8x8xf32>
    %185 = tpu.matmul %184, %172, %cst_53 {dimension_numbers = #tpu.dot_dimension_numbers<[1], [0], [0], [1], [0, 0, 1, 1], [], []>} : vector<8x8xf32>, vector<8x8xf32>, vector<8x8xf32> -> vector<8x8xf32>
    %186 = arith.truncf %185 : vector<8x8xf32> to vector<8x8xbf16>
    %187 = vector.extract_strided_slice %45 {offsets = [16, 0], sizes = [8, 32], strides = [1, 1]} : vector<32x32xbf16> to vector<8x32xbf16>
    %cst_54 = arith.constant dense<0.000000e+00> : vector<8x32xf32>
    %188 = tpu.matmul %186, %187, %cst_54 {dimension_numbers = #tpu.dot_dimension_numbers<[1], [0], [0], [1], [0, 0, 1, 1], [], []>} : vector<8x8xbf16>, vector<8x32xbf16>, vector<8x32xf32> -> vector<8x32xf32>
    %189 = arith.addf %169, %188 : vector<8x32xf32>
    %190 = vector.extract_strided_slice %130 {offsets = [0, 24], sizes = [8, 8], strides = [1, 1]} : vector<8x96xf32> to vector<8x8xf32>
    %191 = vector.extract_strided_slice %130 {offsets = [0, 56], sizes = [8, 8], strides = [1, 1]} : vector<8x96xf32> to vector<8x8xf32>
    %192 = vector.extract_strided_slice %130 {offsets = [0, 88], sizes = [8, 8], strides = [1, 1]} : vector<8x96xf32> to vector<8x8xf32>
    %cst_55 = arith.constant dense<0.000000e+00> : vector<8x8xf32>
    %193 = tpu.matmul %190, %191, %cst_55 {dimension_numbers = #tpu.dot_dimension_numbers<[1], [1], [0], [0], [0, 0, 1, 0], [], []>} : vector<8x8xf32>, vector<8x8xf32>, vector<8x8xf32> -> vector<8x8xf32>
    %194 = arith.addf %193, %5 : vector<8x8xf32>
    %cst_56 = arith.constant dense<0xFF800000> : vector<8xf32>
    %195 = vector.multi_reduction <maximumf>, %194, %cst_56 [1] : vector<8x8xf32> to vector<8xf32>
    %196 = vector.shape_cast %195 : vector<8xf32> to vector<8x1xf32>
    %197 = vector.broadcast %196 : vector<8x1xf32> to vector<8x8xf32>
    %198 = arith.subf %194, %197 : vector<8x8xf32>
    %199 = math.exp %198 : vector<8x8xf32>
    %cst_57 = arith.constant dense<0.000000e+00> : vector<8xf32>
    %200 = vector.multi_reduction <add>, %199, %cst_57 [1] : vector<8x8xf32> to vector<8xf32>
    %201 = vector.shape_cast %200 : vector<8xf32> to vector<8x1xf32>
    %202 = tpu.reciprocal %201 {approx = true} : vector<8x1xf32> -> vector<8x1xf32>
    %203 = vector.broadcast %202 : vector<8x1xf32> to vector<8x8xf32>
    %204 = arith.mulf %199, %203 : vector<8x8xf32>
    %cst_58 = arith.constant dense<0.000000e+00> : vector<8x8xf32>
    %205 = tpu.matmul %204, %192, %cst_58 {dimension_numbers = #tpu.dot_dimension_numbers<[1], [0], [0], [1], [0, 0, 1, 1], [], []>} : vector<8x8xf32>, vector<8x8xf32>, vector<8x8xf32> -> vector<8x8xf32>
    %206 = arith.truncf %205 : vector<8x8xf32> to vector<8x8xbf16>
    %207 = vector.extract_strided_slice %45 {offsets = [24, 0], sizes = [8, 32], strides = [1, 1]} : vector<32x32xbf16> to vector<8x32xbf16>
    %cst_59 = arith.constant dense<0.000000e+00> : vector<8x32xf32>
    %208 = tpu.matmul %206, %207, %cst_59 {dimension_numbers = #tpu.dot_dimension_numbers<[1], [0], [0], [1], [0, 0, 1, 1], [], []>} : vector<8x8xbf16>, vector<8x32xbf16>, vector<8x32xf32> -> vector<8x32xf32>
    %209 = arith.addf %189, %208 : vector<8x32xf32>
    %210 = tpu.concatenate %129, %209 in 0 : vector<8x32xf32>, vector<8x32xf32> -> vector<16x32xf32>
    %211 = vector.broadcast %35 : vector<1x32xf32> to vector<16x32xf32>
    %212 = arith.addf %210, %211 : vector<16x32xf32>
    %213 = arith.addf %212, %31 : vector<16x32xf32>
    %cst_60 = arith.constant dense<0.000000e+00> : vector<16xf32>
    %214 = vector.multi_reduction <add>, %213, %cst_60 [1] : vector<16x32xf32> to vector<16xf32>
    %215 = vector.shape_cast %214 : vector<16xf32> to vector<16x1xf32>
    %cst_61 = arith.constant 3.200000e+01 : f32
    %216 = vector.broadcast %cst_61 : f32 to vector<16x1xf32>
    %217 = arith.divf %215, %216 : vector<16x1xf32>
    %218 = vector.broadcast %217 : vector<16x1xf32> to vector<16x32xf32>
    %219 = arith.subf %213, %218 : vector<16x32xf32>
    %220 = arith.mulf %219, %219 : vector<16x32xf32>
    %cst_62 = arith.constant dense<0.000000e+00> : vector<16xf32>
    %221 = vector.multi_reduction <add>, %220, %cst_62 [1] : vector<16x32xf32> to vector<16xf32>
    %222 = vector.shape_cast %221 : vector<16xf32> to vector<16x1xf32>
    %cst_63 = arith.constant 3.200000e+01 : f32
    %223 = vector.broadcast %cst_63 : f32 to vector<16x1xf32>
    %224 = arith.divf %222, %223 : vector<16x1xf32>
    %225 = vector.broadcast %217 : vector<16x1xf32> to vector<16x32xf32>
    %226 = arith.subf %213, %225 : vector<16x32xf32>
    %cst_64 = arith.constant 9.99999996E-13 : f32
    %227 = vector.broadcast %cst_64 : f32 to vector<16x1xf32>
    %228 = arith.addf %224, %227 : vector<16x1xf32>
    %229 = math.rsqrt %228 : vector<16x1xf32>
    %230 = vector.broadcast %229 : vector<16x1xf32> to vector<16x32xf32>
    %231 = arith.mulf %226, %230 : vector<16x32xf32>
    %232 = vector.broadcast %36 : vector<1x32xf32> to vector<16x32xf32>
    %233 = arith.mulf %231, %232 : vector<16x32xf32>
    %234 = vector.broadcast %37 : vector<1x32xf32> to vector<16x32xf32>
    %235 = arith.addf %233, %234 : vector<16x32xf32>
    %236 = arith.truncf %235 : vector<16x32xf32> to vector<16x32xbf16>
    %c0_65 = arith.constant 0 : index
    %c0_66 = arith.constant 0 : index
    %c0_67 = arith.constant 0 : index
    %237 = vector.load %arg6[%c0_65, %c0_66, %c0_67] : memref<2x32x64xbf16, #tpu.memory_space<vmem>>, vector<1x32x64xbf16>
    %238 = vector.shape_cast %237 : vector<1x32x64xbf16> to vector<32x64xbf16>
    %cst_68 = arith.constant dense<0.000000e+00> : vector<16x64xf32>
    %239 = tpu.matmul %236, %238, %cst_68 {dimension_numbers = #tpu.dot_dimension_numbers<[1], [0], [0], [1], [0, 0, 1, 1], [], []>} : vector<16x32xbf16>, vector<32x64xbf16>, vector<16x64xf32> -> vector<16x64xf32>
    %240 = vector.broadcast %38 : vector<1x64xf32> to vector<16x64xf32>
    %241 = arith.addf %239, %240 : vector<16x64xf32>
    %242 = arith.mulf %241, %241 : vector<16x64xf32>
    %243 = arith.mulf %241, %242 : vector<16x64xf32>
    %cst_69 = arith.constant 4.471500e-02 : f32
    %244 = vector.broadcast %cst_69 : f32 to vector<16x64xf32>
    %245 = arith.mulf %244, %243 : vector<16x64xf32>
    %246 = arith.addf %241, %245 : vector<16x64xf32>
    %cst_70 = arith.constant 0.797884583 : f32
    %247 = vector.broadcast %cst_70 : f32 to vector<16x64xf32>
    %248 = arith.mulf %247, %246 : vector<16x64xf32>
    %249 = math.tanh %248 : vector<16x64xf32>
    %cst_71 = arith.constant 1.000000e+00 : f32
    %250 = vector.broadcast %cst_71 : f32 to vector<16x64xf32>
    %251 = arith.addf %250, %249 : vector<16x64xf32>
    %cst_72 = arith.constant 5.000000e-01 : f32
    %252 = vector.broadcast %cst_72 : f32 to vector<16x64xf32>
    %253 = arith.mulf %252, %251 : vector<16x64xf32>
    %254 = arith.mulf %241, %253 : vector<16x64xf32>
    %255 = arith.truncf %254 : vector<16x64xf32> to vector<16x64xbf16>
    %c0_73 = arith.constant 0 : index
    %c0_74 = arith.constant 0 : index
    %c0_75 = arith.constant 0 : index
    %256 = vector.load %arg7[%c0_73, %c0_74, %c0_75] : memref<2x64x32xbf16, #tpu.memory_space<vmem>>, vector<1x64x32xbf16>
    %257 = vector.shape_cast %256 : vector<1x64x32xbf16> to vector<64x32xbf16>
    %cst_76 = arith.constant dense<0.000000e+00> : vector<16x32xf32>
    %258 = tpu.matmul %255, %257, %cst_76 {dimension_numbers = #tpu.dot_dimension_numbers<[1], [0], [0], [1], [0, 0, 1, 1], [], []>} : vector<16x64xbf16>, vector<64x32xbf16>, vector<16x32xf32> -> vector<16x32xf32>
    %259 = vector.broadcast %39 : vector<1x32xf32> to vector<16x32xf32>
    %260 = arith.addf %258, %259 : vector<16x32xf32>
    %261 = arith.addf %260, %235 : vector<16x32xf32>
    %cst_77 = arith.constant dense<0.000000e+00> : vector<16xf32>
    %262 = vector.multi_reduction <add>, %261, %cst_77 [1] : vector<16x32xf32> to vector<16xf32>
    %263 = vector.shape_cast %262 : vector<16xf32> to vector<16x1xf32>
    %cst_78 = arith.constant 3.200000e+01 : f32
    %264 = vector.broadcast %cst_78 : f32 to vector<16x1xf32>
    %265 = arith.divf %263, %264 : vector<16x1xf32>
    %266 = vector.broadcast %265 : vector<16x1xf32> to vector<16x32xf32>
    %267 = arith.subf %261, %266 : vector<16x32xf32>
    %268 = arith.mulf %267, %267 : vector<16x32xf32>
    %cst_79 = arith.constant dense<0.000000e+00> : vector<16xf32>
    %269 = vector.multi_reduction <add>, %268, %cst_79 [1] : vector<16x32xf32> to vector<16xf32>
    %270 = vector.shape_cast %269 : vector<16xf32> to vector<16x1xf32>
    %cst_80 = arith.constant 3.200000e+01 : f32
    %271 = vector.broadcast %cst_80 : f32 to vector<16x1xf32>
    %272 = arith.divf %270, %271 : vector<16x1xf32>
    %273 = vector.broadcast %265 : vector<16x1xf32> to vector<16x32xf32>
    %274 = arith.subf %261, %273 : vector<16x32xf32>
    %cst_81 = arith.constant 9.99999996E-13 : f32
    %275 = vector.broadcast %cst_81 : f32 to vector<16x1xf32>
    %276 = arith.addf %272, %275 : vector<16x1xf32>
    %277 = math.rsqrt %276 : vector<16x1xf32>
    %278 = vector.broadcast %277 : vector<16x1xf32> to vector<16x32xf32>
    %279 = arith.mulf %274, %278 : vector<16x32xf32>
    %280 = vector.broadcast %40 : vector<1x32xf32> to vector<16x32xf32>
    %281 = arith.mulf %279, %280 : vector<16x32xf32>
    %282 = vector.broadcast %41 : vector<1x32xf32> to vector<16x32xf32>
    %283 = arith.addf %281, %282 : vector<16x32xf32>
    %c1_82 = arith.constant 1 : index
    %c0_83 = arith.constant 0 : index
    %c0_84 = arith.constant 0 : index
    %284 = vector.load %arg8[%c1_82, %c0_83, %c0_84] : memref<2x4x96xf32, #tpu.memory_space<vmem>>, vector<1x4x96xf32>
    %285 = vector.shape_cast %284 : vector<1x4x96xf32> to vector<4x96xf32>
    %286 = vector.extract_strided_slice %285 {offsets = [0, 0], sizes = [1, 96], strides = [1, 1]} : vector<4x96xf32> to vector<1x96xf32>
    %287 = vector.extract_strided_slice %285 {offsets = [1, 0], sizes = [1, 32], strides = [1, 1]} : vector<4x96xf32> to vector<1x32xf32>
    %288 = vector.extract_strided_slice %285 {offsets = [1, 32], sizes = [1, 32], strides = [1, 1]} : vector<4x96xf32> to vector<1x32xf32>
    %289 = vector.extract_strided_slice %285 {offsets = [1, 64], sizes = [1, 32], strides = [1, 1]} : vector<4x96xf32> to vector<1x32xf32>
    %290 = vector.extract_strided_slice %285 {offsets = [2, 0], sizes = [1, 64], strides = [1, 1]} : vector<4x96xf32> to vector<1x64xf32>
    %291 = vector.extract_strided_slice %285 {offsets = [3, 0], sizes = [1, 32], strides = [1, 1]} : vector<4x96xf32> to vector<1x32xf32>
    %292 = vector.extract_strided_slice %285 {offsets = [3, 32], sizes = [1, 32], strides = [1, 1]} : vector<4x96xf32> to vector<1x32xf32>
    %293 = vector.extract_strided_slice %285 {offsets = [3, 64], sizes = [1, 32], strides = [1, 1]} : vector<4x96xf32> to vector<1x32xf32>
    %c1_85 = arith.constant 1 : index
    %c0_86 = arith.constant 0 : index
    %c0_87 = arith.constant 0 : index
    %294 = vector.load %arg4[%c1_85, %c0_86, %c0_87] : memref<2x32x96xbf16, #tpu.memory_space<vmem>>, vector<1x32x96xbf16>
    %295 = vector.shape_cast %294 : vector<1x32x96xbf16> to vector<32x96xbf16>
    %c1_88 = arith.constant 1 : index
    %c0_89 = arith.constant 0 : index
    %c0_90 = arith.constant 0 : index
    %296 = vector.load %arg5[%c1_88, %c0_89, %c0_90] : memref<2x32x32xbf16, #tpu.memory_space<vmem>>, vector<1x32x32xbf16>
    %297 = vector.shape_cast %296 : vector<1x32x32xbf16> to vector<32x32xbf16>
    %298 = arith.truncf %283 : vector<16x32xf32> to vector<16x32xbf16>
    %cst_91 = arith.constant dense<0.000000e+00> : vector<16x96xf32>
    %299 = tpu.matmul %298, %295, %cst_91 {dimension_numbers = #tpu.dot_dimension_numbers<[1], [0], [0], [1], [0, 0, 1, 1], [], []>} : vector<16x32xbf16>, vector<32x96xbf16>, vector<16x96xf32> -> vector<16x96xf32>
    %300 = vector.broadcast %286 : vector<1x96xf32> to vector<16x96xf32>
    %301 = arith.addf %299, %300 : vector<16x96xf32>
    %302 = vector.extract_strided_slice %301 {offsets = [0, 0], sizes = [8, 96], strides = [1, 1]} : vector<16x96xf32> to vector<8x96xf32>
    %303 = vector.extract_strided_slice %302 {offsets = [0, 0], sizes = [8, 8], strides = [1, 1]} : vector<8x96xf32> to vector<8x8xf32>
    %304 = vector.extract_strided_slice %302 {offsets = [0, 32], sizes = [8, 8], strides = [1, 1]} : vector<8x96xf32> to vector<8x8xf32>
    %305 = vector.extract_strided_slice %302 {offsets = [0, 64], sizes = [8, 8], strides = [1, 1]} : vector<8x96xf32> to vector<8x8xf32>
    %cst_92 = arith.constant dense<0.000000e+00> : vector<8x8xf32>
    %306 = tpu.matmul %303, %304, %cst_92 {dimension_numbers = #tpu.dot_dimension_numbers<[1], [1], [0], [0], [0, 0, 1, 0], [], []>} : vector<8x8xf32>, vector<8x8xf32>, vector<8x8xf32> -> vector<8x8xf32>
    %307 = arith.addf %306, %2 : vector<8x8xf32>
    %cst_93 = arith.constant dense<0xFF800000> : vector<8xf32>
    %308 = vector.multi_reduction <maximumf>, %307, %cst_93 [1] : vector<8x8xf32> to vector<8xf32>
    %309 = vector.shape_cast %308 : vector<8xf32> to vector<8x1xf32>
    %310 = vector.broadcast %309 : vector<8x1xf32> to vector<8x8xf32>
    %311 = arith.subf %307, %310 : vector<8x8xf32>
    %312 = math.exp %311 : vector<8x8xf32>
    %cst_94 = arith.constant dense<0.000000e+00> : vector<8xf32>
    %313 = vector.multi_reduction <add>, %312, %cst_94 [1] : vector<8x8xf32> to vector<8xf32>
    %314 = vector.shape_cast %313 : vector<8xf32> to vector<8x1xf32>
    %315 = tpu.reciprocal %314 {approx = true} : vector<8x1xf32> -> vector<8x1xf32>
    %316 = vector.broadcast %315 : vector<8x1xf32> to vector<8x8xf32>
    %317 = arith.mulf %312, %316 : vector<8x8xf32>
    %cst_95 = arith.constant dense<0.000000e+00> : vector<8x8xf32>
    %318 = tpu.matmul %317, %305, %cst_95 {dimension_numbers = #tpu.dot_dimension_numbers<[1], [0], [0], [1], [0, 0, 1, 1], [], []>} : vector<8x8xf32>, vector<8x8xf32>, vector<8x8xf32> -> vector<8x8xf32>
    %319 = arith.truncf %318 : vector<8x8xf32> to vector<8x8xbf16>
    %320 = vector.extract_strided_slice %297 {offsets = [0, 0], sizes = [8, 32], strides = [1, 1]} : vector<32x32xbf16> to vector<8x32xbf16>
    %cst_96 = arith.constant dense<0.000000e+00> : vector<8x32xf32>
    %321 = tpu.matmul %319, %320, %cst_96 {dimension_numbers = #tpu.dot_dimension_numbers<[1], [0], [0], [1], [0, 0, 1, 1], [], []>} : vector<8x8xbf16>, vector<8x32xbf16>, vector<8x32xf32> -> vector<8x32xf32>
    %322 = vector.extract_strided_slice %302 {offsets = [0, 8], sizes = [8, 8], strides = [1, 1]} : vector<8x96xf32> to vector<8x8xf32>
    %323 = vector.extract_strided_slice %302 {offsets = [0, 40], sizes = [8, 8], strides = [1, 1]} : vector<8x96xf32> to vector<8x8xf32>
    %324 = vector.extract_strided_slice %302 {offsets = [0, 72], sizes = [8, 8], strides = [1, 1]} : vector<8x96xf32> to vector<8x8xf32>
    %cst_97 = arith.constant dense<0.000000e+00> : vector<8x8xf32>
    %325 = tpu.matmul %322, %323, %cst_97 {dimension_numbers = #tpu.dot_dimension_numbers<[1], [1], [0], [0], [0, 0, 1, 0], [], []>} : vector<8x8xf32>, vector<8x8xf32>, vector<8x8xf32> -> vector<8x8xf32>
    %326 = arith.addf %325, %2 : vector<8x8xf32>
    %cst_98 = arith.constant dense<0xFF800000> : vector<8xf32>
    %327 = vector.multi_reduction <maximumf>, %326, %cst_98 [1] : vector<8x8xf32> to vector<8xf32>
    %328 = vector.shape_cast %327 : vector<8xf32> to vector<8x1xf32>
    %329 = vector.broadcast %328 : vector<8x1xf32> to vector<8x8xf32>
    %330 = arith.subf %326, %329 : vector<8x8xf32>
    %331 = math.exp %330 : vector<8x8xf32>
    %cst_99 = arith.constant dense<0.000000e+00> : vector<8xf32>
    %332 = vector.multi_reduction <add>, %331, %cst_99 [1] : vector<8x8xf32> to vector<8xf32>
    %333 = vector.shape_cast %332 : vector<8xf32> to vector<8x1xf32>
    %334 = tpu.reciprocal %333 {approx = true} : vector<8x1xf32> -> vector<8x1xf32>
    %335 = vector.broadcast %334 : vector<8x1xf32> to vector<8x8xf32>
    %336 = arith.mulf %331, %335 : vector<8x8xf32>
    %cst_100 = arith.constant dense<0.000000e+00> : vector<8x8xf32>
    %337 = tpu.matmul %336, %324, %cst_100 {dimension_numbers = #tpu.dot_dimension_numbers<[1], [0], [0], [1], [0, 0, 1, 1], [], []>} : vector<8x8xf32>, vector<8x8xf32>, vector<8x8xf32> -> vector<8x8xf32>
    %338 = arith.truncf %337 : vector<8x8xf32> to vector<8x8xbf16>
    %339 = vector.extract_strided_slice %297 {offsets = [8, 0], sizes = [8, 32], strides = [1, 1]} : vector<32x32xbf16> to vector<8x32xbf16>
    %cst_101 = arith.constant dense<0.000000e+00> : vector<8x32xf32>
    %340 = tpu.matmul %338, %339, %cst_101 {dimension_numbers = #tpu.dot_dimension_numbers<[1], [0], [0], [1], [0, 0, 1, 1], [], []>} : vector<8x8xbf16>, vector<8x32xbf16>, vector<8x32xf32> -> vector<8x32xf32>
    %341 = arith.addf %321, %340 : vector<8x32xf32>
    %342 = vector.extract_strided_slice %302 {offsets = [0, 16], sizes = [8, 8], strides = [1, 1]} : vector<8x96xf32> to vector<8x8xf32>
    %343 = vector.extract_strided_slice %302 {offsets = [0, 48], sizes = [8, 8], strides = [1, 1]} : vector<8x96xf32> to vector<8x8xf32>
    %344 = vector.extract_strided_slice %302 {offsets = [0, 80], sizes = [8, 8], strides = [1, 1]} : vector<8x96xf32> to vector<8x8xf32>
    %cst_102 = arith.constant dense<0.000000e+00> : vector<8x8xf32>
    %345 = tpu.matmul %342, %343, %cst_102 {dimension_numbers = #tpu.dot_dimension_numbers<[1], [1], [0], [0], [0, 0, 1, 0], [], []>} : vector<8x8xf32>, vector<8x8xf32>, vector<8x8xf32> -> vector<8x8xf32>
    %346 = arith.addf %345, %2 : vector<8x8xf32>
    %cst_103 = arith.constant dense<0xFF800000> : vector<8xf32>
    %347 = vector.multi_reduction <maximumf>, %346, %cst_103 [1] : vector<8x8xf32> to vector<8xf32>
    %348 = vector.shape_cast %347 : vector<8xf32> to vector<8x1xf32>
    %349 = vector.broadcast %348 : vector<8x1xf32> to vector<8x8xf32>
    %350 = arith.subf %346, %349 : vector<8x8xf32>
    %351 = math.exp %350 : vector<8x8xf32>
    %cst_104 = arith.constant dense<0.000000e+00> : vector<8xf32>
    %352 = vector.multi_reduction <add>, %351, %cst_104 [1] : vector<8x8xf32> to vector<8xf32>
    %353 = vector.shape_cast %352 : vector<8xf32> to vector<8x1xf32>
    %354 = tpu.reciprocal %353 {approx = true} : vector<8x1xf32> -> vector<8x1xf32>
    %355 = vector.broadcast %354 : vector<8x1xf32> to vector<8x8xf32>
    %356 = arith.mulf %351, %355 : vector<8x8xf32>
    %cst_105 = arith.constant dense<0.000000e+00> : vector<8x8xf32>
    %357 = tpu.matmul %356, %344, %cst_105 {dimension_numbers = #tpu.dot_dimension_numbers<[1], [0], [0], [1], [0, 0, 1, 1], [], []>} : vector<8x8xf32>, vector<8x8xf32>, vector<8x8xf32> -> vector<8x8xf32>
    %358 = arith.truncf %357 : vector<8x8xf32> to vector<8x8xbf16>
    %359 = vector.extract_strided_slice %297 {offsets = [16, 0], sizes = [8, 32], strides = [1, 1]} : vector<32x32xbf16> to vector<8x32xbf16>
    %cst_106 = arith.constant dense<0.000000e+00> : vector<8x32xf32>
    %360 = tpu.matmul %358, %359, %cst_106 {dimension_numbers = #tpu.dot_dimension_numbers<[1], [0], [0], [1], [0, 0, 1, 1], [], []>} : vector<8x8xbf16>, vector<8x32xbf16>, vector<8x32xf32> -> vector<8x32xf32>
    %361 = arith.addf %341, %360 : vector<8x32xf32>
    %362 = vector.extract_strided_slice %302 {offsets = [0, 24], sizes = [8, 8], strides = [1, 1]} : vector<8x96xf32> to vector<8x8xf32>
    %363 = vector.extract_strided_slice %302 {offsets = [0, 56], sizes = [8, 8], strides = [1, 1]} : vector<8x96xf32> to vector<8x8xf32>
    %364 = vector.extract_strided_slice %302 {offsets = [0, 88], sizes = [8, 8], strides = [1, 1]} : vector<8x96xf32> to vector<8x8xf32>
    %cst_107 = arith.constant dense<0.000000e+00> : vector<8x8xf32>
    %365 = tpu.matmul %362, %363, %cst_107 {dimension_numbers = #tpu.dot_dimension_numbers<[1], [1], [0], [0], [0, 0, 1, 0], [], []>} : vector<8x8xf32>, vector<8x8xf32>, vector<8x8xf32> -> vector<8x8xf32>
    %366 = arith.addf %365, %2 : vector<8x8xf32>
    %cst_108 = arith.constant dense<0xFF800000> : vector<8xf32>
    %367 = vector.multi_reduction <maximumf>, %366, %cst_108 [1] : vector<8x8xf32> to vector<8xf32>
    %368 = vector.shape_cast %367 : vector<8xf32> to vector<8x1xf32>
    %369 = vector.broadcast %368 : vector<8x1xf32> to vector<8x8xf32>
    %370 = arith.subf %366, %369 : vector<8x8xf32>
    %371 = math.exp %370 : vector<8x8xf32>
    %cst_109 = arith.constant dense<0.000000e+00> : vector<8xf32>
    %372 = vector.multi_reduction <add>, %371, %cst_109 [1] : vector<8x8xf32> to vector<8xf32>
    %373 = vector.shape_cast %372 : vector<8xf32> to vector<8x1xf32>
    %374 = tpu.reciprocal %373 {approx = true} : vector<8x1xf32> -> vector<8x1xf32>
    %375 = vector.broadcast %374 : vector<8x1xf32> to vector<8x8xf32>
    %376 = arith.mulf %371, %375 : vector<8x8xf32>
    %cst_110 = arith.constant dense<0.000000e+00> : vector<8x8xf32>
    %377 = tpu.matmul %376, %364, %cst_110 {dimension_numbers = #tpu.dot_dimension_numbers<[1], [0], [0], [1], [0, 0, 1, 1], [], []>} : vector<8x8xf32>, vector<8x8xf32>, vector<8x8xf32> -> vector<8x8xf32>
    %378 = arith.truncf %377 : vector<8x8xf32> to vector<8x8xbf16>
    %379 = vector.extract_strided_slice %297 {offsets = [24, 0], sizes = [8, 32], strides = [1, 1]} : vector<32x32xbf16> to vector<8x32xbf16>
    %cst_111 = arith.constant dense<0.000000e+00> : vector<8x32xf32>
    %380 = tpu.matmul %378, %379, %cst_111 {dimension_numbers = #tpu.dot_dimension_numbers<[1], [0], [0], [1], [0, 0, 1, 1], [], []>} : vector<8x8xbf16>, vector<8x32xbf16>, vector<8x32xf32> -> vector<8x32xf32>
    %381 = arith.addf %361, %380 : vector<8x32xf32>
    %382 = vector.extract_strided_slice %301 {offsets = [8, 0], sizes = [8, 96], strides = [1, 1]} : vector<16x96xf32> to vector<8x96xf32>
    %383 = vector.extract_strided_slice %382 {offsets = [0, 0], sizes = [8, 8], strides = [1, 1]} : vector<8x96xf32> to vector<8x8xf32>
    %384 = vector.extract_strided_slice %382 {offsets = [0, 32], sizes = [8, 8], strides = [1, 1]} : vector<8x96xf32> to vector<8x8xf32>
    %385 = vector.extract_strided_slice %382 {offsets = [0, 64], sizes = [8, 8], strides = [1, 1]} : vector<8x96xf32> to vector<8x8xf32>
    %cst_112 = arith.constant dense<0.000000e+00> : vector<8x8xf32>
    %386 = tpu.matmul %383, %384, %cst_112 {dimension_numbers = #tpu.dot_dimension_numbers<[1], [1], [0], [0], [0, 0, 1, 0], [], []>} : vector<8x8xf32>, vector<8x8xf32>, vector<8x8xf32> -> vector<8x8xf32>
    %387 = arith.addf %386, %5 : vector<8x8xf32>
    %cst_113 = arith.constant dense<0xFF800000> : vector<8xf32>
    %388 = vector.multi_reduction <maximumf>, %387, %cst_113 [1] : vector<8x8xf32> to vector<8xf32>
    %389 = vector.shape_cast %388 : vector<8xf32> to vector<8x1xf32>
    %390 = vector.broadcast %389 : vector<8x1xf32> to vector<8x8xf32>
    %391 = arith.subf %387, %390 : vector<8x8xf32>
    %392 = math.exp %391 : vector<8x8xf32>
    %cst_114 = arith.constant dense<0.000000e+00> : vector<8xf32>
    %393 = vector.multi_reduction <add>, %392, %cst_114 [1] : vector<8x8xf32> to vector<8xf32>
    %394 = vector.shape_cast %393 : vector<8xf32> to vector<8x1xf32>
    %395 = tpu.reciprocal %394 {approx = true} : vector<8x1xf32> -> vector<8x1xf32>
    %396 = vector.broadcast %395 : vector<8x1xf32> to vector<8x8xf32>
    %397 = arith.mulf %392, %396 : vector<8x8xf32>
    %cst_115 = arith.constant dense<0.000000e+00> : vector<8x8xf32>
    %398 = tpu.matmul %397, %385, %cst_115 {dimension_numbers = #tpu.dot_dimension_numbers<[1], [0], [0], [1], [0, 0, 1, 1], [], []>} : vector<8x8xf32>, vector<8x8xf32>, vector<8x8xf32> -> vector<8x8xf32>
    %399 = arith.truncf %398 : vector<8x8xf32> to vector<8x8xbf16>
    %400 = vector.extract_strided_slice %297 {offsets = [0, 0], sizes = [8, 32], strides = [1, 1]} : vector<32x32xbf16> to vector<8x32xbf16>
    %cst_116 = arith.constant dense<0.000000e+00> : vector<8x32xf32>
    %401 = tpu.matmul %399, %400, %cst_116 {dimension_numbers = #tpu.dot_dimension_numbers<[1], [0], [0], [1], [0, 0, 1, 1], [], []>} : vector<8x8xbf16>, vector<8x32xbf16>, vector<8x32xf32> -> vector<8x32xf32>
    %402 = vector.extract_strided_slice %382 {offsets = [0, 8], sizes = [8, 8], strides = [1, 1]} : vector<8x96xf32> to vector<8x8xf32>
    %403 = vector.extract_strided_slice %382 {offsets = [0, 40], sizes = [8, 8], strides = [1, 1]} : vector<8x96xf32> to vector<8x8xf32>
    %404 = vector.extract_strided_slice %382 {offsets = [0, 72], sizes = [8, 8], strides = [1, 1]} : vector<8x96xf32> to vector<8x8xf32>
    %cst_117 = arith.constant dense<0.000000e+00> : vector<8x8xf32>
    %405 = tpu.matmul %402, %403, %cst_117 {dimension_numbers = #tpu.dot_dimension_numbers<[1], [1], [0], [0], [0, 0, 1, 0], [], []>} : vector<8x8xf32>, vector<8x8xf32>, vector<8x8xf32> -> vector<8x8xf32>
    %406 = arith.addf %405, %5 : vector<8x8xf32>
    %cst_118 = arith.constant dense<0xFF800000> : vector<8xf32>
    %407 = vector.multi_reduction <maximumf>, %406, %cst_118 [1] : vector<8x8xf32> to vector<8xf32>
    %408 = vector.shape_cast %407 : vector<8xf32> to vector<8x1xf32>
    %409 = vector.broadcast %408 : vector<8x1xf32> to vector<8x8xf32>
    %410 = arith.subf %406, %409 : vector<8x8xf32>
    %411 = math.exp %410 : vector<8x8xf32>
    %cst_119 = arith.constant dense<0.000000e+00> : vector<8xf32>
    %412 = vector.multi_reduction <add>, %411, %cst_119 [1] : vector<8x8xf32> to vector<8xf32>
    %413 = vector.shape_cast %412 : vector<8xf32> to vector<8x1xf32>
    %414 = tpu.reciprocal %413 {approx = true} : vector<8x1xf32> -> vector<8x1xf32>
    %415 = vector.broadcast %414 : vector<8x1xf32> to vector<8x8xf32>
    %416 = arith.mulf %411, %415 : vector<8x8xf32>
    %cst_120 = arith.constant dense<0.000000e+00> : vector<8x8xf32>
    %417 = tpu.matmul %416, %404, %cst_120 {dimension_numbers = #tpu.dot_dimension_numbers<[1], [0], [0], [1], [0, 0, 1, 1], [], []>} : vector<8x8xf32>, vector<8x8xf32>, vector<8x8xf32> -> vector<8x8xf32>
    %418 = arith.truncf %417 : vector<8x8xf32> to vector<8x8xbf16>
    %419 = vector.extract_strided_slice %297 {offsets = [8, 0], sizes = [8, 32], strides = [1, 1]} : vector<32x32xbf16> to vector<8x32xbf16>
    %cst_121 = arith.constant dense<0.000000e+00> : vector<8x32xf32>
    %420 = tpu.matmul %418, %419, %cst_121 {dimension_numbers = #tpu.dot_dimension_numbers<[1], [0], [0], [1], [0, 0, 1, 1], [], []>} : vector<8x8xbf16>, vector<8x32xbf16>, vector<8x32xf32> -> vector<8x32xf32>
    %421 = arith.addf %401, %420 : vector<8x32xf32>
    %422 = vector.extract_strided_slice %382 {offsets = [0, 16], sizes = [8, 8], strides = [1, 1]} : vector<8x96xf32> to vector<8x8xf32>
    %423 = vector.extract_strided_slice %382 {offsets = [0, 48], sizes = [8, 8], strides = [1, 1]} : vector<8x96xf32> to vector<8x8xf32>
    %424 = vector.extract_strided_slice %382 {offsets = [0, 80], sizes = [8, 8], strides = [1, 1]} : vector<8x96xf32> to vector<8x8xf32>
    %cst_122 = arith.constant dense<0.000000e+00> : vector<8x8xf32>
    %425 = tpu.matmul %422, %423, %cst_122 {dimension_numbers = #tpu.dot_dimension_numbers<[1], [1], [0], [0], [0, 0, 1, 0], [], []>} : vector<8x8xf32>, vector<8x8xf32>, vector<8x8xf32> -> vector<8x8xf32>
    %426 = arith.addf %425, %5 : vector<8x8xf32>
    %cst_123 = arith.constant dense<0xFF800000> : vector<8xf32>
    %427 = vector.multi_reduction <maximumf>, %426, %cst_123 [1] : vector<8x8xf32> to vector<8xf32>
    %428 = vector.shape_cast %427 : vector<8xf32> to vector<8x1xf32>
    %429 = vector.broadcast %428 : vector<8x1xf32> to vector<8x8xf32>
    %430 = arith.subf %426, %429 : vector<8x8xf32>
    %431 = math.exp %430 : vector<8x8xf32>
    %cst_124 = arith.constant dense<0.000000e+00> : vector<8xf32>
    %432 = vector.multi_reduction <add>, %431, %cst_124 [1] : vector<8x8xf32> to vector<8xf32>
    %433 = vector.shape_cast %432 : vector<8xf32> to vector<8x1xf32>
    %434 = tpu.reciprocal %433 {approx = true} : vector<8x1xf32> -> vector<8x1xf32>
    %435 = vector.broadcast %434 : vector<8x1xf32> to vector<8x8xf32>
    %436 = arith.mulf %431, %435 : vector<8x8xf32>
    %cst_125 = arith.constant dense<0.000000e+00> : vector<8x8xf32>
    %437 = tpu.matmul %436, %424, %cst_125 {dimension_numbers = #tpu.dot_dimension_numbers<[1], [0], [0], [1], [0, 0, 1, 1], [], []>} : vector<8x8xf32>, vector<8x8xf32>, vector<8x8xf32> -> vector<8x8xf32>
    %438 = arith.truncf %437 : vector<8x8xf32> to vector<8x8xbf16>
    %439 = vector.extract_strided_slice %297 {offsets = [16, 0], sizes = [8, 32], strides = [1, 1]} : vector<32x32xbf16> to vector<8x32xbf16>
    %cst_126 = arith.constant dense<0.000000e+00> : vector<8x32xf32>
    %440 = tpu.matmul %438, %439, %cst_126 {dimension_numbers = #tpu.dot_dimension_numbers<[1], [0], [0], [1], [0, 0, 1, 1], [], []>} : vector<8x8xbf16>, vector<8x32xbf16>, vector<8x32xf32> -> vector<8x32xf32>
    %441 = arith.addf %421, %440 : vector<8x32xf32>
    %442 = vector.extract_strided_slice %382 {offsets = [0, 24], sizes = [8, 8], strides = [1, 1]} : vector<8x96xf32> to vector<8x8xf32>
    %443 = vector.extract_strided_slice %382 {offsets = [0, 56], sizes = [8, 8], strides = [1, 1]} : vector<8x96xf32> to vector<8x8xf32>
    %444 = vector.extract_strided_slice %382 {offsets = [0, 88], sizes = [8, 8], strides = [1, 1]} : vector<8x96xf32> to vector<8x8xf32>
    %cst_127 = arith.constant dense<0.000000e+00> : vector<8x8xf32>
    %445 = tpu.matmul %442, %443, %cst_127 {dimension_numbers = #tpu.dot_dimension_numbers<[1], [1], [0], [0], [0, 0, 1, 0], [], []>} : vector<8x8xf32>, vector<8x8xf32>, vector<8x8xf32> -> vector<8x8xf32>
    %446 = arith.addf %445, %5 : vector<8x8xf32>
    %cst_128 = arith.constant dense<0xFF800000> : vector<8xf32>
    %447 = vector.multi_reduction <maximumf>, %446, %cst_128 [1] : vector<8x8xf32> to vector<8xf32>
    %448 = vector.shape_cast %447 : vector<8xf32> to vector<8x1xf32>
    %449 = vector.broadcast %448 : vector<8x1xf32> to vector<8x8xf32>
    %450 = arith.subf %446, %449 : vector<8x8xf32>
    %451 = math.exp %450 : vector<8x8xf32>
    %cst_129 = arith.constant dense<0.000000e+00> : vector<8xf32>
    %452 = vector.multi_reduction <add>, %451, %cst_129 [1] : vector<8x8xf32> to vector<8xf32>
    %453 = vector.shape_cast %452 : vector<8xf32> to vector<8x1xf32>
    %454 = tpu.reciprocal %453 {approx = true} : vector<8x1xf32> -> vector<8x1xf32>
    %455 = vector.broadcast %454 : vector<8x1xf32> to vector<8x8xf32>
    %456 = arith.mulf %451, %455 : vector<8x8xf32>
    %cst_130 = arith.constant dense<0.000000e+00> : vector<8x8xf32>
    %457 = tpu.matmul %456, %444, %cst_130 {dimension_numbers = #tpu.dot_dimension_numbers<[1], [0], [0], [1], [0, 0, 1, 1], [], []>} : vector<8x8xf32>, vector<8x8xf32>, vector<8x8xf32> -> vector<8x8xf32>
    %458 = arith.truncf %457 : vector<8x8xf32> to vector<8x8xbf16>
    %459 = vector.extract_strided_slice %297 {offsets = [24, 0], sizes = [8, 32], strides = [1, 1]} : vector<32x32xbf16> to vector<8x32xbf16>
    %cst_131 = arith.constant dense<0.000000e+00> : vector<8x32xf32>
    %460 = tpu.matmul %458, %459, %cst_131 {dimension_numbers = #tpu.dot_dimension_numbers<[1], [0], [0], [1], [0, 0, 1, 1], [], []>} : vector<8x8xbf16>, vector<8x32xbf16>, vector<8x32xf32> -> vector<8x32xf32>
    %461 = arith.addf %441, %460 : vector<8x32xf32>
    %462 = tpu.concatenate %381, %461 in 0 : vector<8x32xf32>, vector<8x32xf32> -> vector<16x32xf32>
    %463 = vector.broadcast %287 : vector<1x32xf32> to vector<16x32xf32>
    %464 = arith.addf %462, %463 : vector<16x32xf32>
    %465 = arith.addf %464, %283 : vector<16x32xf32>
    %cst_132 = arith.constant dense<0.000000e+00> : vector<16xf32>
    %466 = vector.multi_reduction <add>, %465, %cst_132 [1] : vector<16x32xf32> to vector<16xf32>
    %467 = vector.shape_cast %466 : vector<16xf32> to vector<16x1xf32>
    %cst_133 = arith.constant 3.200000e+01 : f32
    %468 = vector.broadcast %cst_133 : f32 to vector<16x1xf32>
    %469 = arith.divf %467, %468 : vector<16x1xf32>
    %470 = vector.broadcast %469 : vector<16x1xf32> to vector<16x32xf32>
    %471 = arith.subf %465, %470 : vector<16x32xf32>
    %472 = arith.mulf %471, %471 : vector<16x32xf32>
    %cst_134 = arith.constant dense<0.000000e+00> : vector<16xf32>
    %473 = vector.multi_reduction <add>, %472, %cst_134 [1] : vector<16x32xf32> to vector<16xf32>
    %474 = vector.shape_cast %473 : vector<16xf32> to vector<16x1xf32>
    %cst_135 = arith.constant 3.200000e+01 : f32
    %475 = vector.broadcast %cst_135 : f32 to vector<16x1xf32>
    %476 = arith.divf %474, %475 : vector<16x1xf32>
    %477 = vector.broadcast %469 : vector<16x1xf32> to vector<16x32xf32>
    %478 = arith.subf %465, %477 : vector<16x32xf32>
    %cst_136 = arith.constant 9.99999996E-13 : f32
    %479 = vector.broadcast %cst_136 : f32 to vector<16x1xf32>
    %480 = arith.addf %476, %479 : vector<16x1xf32>
    %481 = math.rsqrt %480 : vector<16x1xf32>
    %482 = vector.broadcast %481 : vector<16x1xf32> to vector<16x32xf32>
    %483 = arith.mulf %478, %482 : vector<16x32xf32>
    %484 = vector.broadcast %288 : vector<1x32xf32> to vector<16x32xf32>
    %485 = arith.mulf %483, %484 : vector<16x32xf32>
    %486 = vector.broadcast %289 : vector<1x32xf32> to vector<16x32xf32>
    %487 = arith.addf %485, %486 : vector<16x32xf32>
    %488 = arith.truncf %487 : vector<16x32xf32> to vector<16x32xbf16>
    %c1_137 = arith.constant 1 : index
    %c0_138 = arith.constant 0 : index
    %c0_139 = arith.constant 0 : index
    %489 = vector.load %arg6[%c1_137, %c0_138, %c0_139] : memref<2x32x64xbf16, #tpu.memory_space<vmem>>, vector<1x32x64xbf16>
    %490 = vector.shape_cast %489 : vector<1x32x64xbf16> to vector<32x64xbf16>
    %cst_140 = arith.constant dense<0.000000e+00> : vector<16x64xf32>
    %491 = tpu.matmul %488, %490, %cst_140 {dimension_numbers = #tpu.dot_dimension_numbers<[1], [0], [0], [1], [0, 0, 1, 1], [], []>} : vector<16x32xbf16>, vector<32x64xbf16>, vector<16x64xf32> -> vector<16x64xf32>
    %492 = vector.broadcast %290 : vector<1x64xf32> to vector<16x64xf32>
    %493 = arith.addf %491, %492 : vector<16x64xf32>
    %494 = arith.mulf %493, %493 : vector<16x64xf32>
    %495 = arith.mulf %493, %494 : vector<16x64xf32>
    %cst_141 = arith.constant 4.471500e-02 : f32
    %496 = vector.broadcast %cst_141 : f32 to vector<16x64xf32>
    %497 = arith.mulf %496, %495 : vector<16x64xf32>
    %498 = arith.addf %493, %497 : vector<16x64xf32>
    %cst_142 = arith.constant 0.797884583 : f32
    %499 = vector.broadcast %cst_142 : f32 to vector<16x64xf32>
    %500 = arith.mulf %499, %498 : vector<16x64xf32>
    %501 = math.tanh %500 : vector<16x64xf32>
    %cst_143 = arith.constant 1.000000e+00 : f32
    %502 = vector.broadcast %cst_143 : f32 to vector<16x64xf32>
    %503 = arith.addf %502, %501 : vector<16x64xf32>
    %cst_144 = arith.constant 5.000000e-01 : f32
    %504 = vector.broadcast %cst_144 : f32 to vector<16x64xf32>
    %505 = arith.mulf %504, %503 : vector<16x64xf32>
    %506 = arith.mulf %493, %505 : vector<16x64xf32>
    %507 = arith.truncf %506 : vector<16x64xf32> to vector<16x64xbf16>
    %c1_145 = arith.constant 1 : index
    %c0_146 = arith.constant 0 : index
    %c0_147 = arith.constant 0 : index
    %508 = vector.load %arg7[%c1_145, %c0_146, %c0_147] : memref<2x64x32xbf16, #tpu.memory_space<vmem>>, vector<1x64x32xbf16>
    %509 = vector.shape_cast %508 : vector<1x64x32xbf16> to vector<64x32xbf16>
    %cst_148 = arith.constant dense<0.000000e+00> : vector<16x32xf32>
    %510 = tpu.matmul %507, %509, %cst_148 {dimension_numbers = #tpu.dot_dimension_numbers<[1], [0], [0], [1], [0, 0, 1, 1], [], []>} : vector<16x64xbf16>, vector<64x32xbf16>, vector<16x32xf32> -> vector<16x32xf32>
    %511 = vector.broadcast %291 : vector<1x32xf32> to vector<16x32xf32>
    %512 = arith.addf %510, %511 : vector<16x32xf32>
    %513 = arith.addf %512, %487 : vector<16x32xf32>
    %cst_149 = arith.constant dense<0.000000e+00> : vector<16xf32>
    %514 = vector.multi_reduction <add>, %513, %cst_149 [1] : vector<16x32xf32> to vector<16xf32>
    %515 = vector.shape_cast %514 : vector<16xf32> to vector<16x1xf32>
    %cst_150 = arith.constant 3.200000e+01 : f32
    %516 = vector.broadcast %cst_150 : f32 to vector<16x1xf32>
    %517 = arith.divf %515, %516 : vector<16x1xf32>
    %518 = vector.broadcast %517 : vector<16x1xf32> to vector<16x32xf32>
    %519 = arith.subf %513, %518 : vector<16x32xf32>
    %520 = arith.mulf %519, %519 : vector<16x32xf32>
    %cst_151 = arith.constant dense<0.000000e+00> : vector<16xf32>
    %521 = vector.multi_reduction <add>, %520, %cst_151 [1] : vector<16x32xf32> to vector<16xf32>
    %522 = vector.shape_cast %521 : vector<16xf32> to vector<16x1xf32>
    %cst_152 = arith.constant 3.200000e+01 : f32
    %523 = vector.broadcast %cst_152 : f32 to vector<16x1xf32>
    %524 = arith.divf %522, %523 : vector<16x1xf32>
    %525 = vector.broadcast %517 : vector<16x1xf32> to vector<16x32xf32>
    %526 = arith.subf %513, %525 : vector<16x32xf32>
    %cst_153 = arith.constant 9.99999996E-13 : f32
    %527 = vector.broadcast %cst_153 : f32 to vector<16x1xf32>
    %528 = arith.addf %524, %527 : vector<16x1xf32>
    %529 = math.rsqrt %528 : vector<16x1xf32>
    %530 = vector.broadcast %529 : vector<16x1xf32> to vector<16x32xf32>
    %531 = arith.mulf %526, %530 : vector<16x32xf32>
    %532 = vector.broadcast %292 : vector<1x32xf32> to vector<16x32xf32>
    %533 = arith.mulf %531, %532 : vector<16x32xf32>
    %534 = vector.broadcast %293 : vector<1x32xf32> to vector<16x32xf32>
    %535 = arith.addf %533, %534 : vector<16x32xf32>
    %536 = vector.extract_strided_slice %535 {offsets = [0, 0], sizes = [1, 32], strides = [1, 1]} : vector<16x32xf32> to vector<1x32xf32>
    %537 = vector.extract_strided_slice %535 {offsets = [8, 0], sizes = [1, 32], strides = [1, 1]} : vector<16x32xf32> to vector<1x32xf32>
    %538 = tpu.concatenate %536, %537 in 0 : vector<1x32xf32>, vector<1x32xf32> -> vector<2x32xf32>
    %c0_154 = arith.constant 0 : index
    %c0_155 = arith.constant 0 : index
    %539 = vector.load %arg9[%c0_154, %c0_155] : memref<40x32xf32, #tpu.memory_space<vmem>>, vector<32x32xf32>
    %cst_156 = arith.constant dense<0.000000e+00> : vector<2x32xf32>
    %540 = tpu.matmul %538, %539, %cst_156 {dimension_numbers = #tpu.dot_dimension_numbers<[1], [0], [0], [1], [0, 0, 1, 1], [], []>} : vector<2x32xf32>, vector<32x32xf32>, vector<2x32xf32> -> vector<2x32xf32>
    %c32 = arith.constant 32 : index
    %c0_157 = arith.constant 0 : index
    %541 = vector.load %arg9[%c32, %c0_157] : memref<40x32xf32, #tpu.memory_space<vmem>>, vector<1x32xf32>
    %542 = vector.broadcast %541 : vector<1x32xf32> to vector<2x32xf32>
    %543 = arith.addf %540, %542 : vector<2x32xf32>
    %544 = math.tanh %543 : vector<2x32xf32>
    %c0_158 = arith.constant 0 : index
    %c0_159 = arith.constant 0 : index
    %545 = vector.load %arg10[%c0_158, %c0_159] : memref<40x128xf32, #tpu.memory_space<vmem>>, vector<32x128xf32>
    %cst_160 = arith.constant dense<0.000000e+00> : vector<2x128xf32>
    %546 = tpu.matmul %544, %545, %cst_160 {dimension_numbers = #tpu.dot_dimension_numbers<[1], [0], [0], [1], [0, 0, 1, 1], [], []>} : vector<2x32xf32>, vector<32x128xf32>, vector<2x128xf32> -> vector<2x128xf32>
    %c32_161 = arith.constant 32 : index
    %c0_162 = arith.constant 0 : index
    %547 = vector.load %arg10[%c32_161, %c0_162] : memref<40x128xf32, #tpu.memory_space<vmem>>, vector<1x128xf32>
    %548 = vector.broadcast %547 : vector<1x128xf32> to vector<2x128xf32>
    %549 = arith.addf %546, %548 : vector<2x128xf32>
    %c0_163 = arith.constant 0 : index
    %c0_164 = arith.constant 0 : index
    %550 = vector.load %arg11[%c0_163, %c0_164] : memref<2x128xf32, #tpu.memory_space<vmem>>, vector<2x128xf32>
    tpu.vector_store %arg11[%c0_163, %c0_164], %549 {strides = array<i32>} : memref<2x128xf32, #tpu.memory_space<vmem>>, vector<2x128xf32>,
    return
  }
  func.func @transform_0(%arg0: i32) -> (i32, i32) {
    %c0_i32 = arith.constant 0 : i32
    %c0_i32_0 = arith.constant 0 : i32
    %c0_i32_1 = arith.constant 0 : i32
    return %c0_i32, %c0_i32_0 : i32, i32
  }
  func.func @transform_1(%arg0: i32) -> (i32, i32) {
    %c0_i32 = arith.constant 0 : i32
    %c0_i32_0 = arith.constant 0 : i32
    %c0_i32_1 = arith.constant 0 : i32
    return %c0_i32, %c0_i32_0 : i32, i32
  }
  func.func @transform_2(%arg0: i32) -> (i32, i32) {
    %c0_i32 = arith.constant 0 : i32
    %c0_i32_0 = arith.constant 0 : i32
    %c0_i32_1 = arith.constant 0 : i32
    return %c0_i32, %c0_i32_0 : i32, i32
  }
  func.func @transform_3(%arg0: i32) -> (i32, i32, i32) {
    %c0_i32 = arith.constant 0 : i32
    %c0_i32_0 = arith.constant 0 : i32
    %c0_i32_1 = arith.constant 0 : i32
    %c0_i32_2 = arith.constant 0 : i32
    return %c0_i32, %c0_i32_0, %c0_i32_1 : i32, i32, i32
  }
  func.func @transform_4(%arg0: i32) -> (i32, i32, i32) {
    %c0_i32 = arith.constant 0 : i32
    %c0_i32_0 = arith.constant 0 : i32
    %c0_i32_1 = arith.constant 0 : i32
    %c0_i32_2 = arith.constant 0 : i32
    return %c0_i32, %c0_i32_0, %c0_i32_1 : i32, i32, i32
  }
  func.func @transform_5(%arg0: i32) -> (i32, i32, i32) {
    %c0_i32 = arith.constant 0 : i32
    %c0_i32_0 = arith.constant 0 : i32
    %c0_i32_1 = arith.constant 0 : i32
    %c0_i32_2 = arith.constant 0 : i32
    return %c0_i32, %c0_i32_0, %c0_i32_1 : i32, i32, i32
  }
  func.func @transform_6(%arg0: i32) -> (i32, i32, i32) {
    %c0_i32 = arith.constant 0 : i32
    %c0_i32_0 = arith.constant 0 : i32
    %c0_i32_1 = arith.constant 0 : i32
    %c0_i32_2 = arith.constant 0 : i32
    return %c0_i32, %c0_i32_0, %c0_i32_1 : i32, i32, i32
  }
  func.func @transform_7(%arg0: i32) -> (i32, i32, i32) {
    %c0_i32 = arith.constant 0 : i32
    %c0_i32_0 = arith.constant 0 : i32
    %c0_i32_1 = arith.constant 0 : i32
    %c0_i32_2 = arith.constant 0 : i32
    return %c0_i32, %c0_i32_0, %c0_i32_1 : i32, i32, i32
  }
  func.func @transform_8(%arg0: i32) -> (i32, i32) {
    %c0_i32 = arith.constant 0 : i32
    %c0_i32_0 = arith.constant 0 : i32
    %c0_i32_1 = arith.constant 0 : i32
    return %c0_i32, %c0_i32_0 : i32, i32
  }
  func.func @transform_9(%arg0: i32) -> (i32, i32) {
    %c0_i32 = arith.constant 0 : i32
    %c0_i32_0 = arith.constant 0 : i32
    %c0_i32_1 = arith.constant 0 : i32
    return %c0_i32, %c0_i32_0 : i32, i32
  }
  func.func @transform_10(%arg0: i32) -> (i32, i32) {
    %c0_i32 = arith.constant 0 : i32
    %c0_i32_0 = arith.constant 0 : i32
    %c0_i32_1 = arith.constant 0 : i32
    return %c0_i32, %c0_i32_0 : i32, i32
  }
}

</mosaic_0001>

<llo_original>
// kernel: forward.1
$region0: #{forward.1}
  #allocation0 [shape = 'u32[]', space=smem, size = 0x4, offset = 0x4, fixed_abs, tag = 'smem constant byte address 0x4 - core index']
  #allocation1 [shape = 'u32[144,128]{1,0:T(1,128)}', space=vmem, size = 0x12000, scoped, tag = 'internal scratch']
  %s0 = inlined_call_operand.vmem [shape: f32[16,32], index: 0, kind: input, shape index: {}]
  %s1 = inlined_call_operand.vmem [shape: f32[2,8], index: 1, kind: input, shape index: {}]
  %s2 = inlined_call_operand.vmem [shape: f32[2,32], index: 2, kind: input, shape index: {}]
  %s3 = inlined_call_operand.vmem [shape: bf16[2,32,96], index: 3, kind: input, shape index: {}]
  %s4 = inlined_call_operand.vmem [shape: bf16[2,32,32], index: 4, kind: input, shape index: {}]
  %s5 = inlined_call_operand.vmem [shape: bf16[2,32,64], index: 5, kind: input, shape index: {}]
  %s6 = inlined_call_operand.vmem [shape: bf16[2,64,32], index: 6, kind: input, shape index: {}]
  %s7 = inlined_call_operand.vmem [shape: f32[2,4,96], index: 7, kind: input, shape index: {}]
  %s8 = inlined_call_operand.vmem [shape: f32[40,32], index: 8, kind: input, shape index: {}]
  %s9 = inlined_call_operand.vmem [shape: f32[40,128], index: 9, kind: input, shape index: {}]
  %s10 = inlined_call_operand.hbm [shape: f32[2,128], index: 10, kind: output, shape index: {}]
  %s11 = sld [smem:[#allocation0]]
  $region50: #{forward.1} parent=0
    _
  %s13 = ssub.s32 1, %s11
  %s14 = scalar_select 0, %s13, %s11
  $region1: #{forward.1} parent=0
    #allocation2 [shape = 'u8[1024]{0}', space=vmem, size = 0x400, scoped, tag = 'output window, operand 0, single buffered']
    #allocation3 [shape = 's32[1]{0}', space=sflag, size = 0x4, scoped, tag = 'scoped memory for forward.1']
    %15 = vsyncpa [#allocation3], 0
    // Predicated region
    $region2: #{forward.1} parent=1 // pred_check
      _
    $region3: #{forward.1} parent=1 // pred_check_branch
      %17 = sbr.rel (0) target = $region5
    $region4: #{forward.1} parent=1 // pred_region
      _
    $region5: #{forward.1} parent=1 // pred_fallthru
      _
    // Predicated region
    $region6: #{forward.1} parent=1 // pred_check
      _
    $region7: #{forward.1} parent=1 // pred_check_branch
      %19 = sbr.rel (0) target = $region9
    $region8: #{forward.1} parent=1 // pred_region
      _
    $region9: #{forward.1} parent=1 // pred_fallthru
      _
    // Predicated region
    $region10: #{forward.1} parent=1 // pred_check
      _
    $region11: #{forward.1} parent=1 // pred_check_branch
      %21 = sbr.rel (0) target = $region13
    $region12: #{forward.1} parent=1 // pred_region
      _
    $region13: #{forward.1} parent=1 // pred_fallthru
      _
    // Predicated region
    $region14: #{forward.1} parent=1 // pred_check
      _
    $region15: #{forward.1} parent=1 // pred_check_branch
      %23 = sbr.rel (0) target = $region17
    $region16: #{forward.1} parent=1 // pred_region
      _
    $region17: #{forward.1} parent=1 // pred_fallthru
      _
    // Predicated region
    $region18: #{forward.1} parent=1 // pred_check
      _
    $region19: #{forward.1} parent=1 // pred_check_branch
      %25 = sbr.rel (0) target = $region21
    $region20: #{forward.1} parent=1 // pred_region
      _
    $region21: #{forward.1} parent=1 // pred_fallthru
      _
    // Predicated region
    $region22: #{forward.1} parent=1 // pred_check
      _
    $region23: #{forward.1} parent=1 // pred_check_branch
      %27 = sbr.rel (0) target = $region25
    $region24: #{forward.1} parent=1 // pred_region
      _
    $region25: #{forward.1} parent=1 // pred_fallthru
      _
    // Predicated region
    $region26: #{forward.1} parent=1 // pred_check
      _
    $region27: #{forward.1} parent=1 // pred_check_branch
      %29 = sbr.rel (0) target = $region29
    $region28: #{forward.1} parent=1 // pred_region
      _
    $region29: #{forward.1} parent=1 // pred_fallthru
      _
    // Predicated region
    $region30: #{forward.1} parent=1 // pred_check
      _
    $region31: #{forward.1} parent=1 // pred_check_branch
      %31 = sbr.rel (0) target = $region33
    $region32: #{forward.1} parent=1 // pred_region
      _
    $region33: #{forward.1} parent=1 // pred_fallthru
      _
    // Predicated region
    $region34: #{forward.1} parent=1 // pred_check
      _
    $region35: #{forward.1} parent=1 // pred_check_branch
      %33 = sbr.rel (0) target = $region37
    $region36: #{forward.1} parent=1 // pred_region
      _
    $region37: #{forward.1} parent=1 // pred_fallthru
      _
    // Predicated region
    $region38: #{forward.1} parent=1 // pred_check
      _
    $region39: #{forward.1} parent=1 // pred_check_branch
      %35 = sbr.rel (0) target = $region41
    $region40: #{forward.1} parent=1 // pred_region
      _
    $region41: #{forward.1} parent=1 // pred_fallthru
      _
    %v37 = vld [vmem:[%s1] sm:$0x1]
    %v38 = vlaneseq
    %v39 = vshrl.u32 %v38, 7
    %v40 = vsub.s32 0, %v39
    %v41 = vrot.slane %v37, %v40
    %v42 = vld [vmem:[%s1 + $0x1] sm:$0x1]
    %v43 = vlaneseq
    %v44 = vshrl.u32 %v43, 7
    %v45 = vsub.s32 0, %v44
    %v46 = vrot.slane %v42, %v45
    %v47 = vld [vmem:[%s2] sm:$0x3]
    %v48 = vld [vmem:[%s0] sm:$0xff]
    %v49 = vld [vmem:[%s0 + $0x8] sm:$0xff]
    %vm50 = vcmask 261120
    %v51 = vsel %vm50, %v48, 0.0
    %52 = vadd.xlane.f32.xlu0 %v51
    %v53 = vpop.xlane.xlu0 %52
    %v54 = vsel %vm50, %v49, 0.0
    %55 = vadd.xlane.f32.xlu0 %v54
    %v56 = vpop.xlane.xlu0 %55
    %v57 = vrcp.pop 32.0
    %v58 = vmul.f32 %v53, %v57
    %v59 = vmul.f32 %v56, %v57
    %v60 = vsub.f32 %v48, %v58
    %v61 = vsub.f32 %v49, %v59
    %v62 = vmul.f32 %v60, %v60
    %v63 = vmul.f32 %v61, %v61
    %v64 = vsel %vm50, %v62, 0.0
    %65 = vadd.xlane.f32.xlu0 %v64
    %v66 = vpop.xlane.xlu0 %65
    %v67 = vsel %vm50, %v63, 0.0
    %68 = vadd.xlane.f32.xlu0 %v67
    %v69 = vpop.xlane.xlu0 %68
    %v70 = vmul.f32 %v66, %v57
    %v71 = vmul.f32 %v69, %v57
    %v72 = vadd.f32 %v70, 1e-12
    %v73 = vadd.f32 %v71, 1e-12
    %v74 = vrsqrt.pop %v72
    %v75 = vrsqrt.pop %v73
    %v76 = vmul.f32 %v60, %v74
    %v77 = vmul.f32 %v61, %v75
    %v78 = vlaneseq
    %v79 = vshrl.u32 %v78, 7
    %v80 = vsub.s32 0, %v79
    %v81 = vrot.slane %v47, %v80
    %v82 = vmul.f32 %v76, %v81
    %v83 = vmul.f32 %v77, %v81
    %v84 = vlaneseq
    %v85 = vshrl.u32 %v84, 7
    %v86 = vsub.s32 1, %v85
    %v87 = vrot.slane %v47, %v86
    %v88 = vadd.f32 %v82, %v87
    %v89 = vadd.f32 %v83, %v87
    %v90 = vld [vmem:[%s7] sm:$0xf]
    %v91 = vld [vmem:[%s3] sm:$0xf]
    %v92 = vld [vmem:[%s3 + $0x4] sm:$0xf]
    %v93 = vld [vmem:[%s3 + $0x8] sm:$0xf]
    %v94 = vld [vmem:[%s3 + $0xc] sm:$0xf]
    %v95 = vld [vmem:[%s4] sm:$0xf]
    %v96 = vld [vmem:[%s4 + $0x4] sm:$0xf]
    %v97 = vld [vmem:[%s4 + $0x8] sm:$0xf]
    %v98 = vld [vmem:[%s4 + $0xc] sm:$0xf]
    %v99 = vpack.c.bf16 %v89, %v88
    %v100 = vlaneseq
    %v101 = vshrl.u32 %v100, 7
    %v102 = vsub.s32 0, %v101
    %v103 = vrot.slane %v90, %v102
    %v108 = vunpack.c.l.b16 %v91
    %v109 = vunpack.c.l.b16 %v92
    %v110 = vunpack.c.l.b16 %v93
    %v111 = vunpack.c.l.b16 %v94
    %v112 = vpack.c.b16 %v109, %v108
    %v113 = vpack.c.b16 %v111, %v110
    %v117 = vsel %vm50, %v99, 0
    %119 = vmatprep.subr.bf16.mxu0 0
    %120 = vmatpush1.bf16.msra.mxu0 %v112
    %121 = vmatprep.subr.bf16.mxu0 0
    %122 = vmatpush1.bf16.msra.mxu0 %v113
    %123 = vmatprep.subr.bf16.mxu0 0
    %124 = vmatpush1.bf16.msra.mxu0 0
    %125 = vmatprep.subr.bf16.mxu0 0
    %126 = vmatpush1.bf16.msra.mxu0 0
    %127 = vmatprep.subr.bf16.mxu0 0
    %128 = vmatpush1.bf16.msra.mxu0 0
    %129 = vmatprep.subr.bf16.mxu0 0
    %130 = vmatpush1.bf16.msra.mxu0 0
    %131 = vmatprep.subr.bf16.mxu0 0
    %132 = vmatpush1.bf16.msra.mxu0 0
    %133 = vmatprep.subr.bf16.mxu0 0
    %134 = vmatpush1.bf16.msra.mxu0 0
    %135 = vmatprep.subr.bf16.mxu0 0
    %136 = vmatpush1.bf16.msra.mxu0 0
    %137 = vmatprep.subr.bf16.mxu0 0
    %138 = vmatpush1.bf16.msra.mxu0 0
    %139 = vmatprep.subr.bf16.mxu0 0
    %140 = vmatpush1.bf16.msra.mxu0 0
    %141 = vmatprep.subr.bf16.mxu0 0
    %142 = vmatpush1.bf16.msra.mxu0 0
    %143 = vmatprep.subr.bf16.mxu0 0
    %144 = vmatpush1.bf16.msra.mxu0 0
    %145 = vmatprep.subr.bf16.mxu0 0
    %146 = vmatpush1.bf16.msra.mxu0 0
    %147 = vmatprep.subr.bf16.mxu0 0
    %148 = vmatpush1.bf16.msra.mxu0 0
    %149 = vmatprep.subr.bf16.mxu0 0
    %150 = vmatpush1.bf16.msra.mxu0 0
    %151 = vmatprep.mubr.bf16.mxu0 0
    %152 = vmatmul.mubr.bf16.gmra.mrb[0].mxu0 %v117
    %v153 = vpop.f32.mrb[0].mxu0
    %v154 = vadd.f32 %v103, %v153
    %v155 = vpop.f32.mrb[0].mxu0
    %v156 = vpop.f32.mrb[0].mxu0
    %v157 = vadd.f32 %v103, %v156
    %v158 = vpop.f32.mrb[0].mxu0
    %159 = vdwg.mxu0
    %161 = vrot.lane.b32.xlu0 %v154, 96
    %v162 = vpop.permute.xlu0 %161
    %vm163 = vcmask 64512
    %v164 = vsel %vm163, %v154, 0
    %v166 = vsel %vm163, %v162, 0
    %168 = vmatprep.subr.mxu0 0.0
    %169 = vmatpush1.xpose.msra.mxu0 %v166
    %170 = vmatprep.subr.mxu0 0.0
    %171 = vmatpush1.xpose.msra.mxu0 0.0
    %172 = vmatprep.subr.mxu0 0.0
    %173 = vmatpush1.xpose.msra.mxu0 0.0
    %174 = vmatprep.subr.mxu0 0.0
    %175 = vmatpush1.xpose.msra.mxu0 0.0
    %176 = vmatprep.subr.mxu0 0.0
    %177 = vmatpush1.xpose.msra.mxu0 0.0
    %178 = vmatprep.subr.mxu0 0.0
    %179 = vmatpush1.xpose.msra.mxu0 0.0
    %180 = vmatprep.subr.mxu0 0.0
    %181 = vmatpush1.xpose.msra.mxu0 0.0
    %182 = vmatprep.subr.mxu0 0.0
    %183 = vmatpush1.xpose.msra.mxu0 0.0
    %184 = vmatprep.subr.mxu0 0.0
    %185 = vmatpush1.xpose.msra.mxu0 0.0
    %186 = vmatprep.subr.mxu0 0.0
    %187 = vmatpush1.xpose.msra.mxu0 0.0
    %188 = vmatprep.subr.mxu0 0.0
    %189 = vmatpush1.xpose.msra.mxu0 0.0
    %190 = vmatprep.subr.mxu0 0.0
    %191 = vmatpush1.xpose.msra.mxu0 0.0
    %192 = vmatprep.subr.mxu0 0.0
    %193 = vmatpush1.xpose.msra.mxu0 0.0
    %194 = vmatprep.subr.mxu0 0.0
    %195 = vmatpush1.xpose.msra.mxu0 0.0
    %196 = vmatprep.subr.mxu0 0.0
    %197 = vmatpush1.xpose.msra.mxu0 0.0
    %198 = vmatprep.subr.mxu0 0.0
    %199 = vmatpush1.xpose.msra.mxu0 0.0
    %200 = vmatprep.subr.mxu0 0.0
    %201 = vmatpush1.xpose.msra.mxu0 0.0
    %202 = vmatprep.subr.mxu0 0.0
    %203 = vmatpush1.xpose.msra.mxu0 0.0
    %204 = vmatprep.subr.mxu0 0.0
    %205 = vmatpush1.xpose.msra.mxu0 0.0
    %206 = vmatprep.subr.mxu0 0.0
    %207 = vmatpush1.xpose.msra.mxu0 0.0
    %208 = vmatprep.subr.mxu0 0.0
    %209 = vmatpush1.xpose.msra.mxu0 0.0
    %210 = vmatprep.subr.mxu0 0.0
    %211 = vmatpush1.xpose.msra.mxu0 0.0
    %212 = vmatprep.subr.mxu0 0.0
    %213 = vmatpush1.xpose.msra.mxu0 0.0
    %214 = vmatprep.subr.mxu0 0.0
    %215 = vmatpush1.xpose.msra.mxu0 0.0
    %216 = vmatprep.subr.mxu0 0.0
    %217 = vmatpush1.xpose.msra.mxu0 0.0
    %218 = vmatprep.subr.mxu0 0.0
    %219 = vmatpush1.xpose.msra.mxu0 0.0
    %220 = vmatprep.subr.mxu0 0.0
    %221 = vmatpush1.xpose.msra.mxu0 0.0
    %222 = vmatprep.subr.mxu0 0.0
    %223 = vmatpush1.xpose.msra.mxu0 0.0
    %224 = vmatprep.subr.mxu0 0.0
    %225 = vmatpush1.xpose.msra.mxu0 0.0
    %226 = vmatprep.subr.mxu0 0.0
    %227 = vmatpush1.xpose.msra.mxu0 0.0
    %228 = vmatprep.subr.mxu0 0.0
    %229 = vmatpush1.xpose.msra.mxu0 0.0
    %230 = vmatprep.subr.mxu0 0.0
    %231 = vmatpush1.xpose.msra.mxu0 0.0
    %232 = vmatprep.mubr.f32.mxu0 0.0
    %233 = vmatmul.mubr.f32.gmra.mrb[0].mxu0 %v164
    %v234 = vpop.f32.mrb[0].mxu0
    %v235 = vadd.f32 %v41, %v234
    %v236 = vpop.f32.mrb[0].mxu0
    %237 = vdwg.mxu0
    %v238 = vsel %vm163, %v235, -inf
    %239 = vmax.xlane.f32.xlu0 %v238
    %v240 = vpop.xlane.xlu0 %239
    %v241 = vsub.f32 %v235, %v240
    %v242 = vmul.f32 %v241, 1.442695
    %v243 = vpow.pop %v242
    %v244 = vsel %vm163, %v243, 0.0
    %245 = vadd.xlane.f32.xlu0 %v244
    %v246 = vpop.xlane.xlu0 %245
    %v247 = vrcp.pop %v246
    %v248 = vmul.f32 %v243, %v247
    %249 = vrot.lane.b32.xlu0 %v154, 64
    %v250 = vpop.permute.xlu0 %249
    %v253 = vsel %vm163, %v248, 0
    %255 = vmatprep.subr.mxu0 0.0
    %256 = vmatpush1.msra.mxu0 %v250
    %257 = vmatprep.subr.mxu0 0.0
    %258 = vmatpush1.msra.mxu0 0.0
    %259 = vmatprep.subr.mxu0 0.0
    %260 = vmatpush1.msra.mxu0 0.0
    %261 = vmatprep.subr.mxu0 0.0
    %262 = vmatpush1.msra.mxu0 0.0
    %263 = vmatprep.subr.mxu0 0.0
    %264 = vmatpush1.msra.mxu0 0.0
    %265 = vmatprep.subr.mxu0 0.0
    %266 = vmatpush1.msra.mxu0 0.0
    %267 = vmatprep.subr.mxu0 0.0
    %268 = vmatpush1.msra.mxu0 0.0
    %269 = vmatprep.subr.mxu0 0.0
    %270 = vmatpush1.msra.mxu0 0.0
    %271 = vmatprep.subr.mxu0 0.0
    %272 = vmatpush1.msra.mxu0 0.0
    %273 = vmatprep.subr.mxu0 0.0
    %274 = vmatpush1.msra.mxu0 0.0
    %275 = vmatprep.subr.mxu0 0.0
    %276 = vmatpush1.msra.mxu0 0.0
    %277 = vmatprep.subr.mxu0 0.0
    %278 = vmatpush1.msra.mxu0 0.0
    %279 = vmatprep.subr.mxu0 0.0
    %280 = vmatpush1.msra.mxu0 0.0
    %281 = vmatprep.subr.mxu0 0.0
    %282 = vmatpush1.msra.mxu0 0.0
    %283 = vmatprep.subr.mxu0 0.0
    %284 = vmatpush1.msra.mxu0 0.0
    %285 = vmatprep.subr.mxu0 0.0
    %286 = vmatpush1.msra.mxu0 0.0
    %287 = vmatprep.subr.mxu0 0.0
    %288 = vmatpush1.msra.mxu0 0.0
    %289 = vmatprep.subr.mxu0 0.0
    %290 = vmatpush1.msra.mxu0 0.0
    %291 = vmatprep.subr.mxu0 0.0
    %292 = vmatpush1.msra.mxu0 0.0
    %293 = vmatprep.subr.mxu0 0.0
    %294 = vmatpush1.msra.mxu0 0.0
    %295 = vmatprep.subr.mxu0 0.0
    %296 = vmatpush1.msra.mxu0 0.0
    %297 = vmatprep.subr.mxu0 0.0
    %298 = vmatpush1.msra.mxu0 0.0
    %299 = vmatprep.subr.mxu0 0.0
    %300 = vmatpush1.msra.mxu0 0.0
    %301 = vmatprep.subr.mxu0 0.0
    %302 = vmatpush1.msra.mxu0 0.0
    %303 = vmatprep.subr.mxu0 0.0
    %304 = vmatpush1.msra.mxu0 0.0
    %305 = vmatprep.subr.mxu0 0.0
    %306 = vmatpush1.msra.mxu0 0.0
    %307 = vmatprep.subr.mxu0 0.0
    %308 = vmatpush1.msra.mxu0 0.0
    %309 = vmatprep.subr.mxu0 0.0
    %310 = vmatpush1.msra.mxu0 0.0
    %311 = vmatprep.subr.mxu0 0.0
    %312 = vmatpush1.msra.mxu0 0.0
    %313 = vmatprep.subr.mxu0 0.0
    %314 = vmatpush1.msra.mxu0 0.0
    %315 = vmatprep.subr.mxu0 0.0
    %316 = vmatpush1.msra.mxu0 0.0
    %317 = vmatprep.subr.mxu0 0.0
    %318 = vmatpush1.msra.mxu0 0.0
    %319 = vmatprep.mubr.f32.mxu0 0.0
    %320 = vmatmul.mubr.f32.gmra.mrb[0].mxu0 %v253
    %v321 = vpop.f32.mrb[0].mxu0
    %v322 = vadd.f32 0.0, %v321
    %v323 = vpop.f32.mrb[0].mxu0
    %324 = vdwg.mxu0
    %v325 = vpack.c.bf16 %v322, %v322
    %326 = vrot.lane.b32.xlu0 %v154, 120
    %v327 = vpop.permute.xlu0 %326
    %328 = vrot.lane.b32.xlu0 %v154, 88
    %v329 = vpop.permute.xlu0 %328
    %v330 = vsel %vm163, %v327, 0
    %v332 = vsel %vm163, %v329, 0
    %334 = vmatprep.subr.mxu0 0.0
    %335 = vmatpush1.xpose.msra.mxu0 %v332
    %336 = vmatprep.subr.mxu0 0.0
    %337 = vmatpush1.xpose.msra.mxu0 0.0
    %338 = vmatprep.subr.mxu0 0.0
    %339 = vmatpush1.xpose.msra.mxu0 0.0
    %340 = vmatprep.subr.mxu0 0.0
    %341 = vmatpush1.xpose.msra.mxu0 0.0
    %342 = vmatprep.subr.mxu0 0.0
    %343 = vmatpush1.xpose.msra.mxu0 0.0
    %344 = vmatprep.subr.mxu0 0.0
    %345 = vmatpush1.xpose.msra.mxu0 0.0
    %346 = vmatprep.subr.mxu0 0.0
    %347 = vmatpush1.xpose.msra.mxu0 0.0
    %348 = vmatprep.subr.mxu0 0.0
    %349 = vmatpush1.xpose.msra.mxu0 0.0
    %350 = vmatprep.subr.mxu0 0.0
    %351 = vmatpush1.xpose.msra.mxu0 0.0
    %352 = vmatprep.subr.mxu0 0.0
    %353 = vmatpush1.xpose.msra.mxu0 0.0
    %354 = vmatprep.subr.mxu0 0.0
    %355 = vmatpush1.xpose.msra.mxu0 0.0
    %356 = vmatprep.subr.mxu0 0.0
    %357 = vmatpush1.xpose.msra.mxu0 0.0
    %358 = vmatprep.subr.mxu0 0.0
    %359 = vmatpush1.xpose.msra.mxu0 0.0
    %360 = vmatprep.subr.mxu0 0.0
    %361 = vmatpush1.xpose.msra.mxu0 0.0
    %362 = vmatprep.subr.mxu0 0.0
    %363 = vmatpush1.xpose.msra.mxu0 0.0
    %364 = vmatprep.subr.mxu0 0.0
    %365 = vmatpush1.xpose.msra.mxu0 0.0
    %366 = vmatprep.subr.mxu0 0.0
    %367 = vmatpush1.xpose.msra.mxu0 0.0
    %368 = vmatprep.subr.mxu0 0.0
    %369 = vmatpush1.xpose.msra.mxu0 0.0
    %370 = vmatprep.subr.mxu0 0.0
    %371 = vmatpush1.xpose.msra.mxu0 0.0
    %372 = vmatprep.subr.mxu0 0.0
    %373 = vmatpush1.xpose.msra.mxu0 0.0
    %374 = vmatprep.subr.mxu0 0.0
    %375 = vmatpush1.xpose.msra.mxu0 0.0
    %376 = vmatprep.subr.mxu0 0.0
    %377 = vmatpush1.xpose.msra.mxu0 0.0
    %378 = vmatprep.subr.mxu0 0.0
    %379 = vmatpush1.xpose.msra.mxu0 0.0
    %380 = vmatprep.subr.mxu0 0.0
    %381 = vmatpush1.xpose.msra.mxu0 0.0
    %382 = vmatprep.subr.mxu0 0.0
    %383 = vmatpush1.xpose.msra.mxu0 0.0
    %384 = vmatprep.subr.mxu0 0.0
    %385 = vmatpush1.xpose.msra.mxu0 0.0
    %386 = vmatprep.subr.mxu0 0.0
    %387 = vmatpush1.xpose.msra.mxu0 0.0
    %388 = vmatprep.subr.mxu0 0.0
    %389 = vmatpush1.xpose.msra.mxu0 0.0
    %390 = vmatprep.subr.mxu0 0.0
    %391 = vmatpush1.xpose.msra.mxu0 0.0
    %392 = vmatprep.subr.mxu0 0.0
    %393 = vmatpush1.xpose.msra.mxu0 0.0
    %394 = vmatprep.subr.mxu0 0.0
    %395 = vmatpush1.xpose.msra.mxu0 0.0
    %396 = vmatprep.subr.mxu0 0.0
    %397 = vmatpush1.xpose.msra.mxu0 0.0
    %398 = vmatprep.mubr.f32.mxu0 0.0
    %399 = vmatmul.mubr.f32.gmra.mrb[0].mxu0 %v330
    %v400 = vpop.f32.mrb[0].mxu0
    %v401 = vadd.f32 %v41, %v400
    %v402 = vpop.f32.mrb[0].mxu0
    %403 = vdwg.mxu0
    %v404 = vsel %vm163, %v401, -inf
    %405 = vmax.xlane.f32.xlu0 %v404
    %v406 = vpop.xlane.xlu0 %405
    %v407 = vsub.f32 %v401, %v406
    %v408 = vmul.f32 %v407, 1.442695
    %v409 = vpow.pop %v408
    %v410 = vsel %vm163, %v409, 0.0
    %411 = vadd.xlane.f32.xlu0 %v410
    %v412 = vpop.xlane.xlu0 %411
    %v413 = vrcp.pop %v412
    %v414 = vmul.f32 %v409, %v413
    %415 = vrot.lane.b32.xlu0 %v154, 56
    %v416 = vpop.permute.xlu0 %415
    %v419 = vsel %vm163, %v414, 0
    %421 = vmatprep.subr.mxu0 0.0
    %422 = vmatpush1.msra.mxu0 %v416
    %423 = vmatprep.subr.mxu0 0.0
    %424 = vmatpush1.msra.mxu0 0.0
    %425 = vmatprep.subr.mxu0 0.0
    %426 = vmatpush1.msra.mxu0 0.0
    %427 = vmatprep.subr.mxu0 0.0
    %428 = vmatpush1.msra.mxu0 0.0
    %429 = vmatprep.subr.mxu0 0.0
    %430 = vmatpush1.msra.mxu0 0.0
    %431 = vmatprep.subr.mxu0 0.0
    %432 = vmatpush1.msra.mxu0 0.0
    %433 = vmatprep.subr.mxu0 0.0
    %434 = vmatpush1.msra.mxu0 0.0
    %435 = vmatprep.subr.mxu0 0.0
    %436 = vmatpush1.msra.mxu0 0.0
    %437 = vmatprep.subr.mxu0 0.0
    %438 = vmatpush1.msra.mxu0 0.0
    %439 = vmatprep.subr.mxu0 0.0
    %440 = vmatpush1.msra.mxu0 0.0
    %441 = vmatprep.subr.mxu0 0.0
    %442 = vmatpush1.msra.mxu0 0.0
    %443 = vmatprep.subr.mxu0 0.0
    %444 = vmatpush1.msra.mxu0 0.0
    %445 = vmatprep.subr.mxu0 0.0
    %446 = vmatpush1.msra.mxu0 0.0
    %447 = vmatprep.subr.mxu0 0.0
    %448 = vmatpush1.msra.mxu0 0.0
    %449 = vmatprep.subr.mxu0 0.0
    %450 = vmatpush1.msra.mxu0 0.0
    %451 = vmatprep.subr.mxu0 0.0
    %452 = vmatpush1.msra.mxu0 0.0
    %453 = vmatprep.subr.mxu0 0.0
    %454 = vmatpush1.msra.mxu0 0.0
    %455 = vmatprep.subr.mxu0 0.0
    %456 = vmatpush1.msra.mxu0 0.0
    %457 = vmatprep.subr.mxu0 0.0
    %458 = vmatpush1.msra.mxu0 0.0
    %459 = vmatprep.subr.mxu0 0.0
    %460 = vmatpush1.msra.mxu0 0.0
    %461 = vmatprep.subr.mxu0 0.0
    %462 = vmatpush1.msra.mxu0 0.0
    %463 = vmatprep.subr.mxu0 0.0
    %464 = vmatpush1.msra.mxu0 0.0
    %465 = vmatprep.subr.mxu0 0.0
    %466 = vmatpush1.msra.mxu0 0.0
    %467 = vmatprep.subr.mxu0 0.0
    %468 = vmatpush1.msra.mxu0 0.0
    %469 = vmatprep.subr.mxu0 0.0
    %470 = vmatpush1.msra.mxu0 0.0
    %471 = vmatprep.subr.mxu0 0.0
    %472 = vmatpush1.msra.mxu0 0.0
    %473 = vmatprep.subr.mxu0 0.0
    %474 = vmatpush1.msra.mxu0 0.0
    %475 = vmatprep.subr.mxu0 0.0
    %476 = vmatpush1.msra.mxu0 0.0
    %477 = vmatprep.subr.mxu0 0.0
    %478 = vmatpush1.msra.mxu0 0.0
    %479 = vmatprep.subr.mxu0 0.0
    %480 = vmatpush1.msra.mxu0 0.0
    %481 = vmatprep.subr.mxu0 0.0
    %482 = vmatpush1.msra.mxu0 0.0
    %483 = vmatprep.subr.mxu0 0.0
    %484 = vmatpush1.msra.mxu0 0.0
    %485 = vmatprep.mubr.f32.mxu0 0.0
    %486 = vmatmul.mubr.f32.gmra.mrb[0].mxu0 %v419
    %v487 = vpop.f32.mrb[0].mxu0
    %v488 = vadd.f32 0.0, %v487
    %v489 = vpop.f32.mrb[0].mxu0
    %490 = vdwg.mxu0
    %v491 = vpack.c.bf16 %v488, %v488
    %v493 = vsel %vm163, %v491, 0
    %vm495 = vcmask 1043456
    %v497 = vsel %vm495, %v96, 0
    %499 = vmatprep.subr.bf16.mxu0 0
    %500 = vmatpush1.bf16.msra.mxu0 %v497
    %501 = vmatprep.subr.bf16.mxu0 0
    %502 = vmatpush1.bf16.msra.mxu0 0
    %503 = vmatprep.subr.bf16.mxu0 0
    %504 = vmatpush1.bf16.msra.mxu0 0
    %505 = vmatprep.subr.bf16.mxu0 0
    %506 = vmatpush1.bf16.msra.mxu0 0
    %507 = vmatprep.subr.bf16.mxu0 0
    %508 = vmatpush1.bf16.msra.mxu0 0
    %509 = vmatprep.subr.bf16.mxu0 0
    %510 = vmatpush1.bf16.msra.mxu0 0
    %511 = vmatprep.subr.bf16.mxu0 0
    %512 = vmatpush1.bf16.msra.mxu0 0
    %513 = vmatprep.subr.bf16.mxu0 0
    %514 = vmatpush1.bf16.msra.mxu0 0
    %515 = vmatprep.subr.bf16.mxu0 0
    %516 = vmatpush1.bf16.msra.mxu0 0
    %517 = vmatprep.subr.bf16.mxu0 0
    %518 = vmatpush1.bf16.msra.mxu0 0
    %519 = vmatprep.subr.bf16.mxu0 0
    %520 = vmatpush1.bf16.msra.mxu0 0
    %521 = vmatprep.subr.bf16.mxu0 0
    %522 = vmatpush1.bf16.msra.mxu0 0
    %523 = vmatprep.subr.bf16.mxu0 0
    %524 = vmatpush1.bf16.msra.mxu0 0
    %525 = vmatprep.subr.bf16.mxu0 0
    %526 = vmatpush1.bf16.msra.mxu0 0
    %527 = vmatprep.subr.bf16.mxu0 0
    %528 = vmatpush1.bf16.msra.mxu0 0
    %529 = vmatprep.subr.bf16.mxu0 0
    %530 = vmatpush1.bf16.msra.mxu0 0
    %531 = vmatprep.mubr.bf16.mxu0 0
    %532 = vmatmul.mubr.bf16.gmra.mrb[0].mxu0 %v493
    %v533 = vpop.f32.mrb[0].mxu0
    %v534 = vadd.f32 0.0, %v533
    %v535 = vpop.f32.mrb[0].mxu0
    %v536 = vpop.f32.mrb[0].mxu0
    %v537 = vpop.f32.mrb[0].mxu0
    %538 = vdwg.mxu0
    %v540 = vsel %vm163, %v325, 0
    %v543 = vsel %vm495, %v95, 0
    %545 = vmatprep.subr.bf16.mxu0 0
    %546 = vmatpush1.bf16.msra.mxu0 %v543
    %547 = vmatprep.subr.bf16.mxu0 0
    %548 = vmatpush1.bf16.msra.mxu0 0
    %549 = vmatprep.subr.bf16.mxu0 0
    %550 = vmatpush1.bf16.msra.mxu0 0
    %551 = vmatprep.subr.bf16.mxu0 0
    %552 = vmatpush1.bf16.msra.mxu0 0
    %553 = vmatprep.subr.bf16.mxu0 0
    %554 = vmatpush1.bf16.msra.mxu0 0
    %555 = vmatprep.subr.bf16.mxu0 0
    %556 = vmatpush1.bf16.msra.mxu0 0
    %557 = vmatprep.subr.bf16.mxu0 0
    %558 = vmatpush1.bf16.msra.mxu0 0
    %559 = vmatprep.subr.bf16.mxu0 0
    %560 = vmatpush1.bf16.msra.mxu0 0
    %561 = vmatprep.subr.bf16.mxu0 0
    %562 = vmatpush1.bf16.msra.mxu0 0
    %563 = vmatprep.subr.bf16.mxu0 0
    %564 = vmatpush1.bf16.msra.mxu0 0
    %565 = vmatprep.subr.bf16.mxu0 0
    %566 = vmatpush1.bf16.msra.mxu0 0
    %567 = vmatprep.subr.bf16.mxu0 0
    %568 = vmatpush1.bf16.msra.mxu0 0
    %569 = vmatprep.subr.bf16.mxu0 0
    %570 = vmatpush1.bf16.msra.mxu0 0
    %571 = vmatprep.subr.bf16.mxu0 0
    %572 = vmatpush1.bf16.msra.mxu0 0
    %573 = vmatprep.subr.bf16.mxu0 0
    %574 = vmatpush1.bf16.msra.mxu0 0
    %575 = vmatprep.subr.bf16.mxu0 0
    %576 = vmatpush1.bf16.msra.mxu0 0
    %577 = vmatprep.mubr.bf16.mxu0 0
    %578 = vmatmul.mubr.bf16.gmra.mrb[0].mxu0 %v540
    %v579 = vpop.f32.mrb[0].mxu0
    %v580 = vadd.f32 %v534, %v579
    %v581 = vpop.f32.mrb[0].mxu0
    %v582 = vpop.f32.mrb[0].mxu0
    %v583 = vpop.f32.mrb[0].mxu0
    %584 = vdwg.mxu0
    %585 = vrot.lane.b32.xlu0 %v154, 112
    %v586 = vpop.permute.xlu0 %585
    %587 = vrot.lane.b32.xlu0 %v154, 80
    %v588 = vpop.permute.xlu0 %587
    %v589 = vsel %vm163, %v586, 0
    %v591 = vsel %vm163, %v588, 0
    %593 = vmatprep.subr.mxu0 0.0
    %594 = vmatpush1.xpose.msra.mxu0 %v591
    %595 = vmatprep.subr.mxu0 0.0
    %596 = vmatpush1.xpose.msra.mxu0 0.0
    %597 = vmatprep.subr.mxu0 0.0
    %598 = vmatpush1.xpose.msra.mxu0 0.0
    %599 = vmatprep.subr.mxu0 0.0
    %600 = vmatpush1.xpose.msra.mxu0 0.0
    %601 = vmatprep.subr.mxu0 0.0
    %602 = vmatpush1.xpose.msra.mxu0 0.0
    %603 = vmatprep.subr.mxu0 0.0
    %604 = vmatpush1.xpose.msra.mxu0 0.0
    %605 = vmatprep.subr.mxu0 0.0
    %606 = vmatpush1.xpose.msra.mxu0 0.0
    %607 = vmatprep.subr.mxu0 0.0
    %608 = vmatpush1.xpose.msra.mxu0 0.0
    %609 = vmatprep.subr.mxu0 0.0
    %610 = vmatpush1.xpose.msra.mxu0 0.0
    %611 = vmatprep.subr.mxu0 0.0
    %612 = vmatpush1.xpose.msra.mxu0 0.0
    %613 = vmatprep.subr.mxu0 0.0
    %614 = vmatpush1.xpose.msra.mxu0 0.0
    %615 = vmatprep.subr.mxu0 0.0
    %616 = vmatpush1.xpose.msra.mxu0 0.0
    %617 = vmatprep.subr.mxu0 0.0
    %618 = vmatpush1.xpose.msra.mxu0 0.0
    %619 = vmatprep.subr.mxu0 0.0
    %620 = vmatpush1.xpose.msra.mxu0 0.0
    %621 = vmatprep.subr.mxu0 0.0
    %622 = vmatpush1.xpose.msra.mxu0 0.0
    %623 = vmatprep.subr.mxu0 0.0
    %624 = vmatpush1.xpose.msra.mxu0 0.0
    %625 = vmatprep.subr.mxu0 0.0
    %626 = vmatpush1.xpose.msra.mxu0 0.0
    %627 = vmatprep.subr.mxu0 0.0
    %628 = vmatpush1.xpose.msra.mxu0 0.0
    %629 = vmatprep.subr.mxu0 0.0
    %630 = vmatpush1.xpose.msra.mxu0 0.0
    %631 = vmatprep.subr.mxu0 0.0
    %632 = vmatpush1.xpose.msra.mxu0 0.0
    %633 = vmatprep.subr.mxu0 0.0
    %634 = vmatpush1.xpose.msra.mxu0 0.0
    %635 = vmatprep.subr.mxu0 0.0
    %636 = vmatpush1.xpose.msra.mxu0 0.0
    %637 = vmatprep.subr.mxu0 0.0
    %638 = vmatpush1.xpose.msra.mxu0 0.0
    %639 = vmatprep.subr.mxu0 0.0
    %640 = vmatpush1.xpose.msra.mxu0 0.0
    %641 = vmatprep.subr.mxu0 0.0
    %642 = vmatpush1.xpose.msra.mxu0 0.0
    %643 = vmatprep.subr.mxu0 0.0
    %644 = vmatpush1.xpose.msra.mxu0 0.0
    %645 = vmatprep.subr.mxu0 0.0
    %646 = vmatpush1.xpose.msra.mxu0 0.0
    %647 = vmatprep.subr.mxu0 0.0
    %648 = vmatpush1.xpose.msra.mxu0 0.0
    %649 = vmatprep.subr.mxu0 0.0
    %650 = vmatpush1.xpose.msra.mxu0 0.0
    %651 = vmatprep.subr.mxu0 0.0
    %652 = vmatpush1.xpose.msra.mxu0 0.0
    %653 = vmatprep.subr.mxu0 0.0
    %654 = vmatpush1.xpose.msra.mxu0 0.0
    %655 = vmatprep.subr.mxu0 0.0
    %656 = vmatpush1.xpose.msra.mxu0 0.0
    %657 = vmatprep.mubr.f32.mxu0 0.0
    %658 = vmatmul.mubr.f32.gmra.mrb[0].mxu0 %v589
    %v659 = vpop.f32.mrb[0].mxu0
    %v660 = vadd.f32 %v41, %v659
    %v661 = vpop.f32.mrb[0].mxu0
    %662 = vdwg.mxu0
    %v663 = vsel %vm163, %v660, -inf
    %664 = vmax.xlane.f32.xlu0 %v663
    %v665 = vpop.xlane.xlu0 %664
    %v666 = vsub.f32 %v660, %v665
    %v667 = vmul.f32 %v666, 1.442695
    %v668 = vpow.pop %v667
    %v669 = vsel %vm163, %v668, 0.0
    %670 = vadd.xlane.f32.xlu0 %v669
    %v671 = vpop.xlane.xlu0 %670
    %v672 = vrcp.pop %v671
    %v673 = vmul.f32 %v668, %v672
    %674 = vrot.lane.b32.xlu0 %v154, 48
    %v675 = vpop.permute.xlu0 %674
    %v678 = vsel %vm163, %v673, 0
    %680 = vmatprep.subr.mxu0 0.0
    %681 = vmatpush1.msra.mxu0 %v675
    %682 = vmatprep.subr.mxu0 0.0
    %683 = vmatpush1.msra.mxu0 0.0
    %684 = vmatprep.subr.mxu0 0.0
    %685 = vmatpush1.msra.mxu0 0.0
    %686 = vmatprep.subr.mxu0 0.0
    %687 = vmatpush1.msra.mxu0 0.0
    %688 = vmatprep.subr.mxu0 0.0
    %689 = vmatpush1.msra.mxu0 0.0
    %690 = vmatprep.subr.mxu0 0.0
    %691 = vmatpush1.msra.mxu0 0.0
    %692 = vmatprep.subr.mxu0 0.0
    %693 = vmatpush1.msra.mxu0 0.0
    %694 = vmatprep.subr.mxu0 0.0
    %695 = vmatpush1.msra.mxu0 0.0
    %696 = vmatprep.subr.mxu0 0.0
    %697 = vmatpush1.msra.mxu0 0.0
    %698 = vmatprep.subr.mxu0 0.0
    %699 = vmatpush1.msra.mxu0 0.0
    %700 = vmatprep.subr.mxu0 0.0
    %701 = vmatpush1.msra.mxu0 0.0
    %702 = vmatprep.subr.mxu0 0.0
    %703 = vmatpush1.msra.mxu0 0.0
    %704 = vmatprep.subr.mxu0 0.0
    %705 = vmatpush1.msra.mxu0 0.0
    %706 = vmatprep.subr.mxu0 0.0
    %707 = vmatpush1.msra.mxu0 0.0
    %708 = vmatprep.subr.mxu0 0.0
    %709 = vmatpush1.msra.mxu0 0.0
    %710 = vmatprep.subr.mxu0 0.0
    %711 = vmatpush1.msra.mxu0 0.0
    %712 = vmatprep.subr.mxu0 0.0
    %713 = vmatpush1.msra.mxu0 0.0
    %714 = vmatprep.subr.mxu0 0.0
    %715 = vmatpush1.msra.mxu0 0.0
    %716 = vmatprep.subr.mxu0 0.0
    %717 = vmatpush1.msra.mxu0 0.0
    %718 = vmatprep.subr.mxu0 0.0
    %719 = vmatpush1.msra.mxu0 0.0
    %720 = vmatprep.subr.mxu0 0.0
    %721 = vmatpush1.msra.mxu0 0.0
    %722 = vmatprep.subr.mxu0 0.0
    %723 = vmatpush1.msra.mxu0 0.0
    %724 = vmatprep.subr.mxu0 0.0
    %725 = vmatpush1.msra.mxu0 0.0
    %726 = vmatprep.subr.mxu0 0.0
    %727 = vmatpush1.msra.mxu0 0.0
    %728 = vmatprep.subr.mxu0 0.0
    %729 = vmatpush1.msra.mxu0 0.0
    %730 = vmatprep.subr.mxu0 0.0
    %731 = vmatpush1.msra.mxu0 0.0
    %732 = vmatprep.subr.mxu0 0.0
    %733 = vmatpush1.msra.mxu0 0.0
    %734 = vmatprep.subr.mxu0 0.0
    %735 = vmatpush1.msra.mxu0 0.0
    %736 = vmatprep.subr.mxu0 0.0
    %737 = vmatpush1.msra.mxu0 0.0
    %738 = vmatprep.subr.mxu0 0.0
    %739 = vmatpush1.msra.mxu0 0.0
    %740 = vmatprep.subr.mxu0 0.0
    %741 = vmatpush1.msra.mxu0 0.0
    %742 = vmatprep.subr.mxu0 0.0
    %743 = vmatpush1.msra.mxu0 0.0
    %744 = vmatprep.mubr.f32.mxu0 0.0
    %745 = vmatmul.mubr.f32.gmra.mrb[0].mxu0 %v678
    %v746 = vpop.f32.mrb[0].mxu0
    %v747 = vadd.f32 0.0, %v746
    %v748 = vpop.f32.mrb[0].mxu0
    %749 = vdwg.mxu0
    %v750 = vpack.c.bf16 %v747, %v747
    %v752 = vsel %vm163, %v750, 0
    %v755 = vsel %vm495, %v97, 0
    %757 = vmatprep.subr.bf16.mxu0 0
    %758 = vmatpush1.bf16.msra.mxu0 %v755
    %759 = vmatprep.subr.bf16.mxu0 0
    %760 = vmatpush1.bf16.msra.mxu0 0
    %761 = vmatprep.subr.bf16.mxu0 0
    %762 = vmatpush1.bf16.msra.mxu0 0
    %763 = vmatprep.subr.bf16.mxu0 0
    %764 = vmatpush1.bf16.msra.mxu0 0
    %765 = vmatprep.subr.bf16.mxu0 0
    %766 = vmatpush1.bf16.msra.mxu0 0
    %767 = vmatprep.subr.bf16.mxu0 0
    %768 = vmatpush1.bf16.msra.mxu0 0
    %769 = vmatprep.subr.bf16.mxu0 0
    %770 = vmatpush1.bf16.msra.mxu0 0
    %771 = vmatprep.subr.bf16.mxu0 0
    %772 = vmatpush1.bf16.msra.mxu0 0
    %773 = vmatprep.subr.bf16.mxu0 0
    %774 = vmatpush1.bf16.msra.mxu0 0
    %775 = vmatprep.subr.bf16.mxu0 0
    %776 = vmatpush1.bf16.msra.mxu0 0
    %777 = vmatprep.subr.bf16.mxu0 0
    %778 = vmatpush1.bf16.msra.mxu0 0
    %779 = vmatprep.subr.bf16.mxu0 0
    %780 = vmatpush1.bf16.msra.mxu0 0
    %781 = vmatprep.subr.bf16.mxu0 0
    %782 = vmatpush1.bf16.msra.mxu0 0
    %783 = vmatprep.subr.bf16.mxu0 0
    %784 = vmatpush1.bf16.msra.mxu0 0
    %785 = vmatprep.subr.bf16.mxu0 0
    %786 = vmatpush1.bf16.msra.mxu0 0
    %787 = vmatprep.subr.bf16.mxu0 0
    %788 = vmatpush1.bf16.msra.mxu0 0
    %789 = vmatprep.mubr.bf16.mxu0 0
    %790 = vmatmul.mubr.bf16.gmra.mrb[0].mxu0 %v752
    %v791 = vpop.f32.mrb[0].mxu0
    %v792 = vadd.f32 0.0, %v791
    %v793 = vpop.f32.mrb[0].mxu0
    %v794 = vpop.f32.mrb[0].mxu0
    %v795 = vpop.f32.mrb[0].mxu0
    %796 = vdwg.mxu0
    %v797 = vadd.f32 %v580, %v792
    %798 = vrot.lane.b32.xlu0 %v154, 104
    %v799 = vpop.permute.xlu0 %798
    %800 = vrot.lane.b32.xlu0 %v154, 72
    %v801 = vpop.permute.xlu0 %800
    %v802 = vsel %vm163, %v799, 0
    %v804 = vsel %vm163, %v801, 0
    %806 = vmatprep.subr.mxu0 0.0
    %807 = vmatpush1.xpose.msra.mxu0 %v804
    %808 = vmatprep.subr.mxu0 0.0
    %809 = vmatpush1.xpose.msra.mxu0 0.0
    %810 = vmatprep.subr.mxu0 0.0
    %811 = vmatpush1.xpose.msra.mxu0 0.0
    %812 = vmatprep.subr.mxu0 0.0
    %813 = vmatpush1.xpose.msra.mxu0 0.0
    %814 = vmatprep.subr.mxu0 0.0
    %815 = vmatpush1.xpose.msra.mxu0 0.0
    %816 = vmatprep.subr.mxu0 0.0
    %817 = vmatpush1.xpose.msra.mxu0 0.0
    %818 = vmatprep.subr.mxu0 0.0
    %819 = vmatpush1.xpose.msra.mxu0 0.0
    %820 = vmatprep.subr.mxu0 0.0
    %821 = vmatpush1.xpose.msra.mxu0 0.0
    %822 = vmatprep.subr.mxu0 0.0
    %823 = vmatpush1.xpose.msra.mxu0 0.0
    %824 = vmatprep.subr.mxu0 0.0
    %825 = vmatpush1.xpose.msra.mxu0 0.0
    %826 = vmatprep.subr.mxu0 0.0
    %827 = vmatpush1.xpose.msra.mxu0 0.0
    %828 = vmatprep.subr.mxu0 0.0
    %829 = vmatpush1.xpose.msra.mxu0 0.0
    %830 = vmatprep.subr.mxu0 0.0
    %831 = vmatpush1.xpose.msra.mxu0 0.0
    %832 = vmatprep.subr.mxu0 0.0
    %833 = vmatpush1.xpose.msra.mxu0 0.0
    %834 = vmatprep.subr.mxu0 0.0
    %835 = vmatpush1.xpose.msra.mxu0 0.0
    %836 = vmatprep.subr.mxu0 0.0
    %837 = vmatpush1.xpose.msra.mxu0 0.0
    %838 = vmatprep.subr.mxu0 0.0
    %839 = vmatpush1.xpose.msra.mxu0 0.0
    %840 = vmatprep.subr.mxu0 0.0
    %841 = vmatpush1.xpose.msra.mxu0 0.0
    %842 = vmatprep.subr.mxu0 0.0
    %843 = vmatpush1.xpose.msra.mxu0 0.0
    %844 = vmatprep.subr.mxu0 0.0
    %845 = vmatpush1.xpose.msra.mxu0 0.0
    %846 = vmatprep.subr.mxu0 0.0
    %847 = vmatpush1.xpose.msra.mxu0 0.0
    %848 = vmatprep.subr.mxu0 0.0
    %849 = vmatpush1.xpose.msra.mxu0 0.0
    %850 = vmatprep.subr.mxu0 0.0
    %851 = vmatpush1.xpose.msra.mxu0 0.0
    %852 = vmatprep.subr.mxu0 0.0
    %853 = vmatpush1.xpose.msra.mxu0 0.0
    %854 = vmatprep.subr.mxu0 0.0
    %855 = vmatpush1.xpose.msra.mxu0 0.0
    %856 = vmatprep.subr.mxu0 0.0
    %857 = vmatpush1.xpose.msra.mxu0 0.0
    %858 = vmatprep.subr.mxu0 0.0
    %859 = vmatpush1.xpose.msra.mxu0 0.0
    %860 = vmatprep.subr.mxu0 0.0
    %861 = vmatpush1.xpose.msra.mxu0 0.0
    %862 = vmatprep.subr.mxu0 0.0
    %863 = vmatpush1.xpose.msra.mxu0 0.0
    %864 = vmatprep.subr.mxu0 0.0
    %865 = vmatpush1.xpose.msra.mxu0 0.0
    %866 = vmatprep.subr.mxu0 0.0
    %867 = vmatpush1.xpose.msra.mxu0 0.0
    %868 = vmatprep.subr.mxu0 0.0
    %869 = vmatpush1.xpose.msra.mxu0 0.0
    %870 = vmatprep.mubr.f32.mxu0 0.0
    %871 = vmatmul.mubr.f32.gmra.mrb[0].mxu0 %v802
    %v872 = vpop.f32.mrb[0].mxu0
    %v873 = vadd.f32 %v41, %v872
    %v874 = vpop.f32.mrb[0].mxu0
    %875 = vdwg.mxu0
    %v876 = vsel %vm163, %v873, -inf
    %877 = vmax.xlane.f32.xlu0 %v876
    %v878 = vpop.xlane.xlu0 %877
    %v879 = vsub.f32 %v873, %v878
    %v880 = vmul.f32 %v879, 1.442695
    %v881 = vpow.pop %v880
    %v882 = vsel %vm163, %v881, 0.0
    %883 = vadd.xlane.f32.xlu0 %v882
    %v884 = vpop.xlane.xlu0 %883
    %v885 = vrcp.pop %v884
    %v886 = vmul.f32 %v881, %v885
    %887 = vrot.lane.b32.xlu0 %v154, 40
    %v888 = vpop.permute.xlu0 %887
    %v891 = vsel %vm163, %v886, 0
    %893 = vmatprep.subr.mxu0 0.0
    %894 = vmatpush1.msra.mxu0 %v888
    %895 = vmatprep.subr.mxu0 0.0
    %896 = vmatpush1.msra.mxu0 0.0
    %897 = vmatprep.subr.mxu0 0.0
    %898 = vmatpush1.msra.mxu0 0.0
    %899 = vmatprep.subr.mxu0 0.0
    %900 = vmatpush1.msra.mxu0 0.0
    %901 = vmatprep.subr.mxu0 0.0
    %902 = vmatpush1.msra.mxu0 0.0
    %903 = vmatprep.subr.mxu0 0.0
    %904 = vmatpush1.msra.mxu0 0.0
    %905 = vmatprep.subr.mxu0 0.0
    %906 = vmatpush1.msra.mxu0 0.0
    %907 = vmatprep.subr.mxu0 0.0
    %908 = vmatpush1.msra.mxu0 0.0
    %909 = vmatprep.subr.mxu0 0.0
    %910 = vmatpush1.msra.mxu0 0.0
    %911 = vmatprep.subr.mxu0 0.0
    %912 = vmatpush1.msra.mxu0 0.0
    %913 = vmatprep.subr.mxu0 0.0
    %914 = vmatpush1.msra.mxu0 0.0
    %915 = vmatprep.subr.mxu0 0.0
    %916 = vmatpush1.msra.mxu0 0.0
    %917 = vmatprep.subr.mxu0 0.0
    %918 = vmatpush1.msra.mxu0 0.0
    %919 = vmatprep.subr.mxu0 0.0
    %920 = vmatpush1.msra.mxu0 0.0
    %921 = vmatprep.subr.mxu0 0.0
    %922 = vmatpush1.msra.mxu0 0.0
    %923 = vmatprep.subr.mxu0 0.0
    %924 = vmatpush1.msra.mxu0 0.0
    %925 = vmatprep.subr.mxu0 0.0
    %926 = vmatpush1.msra.mxu0 0.0
    %927 = vmatprep.subr.mxu0 0.0
    %928 = vmatpush1.msra.mxu0 0.0
    %929 = vmatprep.subr.mxu0 0.0
    %930 = vmatpush1.msra.mxu0 0.0
    %931 = vmatprep.subr.mxu0 0.0
    %932 = vmatpush1.msra.mxu0 0.0
    %933 = vmatprep.subr.mxu0 0.0
    %934 = vmatpush1.msra.mxu0 0.0
    %935 = vmatprep.subr.mxu0 0.0
    %936 = vmatpush1.msra.mxu0 0.0
    %937 = vmatprep.subr.mxu0 0.0
    %938 = vmatpush1.msra.mxu0 0.0
    %939 = vmatprep.subr.mxu0 0.0
    %940 = vmatpush1.msra.mxu0 0.0
    %941 = vmatprep.subr.mxu0 0.0
    %942 = vmatpush1.msra.mxu0 0.0
    %943 = vmatprep.subr.mxu0 0.0
    %944 = vmatpush1.msra.mxu0 0.0
    %945 = vmatprep.subr.mxu0 0.0
    %946 = vmatpush1.msra.mxu0 0.0
    %947 = vmatprep.subr.mxu0 0.0
    %948 = vmatpush1.msra.mxu0 0.0
    %949 = vmatprep.subr.mxu0 0.0
    %950 = vmatpush1.msra.mxu0 0.0
    %951 = vmatprep.subr.mxu0 0.0
    %952 = vmatpush1.msra.mxu0 0.0
    %953 = vmatprep.subr.mxu0 0.0
    %954 = vmatpush1.msra.mxu0 0.0
    %955 = vmatprep.subr.mxu0 0.0
    %956 = vmatpush1.msra.mxu0 0.0
    %957 = vmatprep.mubr.f32.mxu0 0.0
    %958 = vmatmul.mubr.f32.gmra.mrb[0].mxu0 %v891
    %v959 = vpop.f32.mrb[0].mxu0
    %v960 = vadd.f32 0.0, %v959
    %v961 = vpop.f32.mrb[0].mxu0
    %962 = vdwg.mxu0
    %v963 = vpack.c.bf16 %v960, %v960
    %v965 = vsel %vm163, %v963, 0
    %v968 = vsel %vm495, %v98, 0
    %970 = vmatprep.subr.bf16.mxu0 0
    %971 = vmatpush1.bf16.msra.mxu0 %v968
    %972 = vmatprep.subr.bf16.mxu0 0
    %973 = vmatpush1.bf16.msra.mxu0 0
    %974 = vmatprep.subr.bf16.mxu0 0
    %975 = vmatpush1.bf16.msra.mxu0 0
    %976 = vmatprep.subr.bf16.mxu0 0
    %977 = vmatpush1.bf16.msra.mxu0 0
    %978 = vmatprep.subr.bf16.mxu0 0
    %979 = vmatpush1.bf16.msra.mxu0 0
    %980 = vmatprep.subr.bf16.mxu0 0
    %981 = vmatpush1.bf16.msra.mxu0 0
    %982 = vmatprep.subr.bf16.mxu0 0
    %983 = vmatpush1.bf16.msra.mxu0 0
    %984 = vmatprep.subr.bf16.mxu0 0
    %985 = vmatpush1.bf16.msra.mxu0 0
    %986 = vmatprep.subr.bf16.mxu0 0
    %987 = vmatpush1.bf16.msra.mxu0 0
    %988 = vmatprep.subr.bf16.mxu0 0
    %989 = vmatpush1.bf16.msra.mxu0 0
    %990 = vmatprep.subr.bf16.mxu0 0
    %991 = vmatpush1.bf16.msra.mxu0 0
    %992 = vmatprep.subr.bf16.mxu0 0
    %993 = vmatpush1.bf16.msra.mxu0 0
    %994 = vmatprep.subr.bf16.mxu0 0
    %995 = vmatpush1.bf16.msra.mxu0 0
    %996 = vmatprep.subr.bf16.mxu0 0
    %997 = vmatpush1.bf16.msra.mxu0 0
    %998 = vmatprep.subr.bf16.mxu0 0
    %999 = vmatpush1.bf16.msra.mxu0 0
    %1000 = vmatprep.subr.bf16.mxu0 0
    %1001 = vmatpush1.bf16.msra.mxu0 0
    %1002 = vmatprep.mubr.bf16.mxu0 0
    %1003 = vmatmul.mubr.bf16.gmra.mrb[0].mxu0 %v965
    %v1004 = vpop.f32.mrb[0].mxu0
    %v1005 = vadd.f32 0.0, %v1004
    %v1006 = vpop.f32.mrb[0].mxu0
    %v1007 = vpop.f32.mrb[0].mxu0
    %v1008 = vpop.f32.mrb[0].mxu0
    %1009 = vdwg.mxu0
    %v1010 = vadd.f32 %v797, %v1005
    %1012 = vrot.lane.b32.xlu0 %v157, 96
    %v1013 = vpop.permute.xlu0 %1012
    %v1014 = vsel %vm163, %v157, 0
    %v1016 = vsel %vm163, %v1013, 0
    %1018 = vmatprep.subr.mxu0 0.0
    %1019 = vmatpush1.xpose.msra.mxu0 %v1016
    %1020 = vmatprep.subr.mxu0 0.0
    %1021 = vmatpush1.xpose.msra.mxu0 0.0
    %1022 = vmatprep.subr.mxu0 0.0
    %1023 = vmatpush1.xpose.msra.mxu0 0.0
    %1024 = vmatprep.subr.mxu0 0.0
    %1025 = vmatpush1.xpose.msra.mxu0 0.0
    %1026 = vmatprep.subr.mxu0 0.0
    %1027 = vmatpush1.xpose.msra.mxu0 0.0
    %1028 = vmatprep.subr.mxu0 0.0
    %1029 = vmatpush1.xpose.msra.mxu0 0.0
    %1030 = vmatprep.subr.mxu0 0.0
    %1031 = vmatpush1.xpose.msra.mxu0 0.0
    %1032 = vmatprep.subr.mxu0 0.0
    %1033 = vmatpush1.xpose.msra.mxu0 0.0
    %1034 = vmatprep.subr.mxu0 0.0
    %1035 = vmatpush1.xpose.msra.mxu0 0.0
    %1036 = vmatprep.subr.mxu0 0.0
    %1037 = vmatpush1.xpose.msra.mxu0 0.0
    %1038 = vmatprep.subr.mxu0 0.0
    %1039 = vmatpush1.xpose.msra.mxu0 0.0
    %1040 = vmatprep.subr.mxu0 0.0
    %1041 = vmatpush1.xpose.msra.mxu0 0.0
    %1042 = vmatprep.subr.mxu0 0.0
    %1043 = vmatpush1.xpose.msra.mxu0 0.0
    %1044 = vmatprep.subr.mxu0 0.0
    %1045 = vmatpush1.xpose.msra.mxu0 0.0
    %1046 = vmatprep.subr.mxu0 0.0
    %1047 = vmatpush1.xpose.msra.mxu0 0.0
    %1048 = vmatprep.subr.mxu0 0.0
    %1049 = vmatpush1.xpose.msra.mxu0 0.0
    %1050 = vmatprep.subr.mxu0 0.0
    %1051 = vmatpush1.xpose.msra.mxu0 0.0
    %1052 = vmatprep.subr.mxu0 0.0
    %1053 = vmatpush1.xpose.msra.mxu0 0.0
    %1054 = vmatprep.subr.mxu0 0.0
    %1055 = vmatpush1.xpose.msra.mxu0 0.0
    %1056 = vmatprep.subr.mxu0 0.0
    %1057 = vmatpush1.xpose.msra.mxu0 0.0
    %1058 = vmatprep.subr.mxu0 0.0
    %1059 = vmatpush1.xpose.msra.mxu0 0.0
    %1060 = vmatprep.subr.mxu0 0.0
    %1061 = vmatpush1.xpose.msra.mxu0 0.0
    %1062 = vmatprep.subr.mxu0 0.0
    %1063 = vmatpush1.xpose.msra.mxu0 0.0
    %1064 = vmatprep.subr.mxu0 0.0
    %1065 = vmatpush1.xpose.msra.mxu0 0.0
    %1066 = vmatprep.subr.mxu0 0.0
    %1067 = vmatpush1.xpose.msra.mxu0 0.0
    %1068 = vmatprep.subr.mxu0 0.0
    %1069 = vmatpush1.xpose.msra.mxu0 0.0
    %1070 = vmatprep.subr.mxu0 0.0
    %1071 = vmatpush1.xpose.msra.mxu0 0.0
    %1072 = vmatprep.subr.mxu0 0.0
    %1073 = vmatpush1.xpose.msra.mxu0 0.0
    %1074 = vmatprep.subr.mxu0 0.0
    %1075 = vmatpush1.xpose.msra.mxu0 0.0
    %1076 = vmatprep.subr.mxu0 0.0
    %1077 = vmatpush1.xpose.msra.mxu0 0.0
    %1078 = vmatprep.subr.mxu0 0.0
    %1079 = vmatpush1.xpose.msra.mxu0 0.0
    %1080 = vmatprep.subr.mxu0 0.0
    %1081 = vmatpush1.xpose.msra.mxu0 0.0
    %1082 = vmatprep.mubr.f32.mxu0 0.0
    %1083 = vmatmul.mubr.f32.gmra.mrb[0].mxu0 %v1014
    %v1084 = vpop.f32.mrb[0].mxu0
    %v1085 = vadd.f32 %v46, %v1084
    %v1086 = vpop.f32.mrb[0].mxu0
    %1087 = vdwg.mxu0
    %v1088 = vsel %vm163, %v1085, -inf
    %1089 = vmax.xlane.f32.xlu0 %v1088
    %v1090 = vpop.xlane.xlu0 %1089
    %v1091 = vsub.f32 %v1085, %v1090
    %v1092 = vmul.f32 %v1091, 1.442695
    %v1093 = vpow.pop %v1092
    %v1094 = vsel %vm163, %v1093, 0.0
    %1095 = vadd.xlane.f32.xlu0 %v1094
    %v1096 = vpop.xlane.xlu0 %1095
    %v1097 = vrcp.pop %v1096
    %v1098 = vmul.f32 %v1093, %v1097
    %1099 = vrot.lane.b32.xlu0 %v157, 64
    %v1100 = vpop.permute.xlu0 %1099
    %v1103 = vsel %vm163, %v1098, 0
    %1105 = vmatprep.subr.mxu0 0.0
    %1106 = vmatpush1.msra.mxu0 %v1100
    %1107 = vmatprep.subr.mxu0 0.0
    %1108 = vmatpush1.msra.mxu0 0.0
    %1109 = vmatprep.subr.mxu0 0.0
    %1110 = vmatpush1.msra.mxu0 0.0
    %1111 = vmatprep.subr.mxu0 0.0
    %1112 = vmatpush1.msra.mxu0 0.0
    %1113 = vmatprep.subr.mxu0 0.0
    %1114 = vmatpush1.msra.mxu0 0.0
    %1115 = vmatprep.subr.mxu0 0.0
    %1116 = vmatpush1.msra.mxu0 0.0
    %1117 = vmatprep.subr.mxu0 0.0
    %1118 = vmatpush1.msra.mxu0 0.0
    %1119 = vmatprep.subr.mxu0 0.0
    %1120 = vmatpush1.msra.mxu0 0.0
    %1121 = vmatprep.subr.mxu0 0.0
    %1122 = vmatpush1.msra.mxu0 0.0
    %1123 = vmatprep.subr.mxu0 0.0
    %1124 = vmatpush1.msra.mxu0 0.0
    %1125 = vmatprep.subr.mxu0 0.0
    %1126 = vmatpush1.msra.mxu0 0.0
    %1127 = vmatprep.subr.mxu0 0.0
    %1128 = vmatpush1.msra.mxu0 0.0
    %1129 = vmatprep.subr.mxu0 0.0
    %1130 = vmatpush1.msra.mxu0 0.0
    %1131 = vmatprep.subr.mxu0 0.0
    %1132 = vmatpush1.msra.mxu0 0.0
    %1133 = vmatprep.subr.mxu0 0.0
    %1134 = vmatpush1.msra.mxu0 0.0
    %1135 = vmatprep.subr.mxu0 0.0
    %1136 = vmatpush1.msra.mxu0 0.0
    %1137 = vmatprep.subr.mxu0 0.0
    %1138 = vmatpush1.msra.mxu0 0.0
    %1139 = vmatprep.subr.mxu0 0.0
    %1140 = vmatpush1.msra.mxu0 0.0
    %1141 = vmatprep.subr.mxu0 0.0
    %1142 = vmatpush1.msra.mxu0 0.0
    %1143 = vmatprep.subr.mxu0 0.0
    %1144 = vmatpush1.msra.mxu0 0.0
    %1145 = vmatprep.subr.mxu0 0.0
    %1146 = vmatpush1.msra.mxu0 0.0
    %1147 = vmatprep.subr.mxu0 0.0
    %1148 = vmatpush1.msra.mxu0 0.0
    %1149 = vmatprep.subr.mxu0 0.0
    %1150 = vmatpush1.msra.mxu0 0.0
    %1151 = vmatprep.subr.mxu0 0.0
    %1152 = vmatpush1.msra.mxu0 0.0
    %1153 = vmatprep.subr.mxu0 0.0
    %1154 = vmatpush1.msra.mxu0 0.0
    %1155 = vmatprep.subr.mxu0 0.0
    %1156 = vmatpush1.msra.mxu0 0.0
    %1157 = vmatprep.subr.mxu0 0.0
    %1158 = vmatpush1.msra.mxu0 0.0
    %1159 = vmatprep.subr.mxu0 0.0
    %1160 = vmatpush1.msra.mxu0 0.0
    %1161 = vmatprep.subr.mxu0 0.0
    %1162 = vmatpush1.msra.mxu0 0.0
    %1163 = vmatprep.subr.mxu0 0.0
    %1164 = vmatpush1.msra.mxu0 0.0
    %1165 = vmatprep.subr.mxu0 0.0
    %1166 = vmatpush1.msra.mxu0 0.0
    %1167 = vmatprep.subr.mxu0 0.0
    %1168 = vmatpush1.msra.mxu0 0.0
    %1169 = vmatprep.mubr.f32.mxu0 0.0
    %1170 = vmatmul.mubr.f32.gmra.mrb[0].mxu0 %v1103
    %v1171 = vpop.f32.mrb[0].mxu0
    %v1172 = vadd.f32 0.0, %v1171
    %v1173 = vpop.f32.mrb[0].mxu0
    %1174 = vdwg.mxu0
    %v1175 = vpack.c.bf16 %v1172, %v1172
    %1176 = vrot.lane.b32.xlu0 %v157, 120
    %v1177 = vpop.permute.xlu0 %1176
    %1178 = vrot.lane.b32.xlu0 %v157, 88
    %v1179 = vpop.permute.xlu0 %1178
    %v1180 = vsel %vm163, %v1177, 0
    %v1182 = vsel %vm163, %v1179, 0
    %1184 = vmatprep.subr.mxu0 0.0
    %1185 = vmatpush1.xpose.msra.mxu0 %v1182
    %1186 = vmatprep.subr.mxu0 0.0
    %1187 = vmatpush1.xpose.msra.mxu0 0.0
    %1188 = vmatprep.subr.mxu0 0.0
    %1189 = vmatpush1.xpose.msra.mxu0 0.0
    %1190 = vmatprep.subr.mxu0 0.0
    %1191 = vmatpush1.xpose.msra.mxu0 0.0
    %1192 = vmatprep.subr.mxu0 0.0
    %1193 = vmatpush1.xpose.msra.mxu0 0.0
    %1194 = vmatprep.subr.mxu0 0.0
    %1195 = vmatpush1.xpose.msra.mxu0 0.0
    %1196 = vmatprep.subr.mxu0 0.0
    %1197 = vmatpush1.xpose.msra.mxu0 0.0
    %1198 = vmatprep.subr.mxu0 0.0
    %1199 = vmatpush1.xpose.msra.mxu0 0.0
    %1200 = vmatprep.subr.mxu0 0.0
    %1201 = vmatpush1.xpose.msra.mxu0 0.0
    %1202 = vmatprep.subr.mxu0 0.0
    %1203 = vmatpush1.xpose.msra.mxu0 0.0
    %1204 = vmatprep.subr.mxu0 0.0
    %1205 = vmatpush1.xpose.msra.mxu0 0.0
    %1206 = vmatprep.subr.mxu0 0.0
    %1207 = vmatpush1.xpose.msra.mxu0 0.0
    %1208 = vmatprep.subr.mxu0 0.0
    %1209 = vmatpush1.xpose.msra.mxu0 0.0
    %1210 = vmatprep.subr.mxu0 0.0
    %1211 = vmatpush1.xpose.msra.mxu0 0.0
    %1212 = vmatprep.subr.mxu0 0.0
    %1213 = vmatpush1.xpose.msra.mxu0 0.0
    %1214 = vmatprep.subr.mxu0 0.0
    %1215 = vmatpush1.xpose.msra.mxu0 0.0
    %1216 = vmatprep.subr.mxu0 0.0
    %1217 = vmatpush1.xpose.msra.mxu0 0.0
    %1218 = vmatprep.subr.mxu0 0.0
    %1219 = vmatpush1.xpose.msra.mxu0 0.0
    %1220 = vmatprep.subr.mxu0 0.0
    %1221 = vmatpush1.xpose.msra.mxu0 0.0
    %1222 = vmatprep.subr.mxu0 0.0
    %1223 = vmatpush1.xpose.msra.mxu0 0.0
    %1224 = vmatprep.subr.mxu0 0.0
    %1225 = vmatpush1.xpose.msra.mxu0 0.0
    %1226 = vmatprep.subr.mxu0 0.0
    %1227 = vmatpush1.xpose.msra.mxu0 0.0
    %1228 = vmatprep.subr.mxu0 0.0
    %1229 = vmatpush1.xpose.msra.mxu0 0.0
    %1230 = vmatprep.subr.mxu0 0.0
    %1231 = vmatpush1.xpose.msra.mxu0 0.0
    %1232 = vmatprep.subr.mxu0 0.0
    %1233 = vmatpush1.xpose.msra.mxu0 0.0
    %1234 = vmatprep.subr.mxu0 0.0
    %1235 = vmatpush1.xpose.msra.mxu0 0.0
    %1236 = vmatprep.subr.mxu0 0.0
    %1237 = vmatpush1.xpose.msra.mxu0 0.0
    %1238 = vmatprep.subr.mxu0 0.0
    %1239 = vmatpush1.xpose.msra.mxu0 0.0
    %1240 = vmatprep.subr.mxu0 0.0
    %1241 = vmatpush1.xpose.msra.mxu0 0.0
    %1242 = vmatprep.subr.mxu0 0.0
    %1243 = vmatpush1.xpose.msra.mxu0 0.0
    %1244 = vmatprep.subr.mxu0 0.0
    %1245 = vmatpush1.xpose.msra.mxu0 0.0
    %1246 = vmatprep.subr.mxu0 0.0
    %1247 = vmatpush1.xpose.msra.mxu0 0.0
    %1248 = vmatprep.mubr.f32.mxu0 0.0
    %1249 = vmatmul.mubr.f32.gmra.mrb[0].mxu0 %v1180
    %v1250 = vpop.f32.mrb[0].mxu0
    %v1251 = vadd.f32 %v46, %v1250
    %v1252 = vpop.f32.mrb[0].mxu0
    %1253 = vdwg.mxu0
    %v1254 = vsel %vm163, %v1251, -inf
    %1255 = vmax.xlane.f32.xlu0 %v1254
    %v1256 = vpop.xlane.xlu0 %1255
    %v1257 = vsub.f32 %v1251, %v1256
    %v1258 = vmul.f32 %v1257, 1.442695
    %v1259 = vpow.pop %v1258
    %v1260 = vsel %vm163, %v1259, 0.0
    %1261 = vadd.xlane.f32.xlu0 %v1260
    %v1262 = vpop.xlane.xlu0 %1261
    %v1263 = vrcp.pop %v1262
    %v1264 = vmul.f32 %v1259, %v1263
    %1265 = vrot.lane.b32.xlu0 %v157, 56
    %v1266 = vpop.permute.xlu0 %1265
    %v1269 = vsel %vm163, %v1264, 0
    %1271 = vmatprep.subr.mxu0 0.0
    %1272 = vmatpush1.msra.mxu0 %v1266
    %1273 = vmatprep.subr.mxu0 0.0
    %1274 = vmatpush1.msra.mxu0 0.0
    %1275 = vmatprep.subr.mxu0 0.0
    %1276 = vmatpush1.msra.mxu0 0.0
    %1277 = vmatprep.subr.mxu0 0.0
    %1278 = vmatpush1.msra.mxu0 0.0
    %1279 = vmatprep.subr.mxu0 0.0
    %1280 = vmatpush1.msra.mxu0 0.0
    %1281 = vmatprep.subr.mxu0 0.0
    %1282 = vmatpush1.msra.mxu0 0.0
    %1283 = vmatprep.subr.mxu0 0.0
    %1284 = vmatpush1.msra.mxu0 0.0
    %1285 = vmatprep.subr.mxu0 0.0
    %1286 = vmatpush1.msra.mxu0 0.0
    %1287 = vmatprep.subr.mxu0 0.0
    %1288 = vmatpush1.msra.mxu0 0.0
    %1289 = vmatprep.subr.mxu0 0.0
    %1290 = vmatpush1.msra.mxu0 0.0
    %1291 = vmatprep.subr.mxu0 0.0
    %1292 = vmatpush1.msra.mxu0 0.0
    %1293 = vmatprep.subr.mxu0 0.0
    %1294 = vmatpush1.msra.mxu0 0.0
    %1295 = vmatprep.subr.mxu0 0.0
    %1296 = vmatpush1.msra.mxu0 0.0
    %1297 = vmatprep.subr.mxu0 0.0
    %1298 = vmatpush1.msra.mxu0 0.0
    %1299 = vmatprep.subr.mxu0 0.0
    %1300 = vmatpush1.msra.mxu0 0.0
    %1301 = vmatprep.subr.mxu0 0.0
    %1302 = vmatpush1.msra.mxu0 0.0
    %1303 = vmatprep.subr.mxu0 0.0
    %1304 = vmatpush1.msra.mxu0 0.0
    %1305 = vmatprep.subr.mxu0 0.0
    %1306 = vmatpush1.msra.mxu0 0.0
    %1307 = vmatprep.subr.mxu0 0.0
    %1308 = vmatpush1.msra.mxu0 0.0
    %1309 = vmatprep.subr.mxu0 0.0
    %1310 = vmatpush1.msra.mxu0 0.0
    %1311 = vmatprep.subr.mxu0 0.0
    %1312 = vmatpush1.msra.mxu0 0.0
    %1313 = vmatprep.subr.mxu0 0.0
    %1314 = vmatpush1.msra.mxu0 0.0
    %1315 = vmatprep.subr.mxu0 0.0
    %1316 = vmatpush1.msra.mxu0 0.0
    %1317 = vmatprep.subr.mxu0 0.0
    %1318 = vmatpush1.msra.mxu0 0.0
    %1319 = vmatprep.subr.mxu0 0.0
    %1320 = vmatpush1.msra.mxu0 0.0
    %1321 = vmatprep.subr.mxu0 0.0
    %1322 = vmatpush1.msra.mxu0 0.0
    %1323 = vmatprep.subr.mxu0 0.0
    %1324 = vmatpush1.msra.mxu0 0.0
    %1325 = vmatprep.subr.mxu0 0.0
    %1326 = vmatpush1.msra.mxu0 0.0
    %1327 = vmatprep.subr.mxu0 0.0
    %1328 = vmatpush1.msra.mxu0 0.0
    %1329 = vmatprep.subr.mxu0 0.0
    %1330 = vmatpush1.msra.mxu0 0.0
    %1331 = vmatprep.subr.mxu0 0.0
    %1332 = vmatpush1.msra.mxu0 0.0
    %1333 = vmatprep.subr.mxu0 0.0
    %1334 = vmatpush1.msra.mxu0 0.0
    %1335 = vmatprep.mubr.f32.mxu0 0.0
    %1336 = vmatmul.mubr.f32.gmra.mrb[0].mxu0 %v1269
    %v1337 = vpop.f32.mrb[0].mxu0
    %v1338 = vadd.f32 0.0, %v1337
    %v1339 = vpop.f32.mrb[0].mxu0
    %1340 = vdwg.mxu0
    %v1341 = vpack.c.bf16 %v1338, %v1338
    %v1343 = vsel %vm163, %v1341, 0
    %1345 = vmatprep.subr.bf16.mxu0 0
    %1346 = vmatpush1.bf16.msra.mxu0 %v497
    %1347 = vmatprep.subr.bf16.mxu0 0
    %1348 = vmatpush1.bf16.msra.mxu0 0
    %1349 = vmatprep.subr.bf16.mxu0 0
    %1350 = vmatpush1.bf16.msra.mxu0 0
    %1351 = vmatprep.subr.bf16.mxu0 0
    %1352 = vmatpush1.bf16.msra.mxu0 0
    %1353 = vmatprep.subr.bf16.mxu0 0
    %1354 = vmatpush1.bf16.msra.mxu0 0
    %1355 = vmatprep.subr.bf16.mxu0 0
    %1356 = vmatpush1.bf16.msra.mxu0 0
    %1357 = vmatprep.subr.bf16.mxu0 0
    %1358 = vmatpush1.bf16.msra.mxu0 0
    %1359 = vmatprep.subr.bf16.mxu0 0
    %1360 = vmatpush1.bf16.msra.mxu0 0
    %1361 = vmatprep.subr.bf16.mxu0 0
    %1362 = vmatpush1.bf16.msra.mxu0 0
    %1363 = vmatprep.subr.bf16.mxu0 0
    %1364 = vmatpush1.bf16.msra.mxu0 0
    %1365 = vmatprep.subr.bf16.mxu0 0
    %1366 = vmatpush1.bf16.msra.mxu0 0
    %1367 = vmatprep.subr.bf16.mxu0 0
    %1368 = vmatpush1.bf16.msra.mxu0 0
    %1369 = vmatprep.subr.bf16.mxu0 0
    %1370 = vmatpush1.bf16.msra.mxu0 0
    %1371 = vmatprep.subr.bf16.mxu0 0
    %1372 = vmatpush1.bf16.msra.mxu0 0
    %1373 = vmatprep.subr.bf16.mxu0 0
    %1374 = vmatpush1.bf16.msra.mxu0 0
    %1375 = vmatprep.subr.bf16.mxu0 0
    %1376 = vmatpush1.bf16.msra.mxu0 0
    %1377 = vmatprep.mubr.bf16.mxu0 0
    %1378 = vmatmul.mubr.bf16.gmra.mrb[0].mxu0 %v1343
    %v1379 = vpop.f32.mrb[0].mxu0
    %v1380 = vadd.f32 0.0, %v1379
    %v1381 = vpop.f32.mrb[0].mxu0
    %v1382 = vpop.f32.mrb[0].mxu0
    %v1383 = vpop.f32.mrb[0].mxu0
    %1384 = vdwg.mxu0
    %v1386 = vsel %vm163, %v1175, 0
    %1388 = vmatprep.subr.bf16.mxu0 0
    %1389 = vmatpush1.bf16.msra.mxu0 %v543
    %1390 = vmatprep.subr.bf16.mxu0 0
    %1391 = vmatpush1.bf16.msra.mxu0 0
    %1392 = vmatprep.subr.bf16.mxu0 0
    %1393 = vmatpush1.bf16.msra.mxu0 0
    %1394 = vmatprep.subr.bf16.mxu0 0
    %1395 = vmatpush1.bf16.msra.mxu0 0
    %1396 = vmatprep.subr.bf16.mxu0 0
    %1397 = vmatpush1.bf16.msra.mxu0 0
    %1398 = vmatprep.subr.bf16.mxu0 0
    %1399 = vmatpush1.bf16.msra.mxu0 0
    %1400 = vmatprep.subr.bf16.mxu0 0
    %1401 = vmatpush1.bf16.msra.mxu0 0
    %1402 = vmatprep.subr.bf16.mxu0 0
    %1403 = vmatpush1.bf16.msra.mxu0 0
    %1404 = vmatprep.subr.bf16.mxu0 0
    %1405 = vmatpush1.bf16.msra.mxu0 0
    %1406 = vmatprep.subr.bf16.mxu0 0
    %1407 = vmatpush1.bf16.msra.mxu0 0
    %1408 = vmatprep.subr.bf16.mxu0 0
    %1409 = vmatpush1.bf16.msra.mxu0 0
    %1410 = vmatprep.subr.bf16.mxu0 0
    %1411 = vmatpush1.bf16.msra.mxu0 0
    %1412 = vmatprep.subr.bf16.mxu0 0
    %1413 = vmatpush1.bf16.msra.mxu0 0
    %1414 = vmatprep.subr.bf16.mxu0 0
    %1415 = vmatpush1.bf16.msra.mxu0 0
    %1416 = vmatprep.subr.bf16.mxu0 0
    %1417 = vmatpush1.bf16.msra.mxu0 0
    %1418 = vmatprep.subr.bf16.mxu0 0
    %1419 = vmatpush1.bf16.msra.mxu0 0
    %1420 = vmatprep.mubr.bf16.mxu0 0
    %1421 = vmatmul.mubr.bf16.gmra.mrb[0].mxu0 %v1386
    %v1422 = vpop.f32.mrb[0].mxu0
    %v1423 = vadd.f32 %v1380, %v1422
    %v1424 = vpop.f32.mrb[0].mxu0
    %v1425 = vpop.f32.mrb[0].mxu0
    %v1426 = vpop.f32.mrb[0].mxu0
    %1427 = vdwg.mxu0
    %1428 = vrot.lane.b32.xlu0 %v157, 112
    %v1429 = vpop.permute.xlu0 %1428
    %1430 = vrot.lane.b32.xlu0 %v157, 80
    %v1431 = vpop.permute.xlu0 %1430
    %v1432 = vsel %vm163, %v1429, 0
    %v1434 = vsel %vm163, %v1431, 0
    %1436 = vmatprep.subr.mxu0 0.0
    %1437 = vmatpush1.xpose.msra.mxu0 %v1434
    %1438 = vmatprep.subr.mxu0 0.0
    %1439 = vmatpush1.xpose.msra.mxu0 0.0
    %1440 = vmatprep.subr.mxu0 0.0
    %1441 = vmatpush1.xpose.msra.mxu0 0.0
    %1442 = vmatprep.subr.mxu0 0.0
    %1443 = vmatpush1.xpose.msra.mxu0 0.0
    %1444 = vmatprep.subr.mxu0 0.0
    %1445 = vmatpush1.xpose.msra.mxu0 0.0
    %1446 = vmatprep.subr.mxu0 0.0
    %1447 = vmatpush1.xpose.msra.mxu0 0.0
    %1448 = vmatprep.subr.mxu0 0.0
    %1449 = vmatpush1.xpose.msra.mxu0 0.0
    %1450 = vmatprep.subr.mxu0 0.0
    %1451 = vmatpush1.xpose.msra.mxu0 0.0
    %1452 = vmatprep.subr.mxu0 0.0
    %1453 = vmatpush1.xpose.msra.mxu0 0.0
    %1454 = vmatprep.subr.mxu0 0.0
    %1455 = vmatpush1.xpose.msra.mxu0 0.0
    %1456 = vmatprep.subr.mxu0 0.0
    %1457 = vmatpush1.xpose.msra.mxu0 0.0
    %1458 = vmatprep.subr.mxu0 0.0
    %1459 = vmatpush1.xpose.msra.mxu0 0.0
    %1460 = vmatprep.subr.mxu0 0.0
    %1461 = vmatpush1.xpose.msra.mxu0 0.0
    %1462 = vmatprep.subr.mxu0 0.0
    %1463 = vmatpush1.xpose.msra.mxu0 0.0
    %1464 = vmatprep.subr.mxu0 0.0
    %1465 = vmatpush1.xpose.msra.mxu0 0.0
    %1466 = vmatprep.subr.mxu0 0.0
    %1467 = vmatpush1.xpose.msra.mxu0 0.0
    %1468 = vmatprep.subr.mxu0 0.0
    %1469 = vmatpush1.xpose.msra.mxu0 0.0
    %1470 = vmatprep.subr.mxu0 0.0
    %1471 = vmatpush1.xpose.msra.mxu0 0.0
    %1472 = vmatprep.subr.mxu0 0.0
    %1473 = vmatpush1.xpose.msra.mxu0 0.0
    %1474 = vmatprep.subr.mxu0 0.0
    %1475 = vmatpush1.xpose.msra.mxu0 0.0
    %1476 = vmatprep.subr.mxu0 0.0
    %1477 = vmatpush1.xpose.msra.mxu0 0.0
    %1478 = vmatprep.subr.mxu0 0.0
    %1479 = vmatpush1.xpose.msra.mxu0 0.0
    %1480 = vmatprep.subr.mxu0 0.0
    %1481 = vmatpush1.xpose.msra.mxu0 0.0
    %1482 = vmatprep.subr.mxu0 0.0
    %1483 = vmatpush1.xpose.msra.mxu0 0.0
    %1484 = vmatprep.subr.mxu0 0.0
    %1485 = vmatpush1.xpose.msra.mxu0 0.0
    %1486 = vmatprep.subr.mxu0 0.0
    %1487 = vmatpush1.xpose.msra.mxu0 0.0
    %1488 = vmatprep.subr.mxu0 0.0
    %1489 = vmatpush1.xpose.msra.mxu0 0.0
    %1490 = vmatprep.subr.mxu0 0.0
    %1491 = vmatpush1.xpose.msra.mxu0 0.0
    %1492 = vmatprep.subr.mxu0 0.0
    %1493 = vmatpush1.xpose.msra.mxu0 0.0
    %1494 = vmatprep.subr.mxu0 0.0
    %1495 = vmatpush1.xpose.msra.mxu0 0.0
    %1496 = vmatprep.subr.mxu0 0.0
    %1497 = vmatpush1.xpose.msra.mxu0 0.0
    %1498 = vmatprep.subr.mxu0 0.0
    %1499 = vmatpush1.xpose.msra.mxu0 0.0
    %1500 = vmatprep.mubr.f32.mxu0 0.0
    %1501 = vmatmul.mubr.f32.gmra.mrb[0].mxu0 %v1432
    %v1502 = vpop.f32.mrb[0].mxu0
    %v1503 = vadd.f32 %v46, %v1502
    %v1504 = vpop.f32.mrb[0].mxu0
    %1505 = vdwg.mxu0
    %v1506 = vsel %vm163, %v1503, -inf
    %1507 = vmax.xlane.f32.xlu0 %v1506
    %v1508 = vpop.xlane.xlu0 %1507
    %v1509 = vsub.f32 %v1503, %v1508
    %v1510 = vmul.f32 %v1509, 1.442695
    %v1511 = vpow.pop %v1510
    %v1512 = vsel %vm163, %v1511, 0.0
    %1513 = vadd.xlane.f32.xlu0 %v1512
    %v1514 = vpop.xlane.xlu0 %1513
    %v1515 = vrcp.pop %v1514
    %v1516 = vmul.f32 %v1511, %v1515
    %1517 = vrot.lane.b32.xlu0 %v157, 48
    %v1518 = vpop.permute.xlu0 %1517
    %v1521 = vsel %vm163, %v1516, 0
    %1523 = vmatprep.subr.mxu0 0.0
    %1524 = vmatpush1.msra.mxu0 %v1518
    %1525 = vmatprep.subr.mxu0 0.0
    %1526 = vmatpush1.msra.mxu0 0.0
    %1527 = vmatprep.subr.mxu0 0.0
    %1528 = vmatpush1.msra.mxu0 0.0
    %1529 = vmatprep.subr.mxu0 0.0
    %1530 = vmatpush1.msra.mxu0 0.0
    %1531 = vmatprep.subr.mxu0 0.0
    %1532 = vmatpush1.msra.mxu0 0.0
    %1533 = vmatprep.subr.mxu0 0.0
    %1534 = vmatpush1.msra.mxu0 0.0
    %1535 = vmatprep.subr.mxu0 0.0
    %1536 = vmatpush1.msra.mxu0 0.0
    %1537 = vmatprep.subr.mxu0 0.0
    %1538 = vmatpush1.msra.mxu0 0.0
    %1539 = vmatprep.subr.mxu0 0.0
    %1540 = vmatpush1.msra.mxu0 0.0
    %1541 = vmatprep.subr.mxu0 0.0
    %1542 = vmatpush1.msra.mxu0 0.0
    %1543 = vmatprep.subr.mxu0 0.0
    %1544 = vmatpush1.msra.mxu0 0.0
    %1545 = vmatprep.subr.mxu0 0.0
    %1546 = vmatpush1.msra.mxu0 0.0
    %1547 = vmatprep.subr.mxu0 0.0
    %1548 = vmatpush1.msra.mxu0 0.0
    %1549 = vmatprep.subr.mxu0 0.0
    %1550 = vmatpush1.msra.mxu0 0.0
    %1551 = vmatprep.subr.mxu0 0.0
    %1552 = vmatpush1.msra.mxu0 0.0
    %1553 = vmatprep.subr.mxu0 0.0
    %1554 = vmatpush1.msra.mxu0 0.0
    %1555 = vmatprep.subr.mxu0 0.0
    %1556 = vmatpush1.msra.mxu0 0.0
    %1557 = vmatprep.subr.mxu0 0.0
    %1558 = vmatpush1.msra.mxu0 0.0
    %1559 = vmatprep.subr.mxu0 0.0
    %1560 = vmatpush1.msra.mxu0 0.0
    %1561 = vmatprep.subr.mxu0 0.0
    %1562 = vmatpush1.msra.mxu0 0.0
    %1563 = vmatprep.subr.mxu0 0.0
    %1564 = vmatpush1.msra.mxu0 0.0
    %1565 = vmatprep.subr.mxu0 0.0
    %1566 = vmatpush1.msra.mxu0 0.0
    %1567 = vmatprep.subr.mxu0 0.0
    %1568 = vmatpush1.msra.mxu0 0.0
    %1569 = vmatprep.subr.mxu0 0.0
    %1570 = vmatpush1.msra.mxu0 0.0
    %1571 = vmatprep.subr.mxu0 0.0
    %1572 = vmatpush1.msra.mxu0 0.0
    %1573 = vmatprep.subr.mxu0 0.0
    %1574 = vmatpush1.msra.mxu0 0.0
    %1575 = vmatprep.subr.mxu0 0.0
    %1576 = vmatpush1.msra.mxu0 0.0
    %1577 = vmatprep.subr.mxu0 0.0
    %1578 = vmatpush1.msra.mxu0 0.0
    %1579 = vmatprep.subr.mxu0 0.0
    %1580 = vmatpush1.msra.mxu0 0.0
    %1581 = vmatprep.subr.mxu0 0.0
    %1582 = vmatpush1.msra.mxu0 0.0
    %1583 = vmatprep.subr.mxu0 0.0
    %1584 = vmatpush1.msra.mxu0 0.0
    %1585 = vmatprep.subr.mxu0 0.0
    %1586 = vmatpush1.msra.mxu0 0.0
    %1587 = vmatprep.mubr.f32.mxu0 0.0
    %1588 = vmatmul.mubr.f32.gmra.mrb[0].mxu0 %v1521
    %v1589 = vpop.f32.mrb[0].mxu0
    %v1590 = vadd.f32 0.0, %v1589
    %v1591 = vpop.f32.mrb[0].mxu0
    %1592 = vdwg.mxu0
    %v1593 = vpack.c.bf16 %v1590, %v1590
    %v1595 = vsel %vm163, %v1593, 0
    %1597 = vmatprep.subr.bf16.mxu0 0
    %1598 = vmatpush1.bf16.msra.mxu0 %v755
    %1599 = vmatprep.subr.bf16.mxu0 0
    %1600 = vmatpush1.bf16.msra.mxu0 0
    %1601 = vmatprep.subr.bf16.mxu0 0
    %1602 = vmatpush1.bf16.msra.mxu0 0
    %1603 = vmatprep.subr.bf16.mxu0 0
    %1604 = vmatpush1.bf16.msra.mxu0 0
    %1605 = vmatprep.subr.bf16.mxu0 0
    %1606 = vmatpush1.bf16.msra.mxu0 0
    %1607 = vmatprep.subr.bf16.mxu0 0
    %1608 = vmatpush1.bf16.msra.mxu0 0
    %1609 = vmatprep.subr.bf16.mxu0 0
    %1610 = vmatpush1.bf16.msra.mxu0 0
    %1611 = vmatprep.subr.bf16.mxu0 0
    %1612 = vmatpush1.bf16.msra.mxu0 0
    %1613 = vmatprep.subr.bf16.mxu0 0
    %1614 = vmatpush1.bf16.msra.mxu0 0
    %1615 = vmatprep.subr.bf16.mxu0 0
    %1616 = vmatpush1.bf16.msra.mxu0 0
    %1617 = vmatprep.subr.bf16.mxu0 0
    %1618 = vmatpush1.bf16.msra.mxu0 0
    %1619 = vmatprep.subr.bf16.mxu0 0
    %1620 = vmatpush1.bf16.msra.mxu0 0
    %1621 = vmatprep.subr.bf16.mxu0 0
    %1622 = vmatpush1.bf16.msra.mxu0 0
    %1623 = vmatprep.subr.bf16.mxu0 0
    %1624 = vmatpush1.bf16.msra.mxu0 0
    %1625 = vmatprep.subr.bf16.mxu0 0
    %1626 = vmatpush1.bf16.msra.mxu0 0
    %1627 = vmatprep.subr.bf16.mxu0 0
    %1628 = vmatpush1.bf16.msra.mxu0 0
    %1629 = vmatprep.mubr.bf16.mxu0 0
    %1630 = vmatmul.mubr.bf16.gmra.mrb[0].mxu0 %v1595
    %v1631 = vpop.f32.mrb[0].mxu0
    %v1632 = vadd.f32 0.0, %v1631
    %v1633 = vpop.f32.mrb[0].mxu0
    %v1634 = vpop.f32.mrb[0].mxu0
    %v1635 = vpop.f32.mrb[0].mxu0
    %1636 = vdwg.mxu0
    %v1637 = vadd.f32 %v1423, %v1632
    %1638 = vrot.lane.b32.xlu0 %v157, 104
    %v1639 = vpop.permute.xlu0 %1638
    %1640 = vrot.lane.b32.xlu0 %v157, 72
    %v1641 = vpop.permute.xlu0 %1640
    %v1642 = vsel %vm163, %v1639, 0
    %v1644 = vsel %vm163, %v1641, 0
    %1646 = vmatprep.subr.mxu0 0.0
    %1647 = vmatpush1.xpose.msra.mxu0 %v1644
    %1648 = vmatprep.subr.mxu0 0.0
    %1649 = vmatpush1.xpose.msra.mxu0 0.0
    %1650 = vmatprep.subr.mxu0 0.0
    %1651 = vmatpush1.xpose.msra.mxu0 0.0
    %1652 = vmatprep.subr.mxu0 0.0
    %1653 = vmatpush1.xpose.msra.mxu0 0.0
    %1654 = vmatprep.subr.mxu0 0.0
    %1655 = vmatpush1.xpose.msra.mxu0 0.0
    %1656 = vmatprep.subr.mxu0 0.0
    %1657 = vmatpush1.xpose.msra.mxu0 0.0
    %1658 = vmatprep.subr.mxu0 0.0
    %1659 = vmatpush1.xpose.msra.mxu0 0.0
    %1660 = vmatprep.subr.mxu0 0.0
    %1661 = vmatpush1.xpose.msra.mxu0 0.0
    %1662 = vmatprep.subr.mxu0 0.0
    %1663 = vmatpush1.xpose.msra.mxu0 0.0
    %1664 = vmatprep.subr.mxu0 0.0
    %1665 = vmatpush1.xpose.msra.mxu0 0.0
    %1666 = vmatprep.subr.mxu0 0.0
    %1667 = vmatpush1.xpose.msra.mxu0 0.0
    %1668 = vmatprep.subr.mxu0 0.0
    %1669 = vmatpush1.xpose.msra.mxu0 0.0
    %1670 = vmatprep.subr.mxu0 0.0
    %1671 = vmatpush1.xpose.msra.mxu0 0.0
    %1672 = vmatprep.subr.mxu0 0.0
    %1673 = vmatpush1.xpose.msra.mxu0 0.0
    %1674 = vmatprep.subr.mxu0 0.0
    %1675 = vmatpush1.xpose.msra.mxu0 0.0
    %1676 = vmatprep.subr.mxu0 0.0
    %1677 = vmatpush1.xpose.msra.mxu0 0.0
    %1678 = vmatprep.subr.mxu0 0.0
    %1679 = vmatpush1.xpose.msra.mxu0 0.0
    %1680 = vmatprep.subr.mxu0 0.0
    %1681 = vmatpush1.xpose.msra.mxu0 0.0
    %1682 = vmatprep.subr.mxu0 0.0
    %1683 = vmatpush1.xpose.msra.mxu0 0.0
    %1684 = vmatprep.subr.mxu0 0.0
    %1685 = vmatpush1.xpose.msra.mxu0 0.0
    %1686 = vmatprep.subr.mxu0 0.0
    %1687 = vmatpush1.xpose.msra.mxu0 0.0
    %1688 = vmatprep.subr.mxu0 0.0
    %1689 = vmatpush1.xpose.msra.mxu0 0.0
    %1690 = vmatprep.subr.mxu0 0.0
    %1691 = vmatpush1.xpose.msra.mxu0 0.0
    %1692 = vmatprep.subr.mxu0 0.0
    %1693 = vmatpush1.xpose.msra.mxu0 0.0
    %1694 = vmatprep.subr.mxu0 0.0
    %1695 = vmatpush1.xpose.msra.mxu0 0.0
    %1696 = vmatprep.subr.mxu0 0.0
    %1697 = vmatpush1.xpose.msra.mxu0 0.0
    %1698 = vmatprep.subr.mxu0 0.0
    %1699 = vmatpush1.xpose.msra.mxu0 0.0
    %1700 = vmatprep.subr.mxu0 0.0
    %1701 = vmatpush1.xpose.msra.mxu0 0.0
    %1702 = vmatprep.subr.mxu0 0.0
    %1703 = vmatpush1.xpose.msra.mxu0 0.0
    %1704 = vmatprep.subr.mxu0 0.0
    %1705 = vmatpush1.xpose.msra.mxu0 0.0
    %1706 = vmatprep.subr.mxu0 0.0
    %1707 = vmatpush1.xpose.msra.mxu0 0.0
    %1708 = vmatprep.subr.mxu0 0.0
    %1709 = vmatpush1.xpose.msra.mxu0 0.0
    %1710 = vmatprep.mubr.f32.mxu0 0.0
    %1711 = vmatmul.mubr.f32.gmra.mrb[0].mxu0 %v1642
    %v1712 = vpop.f32.mrb[0].mxu0
    %v1713 = vadd.f32 %v46, %v1712
    %v1714 = vpop.f32.mrb[0].mxu0
    %1715 = vdwg.mxu0
    %v1716 = vsel %vm163, %v1713, -inf
    %1717 = vmax.xlane.f32.xlu0 %v1716
    %v1718 = vpop.xlane.xlu0 %1717
    %v1719 = vsub.f32 %v1713, %v1718
    %v1720 = vmul.f32 %v1719, 1.442695
    %v1721 = vpow.pop %v1720
    %v1722 = vsel %vm163, %v1721, 0.0
    %1723 = vadd.xlane.f32.xlu0 %v1722
    %v1724 = vpop.xlane.xlu0 %1723
    %v1725 = vrcp.pop %v1724
    %v1726 = vmul.f32 %v1721, %v1725
    %1727 = vrot.lane.b32.xlu0 %v157, 40
    %v1728 = vpop.permute.xlu0 %1727
    %v1731 = vsel %vm163, %v1726, 0
    %1733 = vmatprep.subr.mxu0 0.0
    %1734 = vmatpush1.msra.mxu0 %v1728
    %1735 = vmatprep.subr.mxu0 0.0
    %1736 = vmatpush1.msra.mxu0 0.0
    %1737 = vmatprep.subr.mxu0 0.0
    %1738 = vmatpush1.msra.mxu0 0.0
    %1739 = vmatprep.subr.mxu0 0.0
    %1740 = vmatpush1.msra.mxu0 0.0
    %1741 = vmatprep.subr.mxu0 0.0
    %1742 = vmatpush1.msra.mxu0 0.0
    %1743 = vmatprep.subr.mxu0 0.0
    %1744 = vmatpush1.msra.mxu0 0.0
    %1745 = vmatprep.subr.mxu0 0.0
    %1746 = vmatpush1.msra.mxu0 0.0
    %1747 = vmatprep.subr.mxu0 0.0
    %1748 = vmatpush1.msra.mxu0 0.0
    %1749 = vmatprep.subr.mxu0 0.0
    %1750 = vmatpush1.msra.mxu0 0.0
    %1751 = vmatprep.subr.mxu0 0.0
    %1752 = vmatpush1.msra.mxu0 0.0
    %1753 = vmatprep.subr.mxu0 0.0
    %1754 = vmatpush1.msra.mxu0 0.0
    %1755 = vmatprep.subr.mxu0 0.0
    %1756 = vmatpush1.msra.mxu0 0.0
    %1757 = vmatprep.subr.mxu0 0.0
    %1758 = vmatpush1.msra.mxu0 0.0
    %1759 = vmatprep.subr.mxu0 0.0
    %1760 = vmatpush1.msra.mxu0 0.0
    %1761 = vmatprep.subr.mxu0 0.0
    %1762 = vmatpush1.msra.mxu0 0.0
    %1763 = vmatprep.subr.mxu0 0.0
    %1764 = vmatpush1.msra.mxu0 0.0
    %1765 = vmatprep.subr.mxu0 0.0
    %1766 = vmatpush1.msra.mxu0 0.0
    %1767 = vmatprep.subr.mxu0 0.0
    %1768 = vmatpush1.msra.mxu0 0.0
    %1769 = vmatprep.subr.mxu0 0.0
    %1770 = vmatpush1.msra.mxu0 0.0
    %1771 = vmatprep.subr.mxu0 0.0
    %1772 = vmatpush1.msra.mxu0 0.0
    %1773 = vmatprep.subr.mxu0 0.0
    %1774 = vmatpush1.msra.mxu0 0.0
    %1775 = vmatprep.subr.mxu0 0.0
    %1776 = vmatpush1.msra.mxu0 0.0
    %1777 = vmatprep.subr.mxu0 0.0
    %1778 = vmatpush1.msra.mxu0 0.0
    %1779 = vmatprep.subr.mxu0 0.0
    %1780 = vmatpush1.msra.mxu0 0.0
    %1781 = vmatprep.subr.mxu0 0.0
    %1782 = vmatpush1.msra.mxu0 0.0
    %1783 = vmatprep.subr.mxu0 0.0
    %1784 = vmatpush1.msra.mxu0 0.0
    %1785 = vmatprep.subr.mxu0 0.0
    %1786 = vmatpush1.msra.mxu0 0.0
    %1787 = vmatprep.subr.mxu0 0.0
    %1788 = vmatpush1.msra.mxu0 0.0
    %1789 = vmatprep.subr.mxu0 0.0
    %1790 = vmatpush1.msra.mxu0 0.0
    %1791 = vmatprep.subr.mxu0 0.0
    %1792 = vmatpush1.msra.mxu0 0.0
    %1793 = vmatprep.subr.mxu0 0.0
    %1794 = vmatpush1.msra.mxu0 0.0
    %1795 = vmatprep.subr.mxu0 0.0
    %1796 = vmatpush1.msra.mxu0 0.0
    %1797 = vmatprep.mubr.f32.mxu0 0.0
    %1798 = vmatmul.mubr.f32.gmra.mrb[0].mxu0 %v1731
    %v1799 = vpop.f32.mrb[0].mxu0
    %v1800 = vadd.f32 0.0, %v1799
    %v1801 = vpop.f32.mrb[0].mxu0
    %1802 = vdwg.mxu0
    %v1803 = vpack.c.bf16 %v1800, %v1800
    %v1805 = vsel %vm163, %v1803, 0
    %1807 = vmatprep.subr.bf16.mxu0 0
    %1808 = vmatpush1.bf16.msra.mxu0 %v968
    %1809 = vmatprep.subr.bf16.mxu0 0
    %1810 = vmatpush1.bf16.msra.mxu0 0
    %1811 = vmatprep.subr.bf16.mxu0 0
    %1812 = vmatpush1.bf16.msra.mxu0 0
    %1813 = vmatprep.subr.bf16.mxu0 0
    %1814 = vmatpush1.bf16.msra.mxu0 0
    %1815 = vmatprep.subr.bf16.mxu0 0
    %1816 = vmatpush1.bf16.msra.mxu0 0
    %1817 = vmatprep.subr.bf16.mxu0 0
    %1818 = vmatpush1.bf16.msra.mxu0 0
    %1819 = vmatprep.subr.bf16.mxu0 0
    %1820 = vmatpush1.bf16.msra.mxu0 0
    %1821 = vmatprep.subr.bf16.mxu0 0
    %1822 = vmatpush1.bf16.msra.mxu0 0
    %1823 = vmatprep.subr.bf16.mxu0 0
    %1824 = vmatpush1.bf16.msra.mxu0 0
    %1825 = vmatprep.subr.bf16.mxu0 0
    %1826 = vmatpush1.bf16.msra.mxu0 0
    %1827 = vmatprep.subr.bf16.mxu0 0
    %1828 = vmatpush1.bf16.msra.mxu0 0
    %1829 = vmatprep.subr.bf16.mxu0 0
    %1830 = vmatpush1.bf16.msra.mxu0 0
    %1831 = vmatprep.subr.bf16.mxu0 0
    %1832 = vmatpush1.bf16.msra.mxu0 0
    %1833 = vmatprep.subr.bf16.mxu0 0
    %1834 = vmatpush1.bf16.msra.mxu0 0
    %1835 = vmatprep.subr.bf16.mxu0 0
    %1836 = vmatpush1.bf16.msra.mxu0 0
    %1837 = vmatprep.subr.bf16.mxu0 0
    %1838 = vmatpush1.bf16.msra.mxu0 0
    %1839 = vmatprep.mubr.bf16.mxu0 0
    %1840 = vmatmul.mubr.bf16.gmra.mrb[0].mxu0 %v1805
    %v1841 = vpop.f32.mrb[0].mxu0
    %v1842 = vadd.f32 0.0, %v1841
    %v1843 = vpop.f32.mrb[0].mxu0
    %v1844 = vpop.f32.mrb[0].mxu0
    %v1845 = vpop.f32.mrb[0].mxu0
    %1846 = vdwg.mxu0
    %v1847 = vadd.f32 %v1637, %v1842
    %v1848 = vlaneseq
    %v1849 = vshrl.u32 %v1848, 7
    %v1850 = vsub.s32 1, %v1849
    %v1851 = vrot.slane %v90, %v1850
    %v1852 = vadd.f32 %v1010, %v1851
    %v1853 = vadd.f32 %v1847, %v1851
    %v1854 = vadd.f32 %v1852, %v88
    %v1855 = vadd.f32 %v1853, %v89
    %v1856 = vsel %vm50, %v1854, 0.0
    %1857 = vadd.xlane.f32.xlu0 %v1856
    %v1858 = vpop.xlane.xlu0 %1857
    %v1859 = vsel %vm50, %v1855, 0.0
    %1860 = vadd.xlane.f32.xlu0 %v1859
    %v1861 = vpop.xlane.xlu0 %1860
    %v1862 = vmul.f32 %v1858, %v57
    %v1863 = vmul.f32 %v1861, %v57
    %v1864 = vsub.f32 %v1854, %v1862
    %v1865 = vsub.f32 %v1855, %v1863
    %v1866 = vmul.f32 %v1864, %v1864
    %v1867 = vmul.f32 %v1865, %v1865
    %v1868 = vsel %vm50, %v1866, 0.0
    %1869 = vadd.xlane.f32.xlu0 %v1868
    %v1870 = vpop.xlane.xlu0 %1869
    %v1871 = vsel %vm50, %v1867, 0.0
    %1872 = vadd.xlane.f32.xlu0 %v1871
    %v1873 = vpop.xlane.xlu0 %1872
    %v1874 = vmul.f32 %v1870, %v57
    %v1875 = vmul.f32 %v1873, %v57
    %v1876 = vadd.f32 %v1874, 1e-12
    %v1877 = vadd.f32 %v1875, 1e-12
    %v1878 = vrsqrt.pop %v1876
    %v1879 = vrsqrt.pop %v1877
    %v1880 = vmul.f32 %v1864, %v1878
    %v1881 = vmul.f32 %v1865, %v1879
    %1883 = vrot.lane.b32.xlu0 %v1851, 96
    %v1884 = vpop.permute.xlu0 %1883
    %v1886 = vmul.f32 %v1880, %v1884
    %v1887 = vmul.f32 %v1881, %v1884
    %1888 = vrot.lane.b32.xlu0 %v1851, 64
    %v1889 = vpop.permute.xlu0 %1888
    %v1891 = vadd.f32 %v1886, %v1889
    %v1892 = vadd.f32 %v1887, %v1889
    %v1893 = vpack.c.bf16 %v1892, %v1891
    %v1894 = vld [vmem:[%s5] sm:$0xf]
    %v1895 = vld [vmem:[%s5 + $0x4] sm:$0xf]
    %v1896 = vld [vmem:[%s5 + $0x8] sm:$0xf]
    %v1897 = vld [vmem:[%s5 + $0xc] sm:$0xf]
    %v1898 = vlaneseq
    %v1899 = vshrl.u32 %v1898, 7
    %v1900 = vsub.s32 2, %v1899
    %v1901 = vrot.slane %v90, %v1900
    %v1906 = vunpack.c.l.b16 %v1894
    %v1907 = vunpack.c.l.b16 %v1895
    %v1908 = vunpack.c.l.b16 %v1896
    %v1909 = vunpack.c.l.b16 %v1897
    %v1910 = vpack.c.b16 %v1907, %v1906
    %v1911 = vpack.c.b16 %v1909, %v1908
    %v1915 = vsel %vm50, %v1893, 0
    %1917 = vmatprep.subr.bf16.mxu0 0
    %1918 = vmatpush1.bf16.msra.mxu0 %v1910
    %1919 = vmatprep.subr.bf16.mxu0 0
    %1920 = vmatpush1.bf16.msra.mxu0 %v1911
    %1921 = vmatprep.subr.bf16.mxu0 0
    %1922 = vmatpush1.bf16.msra.mxu0 0
    %1923 = vmatprep.subr.bf16.mxu0 0
    %1924 = vmatpush1.bf16.msra.mxu0 0
    %1925 = vmatprep.subr.bf16.mxu0 0
    %1926 = vmatpush1.bf16.msra.mxu0 0
    %1927 = vmatprep.subr.bf16.mxu0 0
    %1928 = vmatpush1.bf16.msra.mxu0 0
    %1929 = vmatprep.subr.bf16.mxu0 0
    %1930 = vmatpush1.bf16.msra.mxu0 0
    %1931 = vmatprep.subr.bf16.mxu0 0
    %1932 = vmatpush1.bf16.msra.mxu0 0
    %1933 = vmatprep.subr.bf16.mxu0 0
    %1934 = vmatpush1.bf16.msra.mxu0 0
    %1935 = vmatprep.subr.bf16.mxu0 0
    %1936 = vmatpush1.bf16.msra.mxu0 0
    %1937 = vmatprep.subr.bf16.mxu0 0
    %1938 = vmatpush1.bf16.msra.mxu0 0
    %1939 = vmatprep.subr.bf16.mxu0 0
    %1940 = vmatpush1.bf16.msra.mxu0 0
    %1941 = vmatprep.subr.bf16.mxu0 0
    %1942 = vmatpush1.bf16.msra.mxu0 0
    %1943 = vmatprep.subr.bf16.mxu0 0
    %1944 = vmatpush1.bf16.msra.mxu0 0
    %1945 = vmatprep.subr.bf16.mxu0 0
    %1946 = vmatpush1.bf16.msra.mxu0 0
    %1947 = vmatprep.subr.bf16.mxu0 0
    %1948 = vmatpush1.bf16.msra.mxu0 0
    %1949 = vmatprep.mubr.bf16.mxu0 0
    %1950 = vmatmul.mubr.bf16.gmra.mrb[0].mxu0 %v1915
    %v1951 = vpop.f32.mrb[0].mxu0
    %v1952 = vadd.f32 %v1901, %v1951
    %v1953 = vpop.f32.mrb[0].mxu0
    %v1954 = vpop.f32.mrb[0].mxu0
    %v1955 = vadd.f32 %v1901, %v1954
    %v1956 = vpop.f32.mrb[0].mxu0
    %1957 = vdwg.mxu0
    %v1958 = vmul.f32 %v1952, %v1952
    %v1959 = vmul.f32 %v1955, %v1955
    %v1960 = vmul.f32 %v1952, %v1958
    %v1961 = vmul.f32 %v1955, %v1959
    %v1962 = vmul.f32 %v1960, 0.044715
    %v1963 = vmul.f32 %v1961, 0.044715
    %v1964 = vadd.f32 %v1952, %v1962
    %v1965 = vadd.f32 %v1955, %v1963
    %v1966 = vmul.f32 %v1964, 0.7978846
    %v1967 = vmul.f32 %v1965, 0.7978846
    %v1968 = vtanh.pop %v1966
    %v1969 = vtanh.pop %v1967
    %v1970 = vadd.f32 %v1968, 1.0
    %v1971 = vadd.f32 %v1969, 1.0
    %v1972 = vmul.f32 %v1970, 0.5
    %v1973 = vmul.f32 %v1971, 0.5
    %v1974 = vmul.f32 %v1952, %v1972
    %v1975 = vmul.f32 %v1955, %v1973
    %v1976 = vpack.c.bf16 %v1975, %v1974
    %v1977 = vld [vmem:[%s6] sm:$0xf]
    %v1978 = vld [vmem:[%s6 + $0x4] sm:$0xf]
    %v1979 = vld [vmem:[%s6 + $0x8] sm:$0xf]
    %v1980 = vld [vmem:[%s6 + $0xc] sm:$0xf]
    %v1981 = vld [vmem:[%s6 + $0x10] sm:$0xf]
    %v1982 = vld [vmem:[%s6 + $0x14] sm:$0xf]
    %v1983 = vld [vmem:[%s6 + $0x18] sm:$0xf]
    %v1984 = vld [vmem:[%s6 + $0x1c] sm:$0xf]
    %v1985 = vlaneseq
    %v1986 = vshrl.u32 %v1985, 7
    %v1987 = vsub.s32 3, %v1986
    %v1988 = vrot.slane %v90, %v1987
    %v1997 = vunpack.c.l.b16 %v1977
    %v1998 = vunpack.c.l.b16 %v1978
    %v1999 = vunpack.c.l.b16 %v1979
    %v2000 = vunpack.c.l.b16 %v1980
    %v2001 = vunpack.c.l.b16 %v1981
    %v2002 = vunpack.c.l.b16 %v1982
    %v2003 = vunpack.c.l.b16 %v1983
    %v2004 = vunpack.c.l.b16 %v1984
    %v2005 = vpack.c.b16 %v1998, %v1997
    %v2006 = vpack.c.b16 %v2000, %v1999
    %v2007 = vpack.c.b16 %v2002, %v2001
    %v2008 = vpack.c.b16 %v2004, %v2003
    %vm2013 = vcmask 523264
    %v2015 = vsel %vm2013, %v1976, 0
    %2017 = vmatprep.subr.bf16.mxu0 0
    %2018 = vmatpush1.bf16.msra.mxu0 %v2005
    %2019 = vmatprep.subr.bf16.mxu0 0
    %2020 = vmatpush1.bf16.msra.mxu0 %v2006
    %2021 = vmatprep.subr.bf16.mxu0 0
    %2022 = vmatpush1.bf16.msra.mxu0 %v2007
    %2023 = vmatprep.subr.bf16.mxu0 0
    %2024 = vmatpush1.bf16.msra.mxu0 %v2008
    %2025 = vmatprep.subr.bf16.mxu0 0
    %2026 = vmatpush1.bf16.msra.mxu0 0
    %2027 = vmatprep.subr.bf16.mxu0 0
    %2028 = vmatpush1.bf16.msra.mxu0 0
    %2029 = vmatprep.subr.bf16.mxu0 0
    %2030 = vmatpush1.bf16.msra.mxu0 0
    %2031 = vmatprep.subr.bf16.mxu0 0
    %2032 = vmatpush1.bf16.msra.mxu0 0
    %2033 = vmatprep.subr.bf16.mxu0 0
    %2034 = vmatpush1.bf16.msra.mxu0 0
    %2035 = vmatprep.subr.bf16.mxu0 0
    %2036 = vmatpush1.bf16.msra.mxu0 0
    %2037 = vmatprep.subr.bf16.mxu0 0
    %2038 = vmatpush1.bf16.msra.mxu0 0
    %2039 = vmatprep.subr.bf16.mxu0 0
    %2040 = vmatpush1.bf16.msra.mxu0 0
    %2041 = vmatprep.subr.bf16.mxu0 0
    %2042 = vmatpush1.bf16.msra.mxu0 0
    %2043 = vmatprep.subr.bf16.mxu0 0
    %2044 = vmatpush1.bf16.msra.mxu0 0
    %2045 = vmatprep.subr.bf16.mxu0 0
    %2046 = vmatpush1.bf16.msra.mxu0 0
    %2047 = vmatprep.subr.bf16.mxu0 0
    %2048 = vmatpush1.bf16.msra.mxu0 0
    %2049 = vmatprep.mubr.bf16.mxu0 0
    %2050 = vmatmul.mubr.bf16.gmra.mrb[0].mxu0 %v2015
    %v2051 = vpop.f32.mrb[0].mxu0
    %v2052 = vadd.f32 %v1988, %v2051
    %v2053 = vpop.f32.mrb[0].mxu0
    %v2054 = vpop.f32.mrb[0].mxu0
    %v2055 = vadd.f32 %v1988, %v2054
    %v2056 = vpop.f32.mrb[0].mxu0
    %2057 = vdwg.mxu0
    %v2058 = vadd.f32 %v2052, %v1891
    %v2059 = vadd.f32 %v2055, %v1892
    %v2060 = vsel %vm50, %v2058, 0.0
    %2061 = vadd.xlane.f32.xlu0 %v2060
    %v2062 = vpop.xlane.xlu0 %2061
    %v2063 = vsel %vm50, %v2059, 0.0
    %2064 = vadd.xlane.f32.xlu0 %v2063
    %v2065 = vpop.xlane.xlu0 %2064
    %v2066 = vmul.f32 %v2062, %v57
    %v2067 = vmul.f32 %v2065, %v57
    %v2068 = vsub.f32 %v2058, %v2066
    %v2069 = vsub.f32 %v2059, %v2067
    %v2070 = vmul.f32 %v2068, %v2068
    %v2071 = vmul.f32 %v2069, %v2069
    %v2072 = vsel %vm50, %v2070, 0.0
    %2073 = vadd.xlane.f32.xlu0 %v2072
    %v2074 = vpop.xlane.xlu0 %2073
    %v2075 = vsel %vm50, %v2071, 0.0
    %2076 = vadd.xlane.f32.xlu0 %v2075
    %v2077 = vpop.xlane.xlu0 %2076
    %v2078 = vmul.f32 %v2074, %v57
    %v2079 = vmul.f32 %v2077, %v57
    %v2080 = vadd.f32 %v2078, 1e-12
    %v2081 = vadd.f32 %v2079, 1e-12
    %v2082 = vrsqrt.pop %v2080
    %v2083 = vrsqrt.pop %v2081
    %v2084 = vmul.f32 %v2068, %v2082
    %v2085 = vmul.f32 %v2069, %v2083
    %2087 = vrot.lane.b32.xlu0 %v1988, 96
    %v2088 = vpop.permute.xlu0 %2087
    %v2090 = vmul.f32 %v2084, %v2088
    %v2091 = vmul.f32 %v2085, %v2088
    %2092 = vrot.lane.b32.xlu0 %v1988, 64
    %v2093 = vpop.permute.xlu0 %2092
    %v2095 = vadd.f32 %v2090, %v2093
    %v2096 = vadd.f32 %v2091, %v2093
    %s2097 = scalar_lea.vmem %s7, 4
    %v2098 = vld [vmem:[%s2097] sm:$0xf]
    %s2099 = scalar_lea.vmem %s3, 16
    %v2100 = vld [vmem:[%s2099] sm:$0xf]
    %v2101 = vld [vmem:[%s2099 + $0x4] sm:$0xf]
    %v2102 = vld [vmem:[%s2099 + $0x8] sm:$0xf]
    %v2103 = vld [vmem:[%s2099 + $0xc] sm:$0xf]
    %s2104 = scalar_lea.vmem %s4, 16
    %v2105 = vld [vmem:[%s2104] sm:$0xf]
    %v2106 = vld [vmem:[%s2104 + $0x4] sm:$0xf]
    %v2107 = vld [vmem:[%s2104 + $0x8] sm:$0xf]
    %v2108 = vld [vmem:[%s2104 + $0xc] sm:$0xf]
    %v2109 = vpack.c.bf16 %v2096, %v2095
    %v2110 = vlaneseq
    %v2111 = vshrl.u32 %v2110, 7
    %v2112 = vsub.s32 0, %v2111
    %v2113 = vrot.slane %v2098, %v2112
    %v2118 = vunpack.c.l.b16 %v2100
    %v2119 = vunpack.c.l.b16 %v2101
    %v2120 = vunpack.c.l.b16 %v2102
    %v2121 = vunpack.c.l.b16 %v2103
    %v2122 = vpack.c.b16 %v2119, %v2118
    %v2123 = vpack.c.b16 %v2121, %v2120
    %v2127 = vsel %vm50, %v2109, 0
    %2129 = vmatprep.subr.bf16.mxu0 0
    %2130 = vmatpush1.bf16.msra.mxu0 %v2122
    %2131 = vmatprep.subr.bf16.mxu0 0
    %2132 = vmatpush1.bf16.msra.mxu0 %v2123
    %2133 = vmatprep.subr.bf16.mxu0 0
    %2134 = vmatpush1.bf16.msra.mxu0 0
    %2135 = vmatprep.subr.bf16.mxu0 0
    %2136 = vmatpush1.bf16.msra.mxu0 0
    %2137 = vmatprep.subr.bf16.mxu0 0
    %2138 = vmatpush1.bf16.msra.mxu0 0
    %2139 = vmatprep.subr.bf16.mxu0 0
    %2140 = vmatpush1.bf16.msra.mxu0 0
    %2141 = vmatprep.subr.bf16.mxu0 0
    %2142 = vmatpush1.bf16.msra.mxu0 0
    %2143 = vmatprep.subr.bf16.mxu0 0
    %2144 = vmatpush1.bf16.msra.mxu0 0
    %2145 = vmatprep.subr.bf16.mxu0 0
    %2146 = vmatpush1.bf16.msra.mxu0 0
    %2147 = vmatprep.subr.bf16.mxu0 0
    %2148 = vmatpush1.bf16.msra.mxu0 0
    %2149 = vmatprep.subr.bf16.mxu0 0
    %2150 = vmatpush1.bf16.msra.mxu0 0
    %2151 = vmatprep.subr.bf16.mxu0 0
    %2152 = vmatpush1.bf16.msra.mxu0 0
    %2153 = vmatprep.subr.bf16.mxu0 0
    %2154 = vmatpush1.bf16.msra.mxu0 0
    %2155 = vmatprep.subr.bf16.mxu0 0
    %2156 = vmatpush1.bf16.msra.mxu0 0
    %2157 = vmatprep.subr.bf16.mxu0 0
    %2158 = vmatpush1.bf16.msra.mxu0 0
    %2159 = vmatprep.subr.bf16.mxu0 0
    %2160 = vmatpush1.bf16.msra.mxu0 0
    %2161 = vmatprep.mubr.bf16.mxu0 0
    %2162 = vmatmul.mubr.bf16.gmra.mrb[0].mxu0 %v2127
    %v2163 = vpop.f32.mrb[0].mxu0
    %v2164 = vadd.f32 %v2113, %v2163
    %v2165 = vpop.f32.mrb[0].mxu0
    %v2166 = vpop.f32.mrb[0].mxu0
    %v2167 = vadd.f32 %v2113, %v2166
    %v2168 = vpop.f32.mrb[0].mxu0
    %2169 = vdwg.mxu0
    %2171 = vrot.lane.b32.xlu0 %v2164, 96
    %v2172 = vpop.permute.xlu0 %2171
    %v2173 = vsel %vm163, %v2164, 0
    %v2175 = vsel %vm163, %v2172, 0
    %2177 = vmatprep.subr.mxu0 0.0
    %2178 = vmatpush1.xpose.msra.mxu0 %v2175
    %2179 = vmatprep.subr.mxu0 0.0
    %2180 = vmatpush1.xpose.msra.mxu0 0.0
    %2181 = vmatprep.subr.mxu0 0.0
    %2182 = vmatpush1.xpose.msra.mxu0 0.0
    %2183 = vmatprep.subr.mxu0 0.0
    %2184 = vmatpush1.xpose.msra.mxu0 0.0
    %2185 = vmatprep.subr.mxu0 0.0
    %2186 = vmatpush1.xpose.msra.mxu0 0.0
    %2187 = vmatprep.subr.mxu0 0.0
    %2188 = vmatpush1.xpose.msra.mxu0 0.0
    %2189 = vmatprep.subr.mxu0 0.0
    %2190 = vmatpush1.xpose.msra.mxu0 0.0
    %2191 = vmatprep.subr.mxu0 0.0
    %2192 = vmatpush1.xpose.msra.mxu0 0.0
    %2193 = vmatprep.subr.mxu0 0.0
    %2194 = vmatpush1.xpose.msra.mxu0 0.0
    %2195 = vmatprep.subr.mxu0 0.0
    %2196 = vmatpush1.xpose.msra.mxu0 0.0
    %2197 = vmatprep.subr.mxu0 0.0
    %2198 = vmatpush1.xpose.msra.mxu0 0.0
    %2199 = vmatprep.subr.mxu0 0.0
    %2200 = vmatpush1.xpose.msra.mxu0 0.0
    %2201 = vmatprep.subr.mxu0 0.0
    %2202 = vmatpush1.xpose.msra.mxu0 0.0
    %2203 = vmatprep.subr.mxu0 0.0
    %2204 = vmatpush1.xpose.msra.mxu0 0.0
    %2205 = vmatprep.subr.mxu0 0.0
    %2206 = vmatpush1.xpose.msra.mxu0 0.0
    %2207 = vmatprep.subr.mxu0 0.0
    %2208 = vmatpush1.xpose.msra.mxu0 0.0
    %2209 = vmatprep.subr.mxu0 0.0
    %2210 = vmatpush1.xpose.msra.mxu0 0.0
    %2211 = vmatprep.subr.mxu0 0.0
    %2212 = vmatpush1.xpose.msra.mxu0 0.0
    %2213 = vmatprep.subr.mxu0 0.0
    %2214 = vmatpush1.xpose.msra.mxu0 0.0
    %2215 = vmatprep.subr.mxu0 0.0
    %2216 = vmatpush1.xpose.msra.mxu0 0.0
    %2217 = vmatprep.subr.mxu0 0.0
    %2218 = vmatpush1.xpose.msra.mxu0 0.0
    %2219 = vmatprep.subr.mxu0 0.0
    %2220 = vmatpush1.xpose.msra.mxu0 0.0
    %2221 = vmatprep.subr.mxu0 0.0
    %2222 = vmatpush1.xpose.msra.mxu0 0.0
    %2223 = vmatprep.subr.mxu0 0.0
    %2224 = vmatpush1.xpose.msra.mxu0 0.0
    %2225 = vmatprep.subr.mxu0 0.0
    %2226 = vmatpush1.xpose.msra.mxu0 0.0
    %2227 = vmatprep.subr.mxu0 0.0
    %2228 = vmatpush1.xpose.msra.mxu0 0.0
    %2229 = vmatprep.subr.mxu0 0.0
    %2230 = vmatpush1.xpose.msra.mxu0 0.0
    %2231 = vmatprep.subr.mxu0 0.0
    %2232 = vmatpush1.xpose.msra.mxu0 0.0
    %2233 = vmatprep.subr.mxu0 0.0
    %2234 = vmatpush1.xpose.msra.mxu0 0.0
    %2235 = vmatprep.subr.mxu0 0.0
    %2236 = vmatpush1.xpose.msra.mxu0 0.0
    %2237 = vmatprep.subr.mxu0 0.0
    %2238 = vmatpush1.xpose.msra.mxu0 0.0
    %2239 = vmatprep.subr.mxu0 0.0
    %2240 = vmatpush1.xpose.msra.mxu0 0.0
    %2241 = vmatprep.mubr.f32.mxu0 0.0
    %2242 = vmatmul.mubr.f32.gmra.mrb[0].mxu0 %v2173
    %v2243 = vpop.f32.mrb[0].mxu0
    %v2244 = vadd.f32 %v41, %v2243
    %v2245 = vpop.f32.mrb[0].mxu0
    %2246 = vdwg.mxu0
    %v2247 = vsel %vm163, %v2244, -inf
    %2248 = vmax.xlane.f32.xlu0 %v2247
    %v2249 = vpop.xlane.xlu0 %2248
    %v2250 = vsub.f32 %v2244, %v2249
    %v2251 = vmul.f32 %v2250, 1.442695
    %v2252 = vpow.pop %v2251
    %v2253 = vsel %vm163, %v2252, 0.0
    %2254 = vadd.xlane.f32.xlu0 %v2253
    %v2255 = vpop.xlane.xlu0 %2254
    %v2256 = vrcp.pop %v2255
    %v2257 = vmul.f32 %v2252, %v2256
    %2258 = vrot.lane.b32.xlu0 %v2164, 64
    %v2259 = vpop.permute.xlu0 %2258
    %v2262 = vsel %vm163, %v2257, 0
    %2264 = vmatprep.subr.mxu0 0.0
    %2265 = vmatpush1.msra.mxu0 %v2259
    %2266 = vmatprep.subr.mxu0 0.0
    %2267 = vmatpush1.msra.mxu0 0.0
    %2268 = vmatprep.subr.mxu0 0.0
    %2269 = vmatpush1.msra.mxu0 0.0
    %2270 = vmatprep.subr.mxu0 0.0
    %2271 = vmatpush1.msra.mxu0 0.0
    %2272 = vmatprep.subr.mxu0 0.0
    %2273 = vmatpush1.msra.mxu0 0.0
    %2274 = vmatprep.subr.mxu0 0.0
    %2275 = vmatpush1.msra.mxu0 0.0
    %2276 = vmatprep.subr.mxu0 0.0
    %2277 = vmatpush1.msra.mxu0 0.0
    %2278 = vmatprep.subr.mxu0 0.0
    %2279 = vmatpush1.msra.mxu0 0.0
    %2280 = vmatprep.subr.mxu0 0.0
    %2281 = vmatpush1.msra.mxu0 0.0
    %2282 = vmatprep.subr.mxu0 0.0
    %2283 = vmatpush1.msra.mxu0 0.0
    %2284 = vmatprep.subr.mxu0 0.0
    %2285 = vmatpush1.msra.mxu0 0.0
    %2286 = vmatprep.subr.mxu0 0.0
    %2287 = vmatpush1.msra.mxu0 0.0
    %2288 = vmatprep.subr.mxu0 0.0
    %2289 = vmatpush1.msra.mxu0 0.0
    %2290 = vmatprep.subr.mxu0 0.0
    %2291 = vmatpush1.msra.mxu0 0.0
    %2292 = vmatprep.subr.mxu0 0.0
    %2293 = vmatpush1.msra.mxu0 0.0
    %2294 = vmatprep.subr.mxu0 0.0
    %2295 = vmatpush1.msra.mxu0 0.0
    %2296 = vmatprep.subr.mxu0 0.0
    %2297 = vmatpush1.msra.mxu0 0.0
    %2298 = vmatprep.subr.mxu0 0.0
    %2299 = vmatpush1.msra.mxu0 0.0
    %2300 = vmatprep.subr.mxu0 0.0
    %2301 = vmatpush1.msra.mxu0 0.0
    %2302 = vmatprep.subr.mxu0 0.0
    %2303 = vmatpush1.msra.mxu0 0.0
    %2304 = vmatprep.subr.mxu0 0.0
    %2305 = vmatpush1.msra.mxu0 0.0
    %2306 = vmatprep.subr.mxu0 0.0
    %2307 = vmatpush1.msra.mxu0 0.0
    %2308 = vmatprep.subr.mxu0 0.0
    %2309 = vmatpush1.msra.mxu0 0.0
    %2310 = vmatprep.subr.mxu0 0.0
    %2311 = vmatpush1.msra.mxu0 0.0
    %2312 = vmatprep.subr.mxu0 0.0
    %2313 = vmatpush1.msra.mxu0 0.0
    %2314 = vmatprep.subr.mxu0 0.0
    %2315 = vmatpush1.msra.mxu0 0.0
    %2316 = vmatprep.subr.mxu0 0.0
    %2317 = vmatpush1.msra.mxu0 0.0
    %2318 = vmatprep.subr.mxu0 0.0
    %2319 = vmatpush1.msra.mxu0 0.0
    %2320 = vmatprep.subr.mxu0 0.0
    %2321 = vmatpush1.msra.mxu0 0.0
    %2322 = vmatprep.subr.mxu0 0.0
    %2323 = vmatpush1.msra.mxu0 0.0
    %2324 = vmatprep.subr.mxu0 0.0
    %2325 = vmatpush1.msra.mxu0 0.0
    %2326 = vmatprep.subr.mxu0 0.0
    %2327 = vmatpush1.msra.mxu0 0.0
    %2328 = vmatprep.mubr.f32.mxu0 0.0
    %2329 = vmatmul.mubr.f32.gmra.mrb[0].mxu0 %v2262
    %v2330 = vpop.f32.mrb[0].mxu0
    %v2331 = vadd.f32 0.0, %v2330
    %v2332 = vpop.f32.mrb[0].mxu0
    %2333 = vdwg.mxu0
    %v2334 = vpack.c.bf16 %v2331, %v2331
    %2335 = vrot.lane.b32.xlu0 %v2164, 120
    %v2336 = vpop.permute.xlu0 %2335
    %2337 = vrot.lane.b32.xlu0 %v2164, 88
    %v2338 = vpop.permute.xlu0 %2337
    %v2339 = vsel %vm163, %v2336, 0
    %v2341 = vsel %vm163, %v2338, 0
    %2343 = vmatprep.subr.mxu0 0.0
    %2344 = vmatpush1.xpose.msra.mxu0 %v2341
    %2345 = vmatprep.subr.mxu0 0.0
    %2346 = vmatpush1.xpose.msra.mxu0 0.0
    %2347 = vmatprep.subr.mxu0 0.0
    %2348 = vmatpush1.xpose.msra.mxu0 0.0
    %2349 = vmatprep.subr.mxu0 0.0
    %2350 = vmatpush1.xpose.msra.mxu0 0.0
    %2351 = vmatprep.subr.mxu0 0.0
    %2352 = vmatpush1.xpose.msra.mxu0 0.0
    %2353 = vmatprep.subr.mxu0 0.0
    %2354 = vmatpush1.xpose.msra.mxu0 0.0
    %2355 = vmatprep.subr.mxu0 0.0
    %2356 = vmatpush1.xpose.msra.mxu0 0.0
    %2357 = vmatprep.subr.mxu0 0.0
    %2358 = vmatpush1.xpose.msra.mxu0 0.0
    %2359 = vmatprep.subr.mxu0 0.0
    %2360 = vmatpush1.xpose.msra.mxu0 0.0
    %2361 = vmatprep.subr.mxu0 0.0
    %2362 = vmatpush1.xpose.msra.mxu0 0.0
    %2363 = vmatprep.subr.mxu0 0.0
    %2364 = vmatpush1.xpose.msra.mxu0 0.0
    %2365 = vmatprep.subr.mxu0 0.0
    %2366 = vmatpush1.xpose.msra.mxu0 0.0
    %2367 = vmatprep.subr.mxu0 0.0
    %2368 = vmatpush1.xpose.msra.mxu0 0.0
    %2369 = vmatprep.subr.mxu0 0.0
    %2370 = vmatpush1.xpose.msra.mxu0 0.0
    %2371 = vmatprep.subr.mxu0 0.0
    %2372 = vmatpush1.xpose.msra.mxu0 0.0
    %2373 = vmatprep.subr.mxu0 0.0
    %2374 = vmatpush1.xpose.msra.mxu0 0.0
    %2375 = vmatprep.subr.mxu0 0.0
    %2376 = vmatpush1.xpose.msra.mxu0 0.0
    %2377 = vmatprep.subr.mxu0 0.0
    %2378 = vmatpush1.xpose.msra.mxu0 0.0
    %2379 = vmatprep.subr.mxu0 0.0
    %2380 = vmatpush1.xpose.msra.mxu0 0.0
    %2381 = vmatprep.subr.mxu0 0.0
    %2382 = vmatpush1.xpose.msra.mxu0 0.0
    %2383 = vmatprep.subr.mxu0 0.0
    %2384 = vmatpush1.xpose.msra.mxu0 0.0
    %2385 = vmatprep.subr.mxu0 0.0
    %2386 = vmatpush1.xpose.msra.mxu0 0.0
    %2387 = vmatprep.subr.mxu0 0.0
    %2388 = vmatpush1.xpose.msra.mxu0 0.0
    %2389 = vmatprep.subr.mxu0 0.0
    %2390 = vmatpush1.xpose.msra.mxu0 0.0
    %2391 = vmatprep.subr.mxu0 0.0
    %2392 = vmatpush1.xpose.msra.mxu0 0.0
    %2393 = vmatprep.subr.mxu0 0.0
    %2394 = vmatpush1.xpose.msra.mxu0 0.0
    %2395 = vmatprep.subr.mxu0 0.0
    %2396 = vmatpush1.xpose.msra.mxu0 0.0
    %2397 = vmatprep.subr.mxu0 0.0
    %2398 = vmatpush1.xpose.msra.mxu0 0.0
    %2399 = vmatprep.subr.mxu0 0.0
    %2400 = vmatpush1.xpose.msra.mxu0 0.0
    %2401 = vmatprep.subr.mxu0 0.0
    %2402 = vmatpush1.xpose.msra.mxu0 0.0
    %2403 = vmatprep.subr.mxu0 0.0
    %2404 = vmatpush1.xpose.msra.mxu0 0.0
    %2405 = vmatprep.subr.mxu0 0.0
    %2406 = vmatpush1.xpose.msra.mxu0 0.0
    %2407 = vmatprep.mubr.f32.mxu0 0.0
    %2408 = vmatmul.mubr.f32.gmra.mrb[0].mxu0 %v2339
    %v2409 = vpop.f32.mrb[0].mxu0
    %v2410 = vadd.f32 %v41, %v2409
    %v2411 = vpop.f32.mrb[0].mxu0
    %2412 = vdwg.mxu0
    %v2413 = vsel %vm163, %v2410, -inf
    %2414 = vmax.xlane.f32.xlu0 %v2413
    %v2415 = vpop.xlane.xlu0 %2414
    %v2416 = vsub.f32 %v2410, %v2415
    %v2417 = vmul.f32 %v2416, 1.442695
    %v2418 = vpow.pop %v2417
    %v2419 = vsel %vm163, %v2418, 0.0
    %2420 = vadd.xlane.f32.xlu0 %v2419
    %v2421 = vpop.xlane.xlu0 %2420
    %v2422 = vrcp.pop %v2421
    %v2423 = vmul.f32 %v2418, %v2422
    %2424 = vrot.lane.b32.xlu0 %v2164, 56
    %v2425 = vpop.permute.xlu0 %2424
    %v2428 = vsel %vm163, %v2423, 0
    %2430 = vmatprep.subr.mxu0 0.0
    %2431 = vmatpush1.msra.mxu0 %v2425
    %2432 = vmatprep.subr.mxu0 0.0
    %2433 = vmatpush1.msra.mxu0 0.0
    %2434 = vmatprep.subr.mxu0 0.0
    %2435 = vmatpush1.msra.mxu0 0.0
    %2436 = vmatprep.subr.mxu0 0.0
    %2437 = vmatpush1.msra.mxu0 0.0
    %2438 = vmatprep.subr.mxu0 0.0
    %2439 = vmatpush1.msra.mxu0 0.0
    %2440 = vmatprep.subr.mxu0 0.0
    %2441 = vmatpush1.msra.mxu0 0.0
    %2442 = vmatprep.subr.mxu0 0.0
    %2443 = vmatpush1.msra.mxu0 0.0
    %2444 = vmatprep.subr.mxu0 0.0
    %2445 = vmatpush1.msra.mxu0 0.0
    %2446 = vmatprep.subr.mxu0 0.0
    %2447 = vmatpush1.msra.mxu0 0.0
    %2448 = vmatprep.subr.mxu0 0.0
    %2449 = vmatpush1.msra.mxu0 0.0
    %2450 = vmatprep.subr.mxu0 0.0
    %2451 = vmatpush1.msra.mxu0 0.0
    %2452 = vmatprep.subr.mxu0 0.0
    %2453 = vmatpush1.msra.mxu0 0.0
    %2454 = vmatprep.subr.mxu0 0.0
    %2455 = vmatpush1.msra.mxu0 0.0
    %2456 = vmatprep.subr.mxu0 0.0
    %2457 = vmatpush1.msra.mxu0 0.0
    %2458 = vmatprep.subr.mxu0 0.0
    %2459 = vmatpush1.msra.mxu0 0.0
    %2460 = vmatprep.subr.mxu0 0.0
    %2461 = vmatpush1.msra.mxu0 0.0
    %2462 = vmatprep.subr.mxu0 0.0
    %2463 = vmatpush1.msra.mxu0 0.0
    %2464 = vmatprep.subr.mxu0 0.0
    %2465 = vmatpush1.msra.mxu0 0.0
    %2466 = vmatprep.subr.mxu0 0.0
    %2467 = vmatpush1.msra.mxu0 0.0
    %2468 = vmatprep.subr.mxu0 0.0
    %2469 = vmatpush1.msra.mxu0 0.0
    %2470 = vmatprep.subr.mxu0 0.0
    %2471 = vmatpush1.msra.mxu0 0.0
    %2472 = vmatprep.subr.mxu0 0.0
    %2473 = vmatpush1.msra.mxu0 0.0
    %2474 = vmatprep.subr.mxu0 0.0
    %2475 = vmatpush1.msra.mxu0 0.0
    %2476 = vmatprep.subr.mxu0 0.0
    %2477 = vmatpush1.msra.mxu0 0.0
    %2478 = vmatprep.subr.mxu0 0.0
    %2479 = vmatpush1.msra.mxu0 0.0
    %2480 = vmatprep.subr.mxu0 0.0
    %2481 = vmatpush1.msra.mxu0 0.0
    %2482 = vmatprep.subr.mxu0 0.0
    %2483 = vmatpush1.msra.mxu0 0.0
    %2484 = vmatprep.subr.mxu0 0.0
    %2485 = vmatpush1.msra.mxu0 0.0
    %2486 = vmatprep.subr.mxu0 0.0
    %2487 = vmatpush1.msra.mxu0 0.0
    %2488 = vmatprep.subr.mxu0 0.0
    %2489 = vmatpush1.msra.mxu0 0.0
    %2490 = vmatprep.subr.mxu0 0.0
    %2491 = vmatpush1.msra.mxu0 0.0
    %2492 = vmatprep.subr.mxu0 0.0
    %2493 = vmatpush1.msra.mxu0 0.0
    %2494 = vmatprep.mubr.f32.mxu0 0.0
    %2495 = vmatmul.mubr.f32.gmra.mrb[0].mxu0 %v2428
    %v2496 = vpop.f32.mrb[0].mxu0
    %v2497 = vadd.f32 0.0, %v2496
    %v2498 = vpop.f32.mrb[0].mxu0
    %2499 = vdwg.mxu0
    %v2500 = vpack.c.bf16 %v2497, %v2497
    %v2502 = vsel %vm163, %v2500, 0
    %v2505 = vsel %vm495, %v2106, 0
    %2507 = vmatprep.subr.bf16.mxu0 0
    %2508 = vmatpush1.bf16.msra.mxu0 %v2505
    %2509 = vmatprep.subr.bf16.mxu0 0
    %2510 = vmatpush1.bf16.msra.mxu0 0
    %2511 = vmatprep.subr.bf16.mxu0 0
    %2512 = vmatpush1.bf16.msra.mxu0 0
    %2513 = vmatprep.subr.bf16.mxu0 0
    %2514 = vmatpush1.bf16.msra.mxu0 0
    %2515 = vmatprep.subr.bf16.mxu0 0
    %2516 = vmatpush1.bf16.msra.mxu0 0
    %2517 = vmatprep.subr.bf16.mxu0 0
    %2518 = vmatpush1.bf16.msra.mxu0 0
    %2519 = vmatprep.subr.bf16.mxu0 0
    %2520 = vmatpush1.bf16.msra.mxu0 0
    %2521 = vmatprep.subr.bf16.mxu0 0
    %2522 = vmatpush1.bf16.msra.mxu0 0
    %2523 = vmatprep.subr.bf16.mxu0 0
    %2524 = vmatpush1.bf16.msra.mxu0 0
    %2525 = vmatprep.subr.bf16.mxu0 0
    %2526 = vmatpush1.bf16.msra.mxu0 0
    %2527 = vmatprep.subr.bf16.mxu0 0
    %2528 = vmatpush1.bf16.msra.mxu0 0
    %2529 = vmatprep.subr.bf16.mxu0 0
    %2530 = vmatpush1.bf16.msra.mxu0 0
    %2531 = vmatprep.subr.bf16.mxu0 0
    %2532 = vmatpush1.bf16.msra.mxu0 0
    %2533 = vmatprep.subr.bf16.mxu0 0
    %2534 = vmatpush1.bf16.msra.mxu0 0
    %2535 = vmatprep.subr.bf16.mxu0 0
    %2536 = vmatpush1.bf16.msra.mxu0 0
    %2537 = vmatprep.subr.bf16.mxu0 0
    %2538 = vmatpush1.bf16.msra.mxu0 0
    %2539 = vmatprep.mubr.bf16.mxu0 0
    %2540 = vmatmul.mubr.bf16.gmra.mrb[0].mxu0 %v2502
    %v2541 = vpop.f32.mrb[0].mxu0
    %v2542 = vadd.f32 0.0, %v2541
    %v2543 = vpop.f32.mrb[0].mxu0
    %v2544 = vpop.f32.mrb[0].mxu0
    %v2545 = vpop.f32.mrb[0].mxu0
    %2546 = vdwg.mxu0
    %v2548 = vsel %vm163, %v2334, 0
    %v2551 = vsel %vm495, %v2105, 0
    %2553 = vmatprep.subr.bf16.mxu0 0
    %2554 = vmatpush1.bf16.msra.mxu0 %v2551
    %2555 = vmatprep.subr.bf16.mxu0 0
    %2556 = vmatpush1.bf16.msra.mxu0 0
    %2557 = vmatprep.subr.bf16.mxu0 0
    %2558 = vmatpush1.bf16.msra.mxu0 0
    %2559 = vmatprep.subr.bf16.mxu0 0
    %2560 = vmatpush1.bf16.msra.mxu0 0
    %2561 = vmatprep.subr.bf16.mxu0 0
    %2562 = vmatpush1.bf16.msra.mxu0 0
    %2563 = vmatprep.subr.bf16.mxu0 0
    %2564 = vmatpush1.bf16.msra.mxu0 0
    %2565 = vmatprep.subr.bf16.mxu0 0
    %2566 = vmatpush1.bf16.msra.mxu0 0
    %2567 = vmatprep.subr.bf16.mxu0 0
    %2568 = vmatpush1.bf16.msra.mxu0 0
    %2569 = vmatprep.subr.bf16.mxu0 0
    %2570 = vmatpush1.bf16.msra.mxu0 0
    %2571 = vmatprep.subr.bf16.mxu0 0
    %2572 = vmatpush1.bf16.msra.mxu0 0
    %2573 = vmatprep.subr.bf16.mxu0 0
    %2574 = vmatpush1.bf16.msra.mxu0 0
    %2575 = vmatprep.subr.bf16.mxu0 0
    %2576 = vmatpush1.bf16.msra.mxu0 0
    %2577 = vmatprep.subr.bf16.mxu0 0
    %2578 = vmatpush1.bf16.msra.mxu0 0
    %2579 = vmatprep.subr.bf16.mxu0 0
    %2580 = vmatpush1.bf16.msra.mxu0 0
    %2581 = vmatprep.subr.bf16.mxu0 0
    %2582 = vmatpush1.bf16.msra.mxu0 0
    %2583 = vmatprep.subr.bf16.mxu0 0
    %2584 = vmatpush1.bf16.msra.mxu0 0
    %2585 = vmatprep.mubr.bf16.mxu0 0
    %2586 = vmatmul.mubr.bf16.gmra.mrb[0].mxu0 %v2548
    %v2587 = vpop.f32.mrb[0].mxu0
    %v2588 = vadd.f32 %v2542, %v2587
    %v2589 = vpop.f32.mrb[0].mxu0
    %v2590 = vpop.f32.mrb[0].mxu0
    %v2591 = vpop.f32.mrb[0].mxu0
    %2592 = vdwg.mxu0
    %2593 = vrot.lane.b32.xlu0 %v2164, 112
    %v2594 = vpop.permute.xlu0 %2593
    %2595 = vrot.lane.b32.xlu0 %v2164, 80
    %v2596 = vpop.permute.xlu0 %2595
    %v2597 = vsel %vm163, %v2594, 0
    %v2599 = vsel %vm163, %v2596, 0
    %2601 = vmatprep.subr.mxu0 0.0
    %2602 = vmatpush1.xpose.msra.mxu0 %v2599
    %2603 = vmatprep.subr.mxu0 0.0
    %2604 = vmatpush1.xpose.msra.mxu0 0.0
    %2605 = vmatprep.subr.mxu0 0.0
    %2606 = vmatpush1.xpose.msra.mxu0 0.0
    %2607 = vmatprep.subr.mxu0 0.0
    %2608 = vmatpush1.xpose.msra.mxu0 0.0
    %2609 = vmatprep.subr.mxu0 0.0
    %2610 = vmatpush1.xpose.msra.mxu0 0.0
    %2611 = vmatprep.subr.mxu0 0.0
    %2612 = vmatpush1.xpose.msra.mxu0 0.0
    %2613 = vmatprep.subr.mxu0 0.0
    %2614 = vmatpush1.xpose.msra.mxu0 0.0
    %2615 = vmatprep.subr.mxu0 0.0
    %2616 = vmatpush1.xpose.msra.mxu0 0.0
    %2617 = vmatprep.subr.mxu0 0.0
    %2618 = vmatpush1.xpose.msra.mxu0 0.0
    %2619 = vmatprep.subr.mxu0 0.0
    %2620 = vmatpush1.xpose.msra.mxu0 0.0
    %2621 = vmatprep.subr.mxu0 0.0
    %2622 = vmatpush1.xpose.msra.mxu0 0.0
    %2623 = vmatprep.subr.mxu0 0.0
    %2624 = vmatpush1.xpose.msra.mxu0 0.0
    %2625 = vmatprep.subr.mxu0 0.0
    %2626 = vmatpush1.xpose.msra.mxu0 0.0
    %2627 = vmatprep.subr.mxu0 0.0
    %2628 = vmatpush1.xpose.msra.mxu0 0.0
    %2629 = vmatprep.subr.mxu0 0.0
    %2630 = vmatpush1.xpose.msra.mxu0 0.0
    %2631 = vmatprep.subr.mxu0 0.0
    %2632 = vmatpush1.xpose.msra.mxu0 0.0
    %2633 = vmatprep.subr.mxu0 0.0
    %2634 = vmatpush1.xpose.msra.mxu0 0.0
    %2635 = vmatprep.subr.mxu0 0.0
    %2636 = vmatpush1.xpose.msra.mxu0 0.0
    %2637 = vmatprep.subr.mxu0 0.0
    %2638 = vmatpush1.xpose.msra.mxu0 0.0
    %2639 = vmatprep.subr.mxu0 0.0
    %2640 = vmatpush1.xpose.msra.mxu0 0.0
    %2641 = vmatprep.subr.mxu0 0.0
    %2642 = vmatpush1.xpose.msra.mxu0 0.0
    %2643 = vmatprep.subr.mxu0 0.0
    %2644 = vmatpush1.xpose.msra.mxu0 0.0
    %2645 = vmatprep.subr.mxu0 0.0
    %2646 = vmatpush1.xpose.msra.mxu0 0.0
    %2647 = vmatprep.subr.mxu0 0.0
    %2648 = vmatpush1.xpose.msra.mxu0 0.0
    %2649 = vmatprep.subr.mxu0 0.0
    %2650 = vmatpush1.xpose.msra.mxu0 0.0
    %2651 = vmatprep.subr.mxu0 0.0
    %2652 = vmatpush1.xpose.msra.mxu0 0.0
    %2653 = vmatprep.subr.mxu0 0.0
    %2654 = vmatpush1.xpose.msra.mxu0 0.0
    %2655 = vmatprep.subr.mxu0 0.0
    %2656 = vmatpush1.xpose.msra.mxu0 0.0
    %2657 = vmatprep.subr.mxu0 0.0
    %2658 = vmatpush1.xpose.msra.mxu0 0.0
    %2659 = vmatprep.subr.mxu0 0.0
    %2660 = vmatpush1.xpose.msra.mxu0 0.0
    %2661 = vmatprep.subr.mxu0 0.0
    %2662 = vmatpush1.xpose.msra.mxu0 0.0
    %2663 = vmatprep.subr.mxu0 0.0
    %2664 = vmatpush1.xpose.msra.mxu0 0.0
    %2665 = vmatprep.mubr.f32.mxu0 0.0
    %2666 = vmatmul.mubr.f32.gmra.mrb[0].mxu0 %v2597
    %v2667 = vpop.f32.mrb[0].mxu0
    %v2668 = vadd.f32 %v41, %v2667
    %v2669 = vpop.f32.mrb[0].mxu0
    %2670 = vdwg.mxu0
    %v2671 = vsel %vm163, %v2668, -inf
    %2672 = vmax.xlane.f32.xlu0 %v2671
    %v2673 = vpop.xlane.xlu0 %2672
    %v2674 = vsub.f32 %v2668, %v2673
    %v2675 = vmul.f32 %v2674, 1.442695
    %v2676 = vpow.pop %v2675
    %v2677 = vsel %vm163, %v2676, 0.0
    %2678 = vadd.xlane.f32.xlu0 %v2677
    %v2679 = vpop.xlane.xlu0 %2678
    %v2680 = vrcp.pop %v2679
    %v2681 = vmul.f32 %v2676, %v2680
    %2682 = vrot.lane.b32.xlu0 %v2164, 48
    %v2683 = vpop.permute.xlu0 %2682
    %v2686 = vsel %vm163, %v2681, 0
    %2688 = vmatprep.subr.mxu0 0.0
    %2689 = vmatpush1.msra.mxu0 %v2683
    %2690 = vmatprep.subr.mxu0 0.0
    %2691 = vmatpush1.msra.mxu0 0.0
    %2692 = vmatprep.subr.mxu0 0.0
    %2693 = vmatpush1.msra.mxu0 0.0
    %2694 = vmatprep.subr.mxu0 0.0
    %2695 = vmatpush1.msra.mxu0 0.0
    %2696 = vmatprep.subr.mxu0 0.0
    %2697 = vmatpush1.msra.mxu0 0.0
    %2698 = vmatprep.subr.mxu0 0.0
    %2699 = vmatpush1.msra.mxu0 0.0
    %2700 = vmatprep.subr.mxu0 0.0
    %2701 = vmatpush1.msra.mxu0 0.0
    %2702 = vmatprep.subr.mxu0 0.0
    %2703 = vmatpush1.msra.mxu0 0.0
    %2704 = vmatprep.subr.mxu0 0.0
    %2705 = vmatpush1.msra.mxu0 0.0
    %2706 = vmatprep.subr.mxu0 0.0
    %2707 = vmatpush1.msra.mxu0 0.0
    %2708 = vmatprep.subr.mxu0 0.0
    %2709 = vmatpush1.msra.mxu0 0.0
    %2710 = vmatprep.subr.mxu0 0.0
    %2711 = vmatpush1.msra.mxu0 0.0
    %2712 = vmatprep.subr.mxu0 0.0
    %2713 = vmatpush1.msra.mxu0 0.0
    %2714 = vmatprep.subr.mxu0 0.0
    %2715 = vmatpush1.msra.mxu0 0.0
    %2716 = vmatprep.subr.mxu0 0.0
    %2717 = vmatpush1.msra.mxu0 0.0
    %2718 = vmatprep.subr.mxu0 0.0
    %2719 = vmatpush1.msra.mxu0 0.0
    %2720 = vmatprep.subr.mxu0 0.0
    %2721 = vmatpush1.msra.mxu0 0.0
    %2722 = vmatprep.subr.mxu0 0.0
    %2723 = vmatpush1.msra.mxu0 0.0
    %2724 = vmatprep.subr.mxu0 0.0
    %2725 = vmatpush1.msra.mxu0 0.0
    %2726 = vmatprep.subr.mxu0 0.0
    %2727 = vmatpush1.msra.mxu0 0.0
    %2728 = vmatprep.subr.mxu0 0.0
    %2729 = vmatpush1.msra.mxu0 0.0
    %2730 = vmatprep.subr.mxu0 0.0
    %2731 = vmatpush1.msra.mxu0 0.0
    %2732 = vmatprep.subr.mxu0 0.0
    %2733 = vmatpush1.msra.mxu0 0.0
    %2734 = vmatprep.subr.mxu0 0.0
    %2735 = vmatpush1.msra.mxu0 0.0
    %2736 = vmatprep.subr.mxu0 0.0
    %2737 = vmatpush1.msra.mxu0 0.0
    %2738 = vmatprep.subr.mxu0 0.0
    %2739 = vmatpush1.msra.mxu0 0.0
    %2740 = vmatprep.subr.mxu0 0.0
    %2741 = vmatpush1.msra.mxu0 0.0
    %2742 = vmatprep.subr.mxu0 0.0
    %2743 = vmatpush1.msra.mxu0 0.0
    %2744 = vmatprep.subr.mxu0 0.0
    %2745 = vmatpush1.msra.mxu0 0.0
    %2746 = vmatprep.subr.mxu0 0.0
    %2747 = vmatpush1.msra.mxu0 0.0
    %2748 = vmatprep.subr.mxu0 0.0
    %2749 = vmatpush1.msra.mxu0 0.0
    %2750 = vmatprep.subr.mxu0 0.0
    %2751 = vmatpush1.msra.mxu0 0.0
    %2752 = vmatprep.mubr.f32.mxu0 0.0
    %2753 = vmatmul.mubr.f32.gmra.mrb[0].mxu0 %v2686
    %v2754 = vpop.f32.mrb[0].mxu0
    %v2755 = vadd.f32 0.0, %v2754
    %v2756 = vpop.f32.mrb[0].mxu0
    %2757 = vdwg.mxu0
    %v2758 = vpack.c.bf16 %v2755, %v2755
    %v2760 = vsel %vm163, %v2758, 0
    %v2763 = vsel %vm495, %v2107, 0
    %2765 = vmatprep.subr.bf16.mxu0 0
    %2766 = vmatpush1.bf16.msra.mxu0 %v2763
    %2767 = vmatprep.subr.bf16.mxu0 0
    %2768 = vmatpush1.bf16.msra.mxu0 0
    %2769 = vmatprep.subr.bf16.mxu0 0
    %2770 = vmatpush1.bf16.msra.mxu0 0
    %2771 = vmatprep.subr.bf16.mxu0 0
    %2772 = vmatpush1.bf16.msra.mxu0 0
    %2773 = vmatprep.subr.bf16.mxu0 0
    %2774 = vmatpush1.bf16.msra.mxu0 0
    %2775 = vmatprep.subr.bf16.mxu0 0
    %2776 = vmatpush1.bf16.msra.mxu0 0
    %2777 = vmatprep.subr.bf16.mxu0 0
    %2778 = vmatpush1.bf16.msra.mxu0 0
    %2779 = vmatprep.subr.bf16.mxu0 0
    %2780 = vmatpush1.bf16.msra.mxu0 0
    %2781 = vmatprep.subr.bf16.mxu0 0
    %2782 = vmatpush1.bf16.msra.mxu0 0
    %2783 = vmatprep.subr.bf16.mxu0 0
    %2784 = vmatpush1.bf16.msra.mxu0 0
    %2785 = vmatprep.subr.bf16.mxu0 0
    %2786 = vmatpush1.bf16.msra.mxu0 0
    %2787 = vmatprep.subr.bf16.mxu0 0
    %2788 = vmatpush1.bf16.msra.mxu0 0
    %2789 = vmatprep.subr.bf16.mxu0 0
    %2790 = vmatpush1.bf16.msra.mxu0 0
    %2791 = vmatprep.subr.bf16.mxu0 0
    %2792 = vmatpush1.bf16.msra.mxu0 0
    %2793 = vmatprep.subr.bf16.mxu0 0
    %2794 = vmatpush1.bf16.msra.mxu0 0
    %2795 = vmatprep.subr.bf16.mxu0 0
    %2796 = vmatpush1.bf16.msra.mxu0 0
    %2797 = vmatprep.mubr.bf16.mxu0 0
    %2798 = vmatmul.mubr.bf16.gmra.mrb[0].mxu0 %v2760
    %v2799 = vpop.f32.mrb[0].mxu0
    %v2800 = vadd.f32 0.0, %v2799
    %v2801 = vpop.f32.mrb[0].mxu0
    %v2802 = vpop.f32.mrb[0].mxu0
    %v2803 = vpop.f32.mrb[0].mxu0
    %2804 = vdwg.mxu0
    %v2805 = vadd.f32 %v2588, %v2800
    %2806 = vrot.lane.b32.xlu0 %v2164, 104
    %v2807 = vpop.permute.xlu0 %2806
    %2808 = vrot.lane.b32.xlu0 %v2164, 72
    %v2809 = vpop.permute.xlu0 %2808
    %v2810 = vsel %vm163, %v2807, 0
    %v2812 = vsel %vm163, %v2809, 0
    %2814 = vmatprep.subr.mxu0 0.0
    %2815 = vmatpush1.xpose.msra.mxu0 %v2812
    %2816 = vmatprep.subr.mxu0 0.0
    %2817 = vmatpush1.xpose.msra.mxu0 0.0
    %2818 = vmatprep.subr.mxu0 0.0
    %2819 = vmatpush1.xpose.msra.mxu0 0.0
    %2820 = vmatprep.subr.mxu0 0.0
    %2821 = vmatpush1.xpose.msra.mxu0 0.0
    %2822 = vmatprep.subr.mxu0 0.0
    %2823 = vmatpush1.xpose.msra.mxu0 0.0
    %2824 = vmatprep.subr.mxu0 0.0
    %2825 = vmatpush1.xpose.msra.mxu0 0.0
    %2826 = vmatprep.subr.mxu0 0.0
    %2827 = vmatpush1.xpose.msra.mxu0 0.0
    %2828 = vmatprep.subr.mxu0 0.0
    %2829 = vmatpush1.xpose.msra.mxu0 0.0
    %2830 = vmatprep.subr.mxu0 0.0
    %2831 = vmatpush1.xpose.msra.mxu0 0.0
    %2832 = vmatprep.subr.mxu0 0.0
    %2833 = vmatpush1.xpose.msra.mxu0 0.0
    %2834 = vmatprep.subr.mxu0 0.0
    %2835 = vmatpush1.xpose.msra.mxu0 0.0
    %2836 = vmatprep.subr.mxu0 0.0
    %2837 = vmatpush1.xpose.msra.mxu0 0.0
    %2838 = vmatprep.subr.mxu0 0.0
    %2839 = vmatpush1.xpose.msra.mxu0 0.0
    %2840 = vmatprep.subr.mxu0 0.0
    %2841 = vmatpush1.xpose.msra.mxu0 0.0
    %2842 = vmatprep.subr.mxu0 0.0
    %2843 = vmatpush1.xpose.msra.mxu0 0.0
    %2844 = vmatprep.subr.mxu0 0.0
    %2845 = vmatpush1.xpose.msra.mxu0 0.0
    %2846 = vmatprep.subr.mxu0 0.0
    %2847 = vmatpush1.xpose.msra.mxu0 0.0
    %2848 = vmatprep.subr.mxu0 0.0
    %2849 = vmatpush1.xpose.msra.mxu0 0.0
    %2850 = vmatprep.subr.mxu0 0.0
    %2851 = vmatpush1.xpose.msra.mxu0 0.0
    %2852 = vmatprep.subr.mxu0 0.0
    %2853 = vmatpush1.xpose.msra.mxu0 0.0
    %2854 = vmatprep.subr.mxu0 0.0
    %2855 = vmatpush1.xpose.msra.mxu0 0.0
    %2856 = vmatprep.subr.mxu0 0.0
    %2857 = vmatpush1.xpose.msra.mxu0 0.0
    %2858 = vmatprep.subr.mxu0 0.0
    %2859 = vmatpush1.xpose.msra.mxu0 0.0
    %2860 = vmatprep.subr.mxu0 0.0
    %2861 = vmatpush1.xpose.msra.mxu0 0.0
    %2862 = vmatprep.subr.mxu0 0.0
    %2863 = vmatpush1.xpose.msra.mxu0 0.0
    %2864 = vmatprep.subr.mxu0 0.0
    %2865 = vmatpush1.xpose.msra.mxu0 0.0
    %2866 = vmatprep.subr.mxu0 0.0
    %2867 = vmatpush1.xpose.msra.mxu0 0.0
    %2868 = vmatprep.subr.mxu0 0.0
    %2869 = vmatpush1.xpose.msra.mxu0 0.0
    %2870 = vmatprep.subr.mxu0 0.0
    %2871 = vmatpush1.xpose.msra.mxu0 0.0
    %2872 = vmatprep.subr.mxu0 0.0
    %2873 = vmatpush1.xpose.msra.mxu0 0.0
    %2874 = vmatprep.subr.mxu0 0.0
    %2875 = vmatpush1.xpose.msra.mxu0 0.0
    %2876 = vmatprep.subr.mxu0 0.0
    %2877 = vmatpush1.xpose.msra.mxu0 0.0
    %2878 = vmatprep.mubr.f32.mxu0 0.0
    %2879 = vmatmul.mubr.f32.gmra.mrb[0].mxu0 %v2810
    %v2880 = vpop.f32.mrb[0].mxu0
    %v2881 = vadd.f32 %v41, %v2880
    %v2882 = vpop.f32.mrb[0].mxu0
    %2883 = vdwg.mxu0
    %v2884 = vsel %vm163, %v2881, -inf
    %2885 = vmax.xlane.f32.xlu0 %v2884
    %v2886 = vpop.xlane.xlu0 %2885
    %v2887 = vsub.f32 %v2881, %v2886
    %v2888 = vmul.f32 %v2887, 1.442695
    %v2889 = vpow.pop %v2888
    %v2890 = vsel %vm163, %v2889, 0.0
    %2891 = vadd.xlane.f32.xlu0 %v2890
    %v2892 = vpop.xlane.xlu0 %2891
    %v2893 = vrcp.pop %v2892
    %v2894 = vmul.f32 %v2889, %v2893
    %2895 = vrot.lane.b32.xlu0 %v2164, 40
    %v2896 = vpop.permute.xlu0 %2895
    %v2899 = vsel %vm163, %v2894, 0
    %2901 = vmatprep.subr.mxu0 0.0
    %2902 = vmatpush1.msra.mxu0 %v2896
    %2903 = vmatprep.subr.mxu0 0.0
    %2904 = vmatpush1.msra.mxu0 0.0
    %2905 = vmatprep.subr.mxu0 0.0
    %2906 = vmatpush1.msra.mxu0 0.0
    %2907 = vmatprep.subr.mxu0 0.0
    %2908 = vmatpush1.msra.mxu0 0.0
    %2909 = vmatprep.subr.mxu0 0.0
    %2910 = vmatpush1.msra.mxu0 0.0
    %2911 = vmatprep.subr.mxu0 0.0
    %2912 = vmatpush1.msra.mxu0 0.0
    %2913 = vmatprep.subr.mxu0 0.0
    %2914 = vmatpush1.msra.mxu0 0.0
    %2915 = vmatprep.subr.mxu0 0.0
    %2916 = vmatpush1.msra.mxu0 0.0
    %2917 = vmatprep.subr.mxu0 0.0
    %2918 = vmatpush1.msra.mxu0 0.0
    %2919 = vmatprep.subr.mxu0 0.0
    %2920 = vmatpush1.msra.mxu0 0.0
    %2921 = vmatprep.subr.mxu0 0.0
    %2922 = vmatpush1.msra.mxu0 0.0
    %2923 = vmatprep.subr.mxu0 0.0
    %2924 = vmatpush1.msra.mxu0 0.0
    %2925 = vmatprep.subr.mxu0 0.0
    %2926 = vmatpush1.msra.mxu0 0.0
    %2927 = vmatprep.subr.mxu0 0.0
    %2928 = vmatpush1.msra.mxu0 0.0
    %2929 = vmatprep.subr.mxu0 0.0
    %2930 = vmatpush1.msra.mxu0 0.0
    %2931 = vmatprep.subr.mxu0 0.0
    %2932 = vmatpush1.msra.mxu0 0.0
    %2933 = vmatprep.subr.mxu0 0.0
    %2934 = vmatpush1.msra.mxu0 0.0
    %2935 = vmatprep.subr.mxu0 0.0
    %2936 = vmatpush1.msra.mxu0 0.0
    %2937 = vmatprep.subr.mxu0 0.0
    %2938 = vmatpush1.msra.mxu0 0.0
    %2939 = vmatprep.subr.mxu0 0.0
    %2940 = vmatpush1.msra.mxu0 0.0
    %2941 = vmatprep.subr.mxu0 0.0
    %2942 = vmatpush1.msra.mxu0 0.0
    %2943 = vmatprep.subr.mxu0 0.0
    %2944 = vmatpush1.msra.mxu0 0.0
    %2945 = vmatprep.subr.mxu0 0.0
    %2946 = vmatpush1.msra.mxu0 0.0
    %2947 = vmatprep.subr.mxu0 0.0
    %2948 = vmatpush1.msra.mxu0 0.0
    %2949 = vmatprep.subr.mxu0 0.0
    %2950 = vmatpush1.msra.mxu0 0.0
    %2951 = vmatprep.subr.mxu0 0.0
    %2952 = vmatpush1.msra.mxu0 0.0
    %2953 = vmatprep.subr.mxu0 0.0
    %2954 = vmatpush1.msra.mxu0 0.0
    %2955 = vmatprep.subr.mxu0 0.0
    %2956 = vmatpush1.msra.mxu0 0.0
    %2957 = vmatprep.subr.mxu0 0.0
    %2958 = vmatpush1.msra.mxu0 0.0
    %2959 = vmatprep.subr.mxu0 0.0
    %2960 = vmatpush1.msra.mxu0 0.0
    %2961 = vmatprep.subr.mxu0 0.0
    %2962 = vmatpush1.msra.mxu0 0.0
    %2963 = vmatprep.subr.mxu0 0.0
    %2964 = vmatpush1.msra.mxu0 0.0
    %2965 = vmatprep.mubr.f32.mxu0 0.0
    %2966 = vmatmul.mubr.f32.gmra.mrb[0].mxu0 %v2899
    %v2967 = vpop.f32.mrb[0].mxu0
    %v2968 = vadd.f32 0.0, %v2967
    %v2969 = vpop.f32.mrb[0].mxu0
    %2970 = vdwg.mxu0
    %v2971 = vpack.c.bf16 %v2968, %v2968
    %v2973 = vsel %vm163, %v2971, 0
    %v2976 = vsel %vm495, %v2108, 0
    %2978 = vmatprep.subr.bf16.mxu0 0
    %2979 = vmatpush1.bf16.msra.mxu0 %v2976
    %2980 = vmatprep.subr.bf16.mxu0 0
    %2981 = vmatpush1.bf16.msra.mxu0 0
    %2982 = vmatprep.subr.bf16.mxu0 0
    %2983 = vmatpush1.bf16.msra.mxu0 0
    %2984 = vmatprep.subr.bf16.mxu0 0
    %2985 = vmatpush1.bf16.msra.mxu0 0
    %2986 = vmatprep.subr.bf16.mxu0 0
    %2987 = vmatpush1.bf16.msra.mxu0 0
    %2988 = vmatprep.subr.bf16.mxu0 0
    %2989 = vmatpush1.bf16.msra.mxu0 0
    %2990 = vmatprep.subr.bf16.mxu0 0
    %2991 = vmatpush1.bf16.msra.mxu0 0
    %2992 = vmatprep.subr.bf16.mxu0 0
    %2993 = vmatpush1.bf16.msra.mxu0 0
    %2994 = vmatprep.subr.bf16.mxu0 0
    %2995 = vmatpush1.bf16.msra.mxu0 0
    %2996 = vmatprep.subr.bf16.mxu0 0
    %2997 = vmatpush1.bf16.msra.mxu0 0
    %2998 = vmatprep.subr.bf16.mxu0 0
    %2999 = vmatpush1.bf16.msra.mxu0 0
    %3000 = vmatprep.subr.bf16.mxu0 0
    %3001 = vmatpush1.bf16.msra.mxu0 0
    %3002 = vmatprep.subr.bf16.mxu0 0
    %3003 = vmatpush1.bf16.msra.mxu0 0
    %3004 = vmatprep.subr.bf16.mxu0 0
    %3005 = vmatpush1.bf16.msra.mxu0 0
    %3006 = vmatprep.subr.bf16.mxu0 0
    %3007 = vmatpush1.bf16.msra.mxu0 0
    %3008 = vmatprep.subr.bf16.mxu0 0
    %3009 = vmatpush1.bf16.msra.mxu0 0
    %3010 = vmatprep.mubr.bf16.mxu0 0
    %3011 = vmatmul.mubr.bf16.gmra.mrb[0].mxu0 %v2973
    %v3012 = vpop.f32.mrb[0].mxu0
    %v3013 = vadd.f32 0.0, %v3012
    %v3014 = vpop.f32.mrb[0].mxu0
    %v3015 = vpop.f32.mrb[0].mxu0
    %v3016 = vpop.f32.mrb[0].mxu0
    %3017 = vdwg.mxu0
    %v3018 = vadd.f32 %v2805, %v3013
    %3020 = vrot.lane.b32.xlu0 %v2167, 96
    %v3021 = vpop.permute.xlu0 %3020
    %v3022 = vsel %vm163, %v2167, 0
    %v3024 = vsel %vm163, %v3021, 0
    %3026 = vmatprep.subr.mxu0 0.0
    %3027 = vmatpush1.xpose.msra.mxu0 %v3024
    %3028 = vmatprep.subr.mxu0 0.0
    %3029 = vmatpush1.xpose.msra.mxu0 0.0
    %3030 = vmatprep.subr.mxu0 0.0
    %3031 = vmatpush1.xpose.msra.mxu0 0.0
    %3032 = vmatprep.subr.mxu0 0.0
    %3033 = vmatpush1.xpose.msra.mxu0 0.0
    %3034 = vmatprep.subr.mxu0 0.0
    %3035 = vmatpush1.xpose.msra.mxu0 0.0
    %3036 = vmatprep.subr.mxu0 0.0
    %3037 = vmatpush1.xpose.msra.mxu0 0.0
    %3038 = vmatprep.subr.mxu0 0.0
    %3039 = vmatpush1.xpose.msra.mxu0 0.0
    %3040 = vmatprep.subr.mxu0 0.0
    %3041 = vmatpush1.xpose.msra.mxu0 0.0
    %3042 = vmatprep.subr.mxu0 0.0
    %3043 = vmatpush1.xpose.msra.mxu0 0.0
    %3044 = vmatprep.subr.mxu0 0.0
    %3045 = vmatpush1.xpose.msra.mxu0 0.0
    %3046 = vmatprep.subr.mxu0 0.0
    %3047 = vmatpush1.xpose.msra.mxu0 0.0
    %3048 = vmatprep.subr.mxu0 0.0
    %3049 = vmatpush1.xpose.msra.mxu0 0.0
    %3050 = vmatprep.subr.mxu0 0.0
    %3051 = vmatpush1.xpose.msra.mxu0 0.0
    %3052 = vmatprep.subr.mxu0 0.0
    %3053 = vmatpush1.xpose.msra.mxu0 0.0
    %3054 = vmatprep.subr.mxu0 0.0
    %3055 = vmatpush1.xpose.msra.mxu0 0.0
    %3056 = vmatprep.subr.mxu0 0.0
    %3057 = vmatpush1.xpose.msra.mxu0 0.0
    %3058 = vmatprep.subr.mxu0 0.0
    %3059 = vmatpush1.xpose.msra.mxu0 0.0
    %3060 = vmatprep.subr.mxu0 0.0
    %3061 = vmatpush1.xpose.msra.mxu0 0.0
    %3062 = vmatprep.subr.mxu0 0.0
    %3063 = vmatpush1.xpose.msra.mxu0 0.0
    %3064 = vmatprep.subr.mxu0 0.0
    %3065 = vmatpush1.xpose.msra.mxu0 0.0
    %3066 = vmatprep.subr.mxu0 0.0
    %3067 = vmatpush1.xpose.msra.mxu0 0.0
    %3068 = vmatprep.subr.mxu0 0.0
    %3069 = vmatpush1.xpose.msra.mxu0 0.0
    %3070 = vmatprep.subr.mxu0 0.0
    %3071 = vmatpush1.xpose.msra.mxu0 0.0
    %3072 = vmatprep.subr.mxu0 0.0
    %3073 = vmatpush1.xpose.msra.mxu0 0.0
    %3074 = vmatprep.subr.mxu0 0.0
    %3075 = vmatpush1.xpose.msra.mxu0 0.0
    %3076 = vmatprep.subr.mxu0 0.0
    %3077 = vmatpush1.xpose.msra.mxu0 0.0
    %3078 = vmatprep.subr.mxu0 0.0
    %3079 = vmatpush1.xpose.msra.mxu0 0.0
    %3080 = vmatprep.subr.mxu0 0.0
    %3081 = vmatpush1.xpose.msra.mxu0 0.0
    %3082 = vmatprep.subr.mxu0 0.0
    %3083 = vmatpush1.xpose.msra.mxu0 0.0
    %3084 = vmatprep.subr.mxu0 0.0
    %3085 = vmatpush1.xpose.msra.mxu0 0.0
    %3086 = vmatprep.subr.mxu0 0.0
    %3087 = vmatpush1.xpose.msra.mxu0 0.0
    %3088 = vmatprep.subr.mxu0 0.0
    %3089 = vmatpush1.xpose.msra.mxu0 0.0
    %3090 = vmatprep.mubr.f32.mxu0 0.0
    %3091 = vmatmul.mubr.f32.gmra.mrb[0].mxu0 %v3022
    %v3092 = vpop.f32.mrb[0].mxu0
    %v3093 = vadd.f32 %v46, %v3092
    %v3094 = vpop.f32.mrb[0].mxu0
    %3095 = vdwg.mxu0
    %v3096 = vsel %vm163, %v3093, -inf
    %3097 = vmax.xlane.f32.xlu0 %v3096
    %v3098 = vpop.xlane.xlu0 %3097
    %v3099 = vsub.f32 %v3093, %v3098
    %v3100 = vmul.f32 %v3099, 1.442695
    %v3101 = vpow.pop %v3100
    %v3102 = vsel %vm163, %v3101, 0.0
    %3103 = vadd.xlane.f32.xlu0 %v3102
    %v3104 = vpop.xlane.xlu0 %3103
    %v3105 = vrcp.pop %v3104
    %v3106 = vmul.f32 %v3101, %v3105
    %3107 = vrot.lane.b32.xlu0 %v2167, 64
    %v3108 = vpop.permute.xlu0 %3107
    %v3111 = vsel %vm163, %v3106, 0
    %3113 = vmatprep.subr.mxu0 0.0
    %3114 = vmatpush1.msra.mxu0 %v3108
    %3115 = vmatprep.subr.mxu0 0.0
    %3116 = vmatpush1.msra.mxu0 0.0
    %3117 = vmatprep.subr.mxu0 0.0
    %3118 = vmatpush1.msra.mxu0 0.0
    %3119 = vmatprep.subr.mxu0 0.0
    %3120 = vmatpush1.msra.mxu0 0.0
    %3121 = vmatprep.subr.mxu0 0.0
    %3122 = vmatpush1.msra.mxu0 0.0
    %3123 = vmatprep.subr.mxu0 0.0
    %3124 = vmatpush1.msra.mxu0 0.0
    %3125 = vmatprep.subr.mxu0 0.0
    %3126 = vmatpush1.msra.mxu0 0.0
    %3127 = vmatprep.subr.mxu0 0.0
    %3128 = vmatpush1.msra.mxu0 0.0
    %3129 = vmatprep.subr.mxu0 0.0
    %3130 = vmatpush1.msra.mxu0 0.0
    %3131 = vmatprep.subr.mxu0 0.0
    %3132 = vmatpush1.msra.mxu0 0.0
    %3133 = vmatprep.subr.mxu0 0.0
    %3134 = vmatpush1.msra.mxu0 0.0
    %3135 = vmatprep.subr.mxu0 0.0
    %3136 = vmatpush1.msra.mxu0 0.0
    %3137 = vmatprep.subr.mxu0 0.0
    %3138 = vmatpush1.msra.mxu0 0.0
    %3139 = vmatprep.subr.mxu0 0.0
    %3140 = vmatpush1.msra.mxu0 0.0
    %3141 = vmatprep.subr.mxu0 0.0
    %3142 = vmatpush1.msra.mxu0 0.0
    %3143 = vmatprep.subr.mxu0 0.0
    %3144 = vmatpush1.msra.mxu0 0.0
    %3145 = vmatprep.subr.mxu0 0.0
    %3146 = vmatpush1.msra.mxu0 0.0
    %3147 = vmatprep.subr.mxu0 0.0
    %3148 = vmatpush1.msra.mxu0 0.0
    %3149 = vmatprep.subr.mxu0 0.0
    %3150 = vmatpush1.msra.mxu0 0.0
    %3151 = vmatprep.subr.mxu0 0.0
    %3152 = vmatpush1.msra.mxu0 0.0
    %3153 = vmatprep.subr.mxu0 0.0
    %3154 = vmatpush1.msra.mxu0 0.0
    %3155 = vmatprep.subr.mxu0 0.0
    %3156 = vmatpush1.msra.mxu0 0.0
    %3157 = vmatprep.subr.mxu0 0.0
    %3158 = vmatpush1.msra.mxu0 0.0
    %3159 = vmatprep.subr.mxu0 0.0
    %3160 = vmatpush1.msra.mxu0 0.0
    %3161 = vmatprep.subr.mxu0 0.0
    %3162 = vmatpush1.msra.mxu0 0.0
    %3163 = vmatprep.subr.mxu0 0.0
    %3164 = vmatpush1.msra.mxu0 0.0
    %3165 = vmatprep.subr.mxu0 0.0
    %3166 = vmatpush1.msra.mxu0 0.0
    %3167 = vmatprep.subr.mxu0 0.0
    %3168 = vmatpush1.msra.mxu0 0.0
    %3169 = vmatprep.subr.mxu0 0.0
    %3170 = vmatpush1.msra.mxu0 0.0
    %3171 = vmatprep.subr.mxu0 0.0
    %3172 = vmatpush1.msra.mxu0 0.0
    %3173 = vmatprep.subr.mxu0 0.0
    %3174 = vmatpush1.msra.mxu0 0.0
    %3175 = vmatprep.subr.mxu0 0.0
    %3176 = vmatpush1.msra.mxu0 0.0
    %3177 = vmatprep.mubr.f32.mxu0 0.0
    %3178 = vmatmul.mubr.f32.gmra.mrb[0].mxu0 %v3111
    %v3179 = vpop.f32.mrb[0].mxu0
    %v3180 = vadd.f32 0.0, %v3179
    %v3181 = vpop.f32.mrb[0].mxu0
    %3182 = vdwg.mxu0
    %v3183 = vpack.c.bf16 %v3180, %v3180
    %3184 = vrot.lane.b32.xlu0 %v2167, 120
    %v3185 = vpop.permute.xlu0 %3184
    %3186 = vrot.lane.b32.xlu0 %v2167, 88
    %v3187 = vpop.permute.xlu0 %3186
    %v3188 = vsel %vm163, %v3185, 0
    %v3190 = vsel %vm163, %v3187, 0
    %3192 = vmatprep.subr.mxu0 0.0
    %3193 = vmatpush1.xpose.msra.mxu0 %v3190
    %3194 = vmatprep.subr.mxu0 0.0
    %3195 = vmatpush1.xpose.msra.mxu0 0.0
    %3196 = vmatprep.subr.mxu0 0.0
    %3197 = vmatpush1.xpose.msra.mxu0 0.0
    %3198 = vmatprep.subr.mxu0 0.0
    %3199 = vmatpush1.xpose.msra.mxu0 0.0
    %3200 = vmatprep.subr.mxu0 0.0
    %3201 = vmatpush1.xpose.msra.mxu0 0.0
    %3202 = vmatprep.subr.mxu0 0.0
    %3203 = vmatpush1.xpose.msra.mxu0 0.0
    %3204 = vmatprep.subr.mxu0 0.0
    %3205 = vmatpush1.xpose.msra.mxu0 0.0
    %3206 = vmatprep.subr.mxu0 0.0
    %3207 = vmatpush1.xpose.msra.mxu0 0.0
    %3208 = vmatprep.subr.mxu0 0.0
    %3209 = vmatpush1.xpose.msra.mxu0 0.0
    %3210 = vmatprep.subr.mxu0 0.0
    %3211 = vmatpush1.xpose.msra.mxu0 0.0
    %3212 = vmatprep.subr.mxu0 0.0
    %3213 = vmatpush1.xpose.msra.mxu0 0.0
    %3214 = vmatprep.subr.mxu0 0.0
    %3215 = vmatpush1.xpose.msra.mxu0 0.0
    %3216 = vmatprep.subr.mxu0 0.0
    %3217 = vmatpush1.xpose.msra.mxu0 0.0
    %3218 = vmatprep.subr.mxu0 0.0
    %3219 = vmatpush1.xpose.msra.mxu0 0.0
    %3220 = vmatprep.subr.mxu0 0.0
    %3221 = vmatpush1.xpose.msra.mxu0 0.0
    %3222 = vmatprep.subr.mxu0 0.0
    %3223 = vmatpush1.xpose.msra.mxu0 0.0
    %3224 = vmatprep.subr.mxu0 0.0
    %3225 = vmatpush1.xpose.msra.mxu0 0.0
    %3226 = vmatprep.subr.mxu0 0.0
    %3227 = vmatpush1.xpose.msra.mxu0 0.0
    %3228 = vmatprep.subr.mxu0 0.0
    %3229 = vmatpush1.xpose.msra.mxu0 0.0
    %3230 = vmatprep.subr.mxu0 0.0
    %3231 = vmatpush1.xpose.msra.mxu0 0.0
    %3232 = vmatprep.subr.mxu0 0.0
    %3233 = vmatpush1.xpose.msra.mxu0 0.0
    %3234 = vmatprep.subr.mxu0 0.0
    %3235 = vmatpush1.xpose.msra.mxu0 0.0
    %3236 = vmatprep.subr.mxu0 0.0
    %3237 = vmatpush1.xpose.msra.mxu0 0.0
    %3238 = vmatprep.subr.mxu0 0.0
    %3239 = vmatpush1.xpose.msra.mxu0 0.0
    %3240 = vmatprep.subr.mxu0 0.0
    %3241 = vmatpush1.xpose.msra.mxu0 0.0
    %3242 = vmatprep.subr.mxu0 0.0
    %3243 = vmatpush1.xpose.msra.mxu0 0.0
    %3244 = vmatprep.subr.mxu0 0.0
    %3245 = vmatpush1.xpose.msra.mxu0 0.0
    %3246 = vmatprep.subr.mxu0 0.0
    %3247 = vmatpush1.xpose.msra.mxu0 0.0
    %3248 = vmatprep.subr.mxu0 0.0
    %3249 = vmatpush1.xpose.msra.mxu0 0.0
    %3250 = vmatprep.subr.mxu0 0.0
    %3251 = vmatpush1.xpose.msra.mxu0 0.0
    %3252 = vmatprep.subr.mxu0 0.0
    %3253 = vmatpush1.xpose.msra.mxu0 0.0
    %3254 = vmatprep.subr.mxu0 0.0
    %3255 = vmatpush1.xpose.msra.mxu0 0.0
    %3256 = vmatprep.mubr.f32.mxu0 0.0
    %3257 = vmatmul.mubr.f32.gmra.mrb[0].mxu0 %v3188
    %v3258 = vpop.f32.mrb[0].mxu0
    %v3259 = vadd.f32 %v46, %v3258
    %v3260 = vpop.f32.mrb[0].mxu0
    %3261 = vdwg.mxu0
    %v3262 = vsel %vm163, %v3259, -inf
    %3263 = vmax.xlane.f32.xlu0 %v3262
    %v3264 = vpop.xlane.xlu0 %3263
    %v3265 = vsub.f32 %v3259, %v3264
    %v3266 = vmul.f32 %v3265, 1.442695
    %v3267 = vpow.pop %v3266
    %v3268 = vsel %vm163, %v3267, 0.0
    %3269 = vadd.xlane.f32.xlu0 %v3268
    %v3270 = vpop.xlane.xlu0 %3269
    %v3271 = vrcp.pop %v3270
    %v3272 = vmul.f32 %v3267, %v3271
    %3273 = vrot.lane.b32.xlu0 %v2167, 56
    %v3274 = vpop.permute.xlu0 %3273
    %v3277 = vsel %vm163, %v3272, 0
    %3279 = vmatprep.subr.mxu0 0.0
    %3280 = vmatpush1.msra.mxu0 %v3274
    %3281 = vmatprep.subr.mxu0 0.0
    %3282 = vmatpush1.msra.mxu0 0.0
    %3283 = vmatprep.subr.mxu0 0.0
    %3284 = vmatpush1.msra.mxu0 0.0
    %3285 = vmatprep.subr.mxu0 0.0
    %3286 = vmatpush1.msra.mxu0 0.0
    %3287 = vmatprep.subr.mxu0 0.0
    %3288 = vmatpush1.msra.mxu0 0.0
    %3289 = vmatprep.subr.mxu0 0.0
    %3290 = vmatpush1.msra.mxu0 0.0
    %3291 = vmatprep.subr.mxu0 0.0
    %3292 = vmatpush1.msra.mxu0 0.0
    %3293 = vmatprep.subr.mxu0 0.0
    %3294 = vmatpush1.msra.mxu0 0.0
    %3295 = vmatprep.subr.mxu0 0.0
    %3296 = vmatpush1.msra.mxu0 0.0
    %3297 = vmatprep.subr.mxu0 0.0
    %3298 = vmatpush1.msra.mxu0 0.0
    %3299 = vmatprep.subr.mxu0 0.0
    %3300 = vmatpush1.msra.mxu0 0.0
    %3301 = vmatprep.subr.mxu0 0.0
    %3302 = vmatpush1.msra.mxu0 0.0
    %3303 = vmatprep.subr.mxu0 0.0
    %3304 = vmatpush1.msra.mxu0 0.0
    %3305 = vmatprep.subr.mxu0 0.0
    %3306 = vmatpush1.msra.mxu0 0.0
    %3307 = vmatprep.subr.mxu0 0.0
    %3308 = vmatpush1.msra.mxu0 0.0
    %3309 = vmatprep.subr.mxu0 0.0
    %3310 = vmatpush1.msra.mxu0 0.0
    %3311 = vmatprep.subr.mxu0 0.0
    %3312 = vmatpush1.msra.mxu0 0.0
    %3313 = vmatprep.subr.mxu0 0.0
    %3314 = vmatpush1.msra.mxu0 0.0
    %3315 = vmatprep.subr.mxu0 0.0
    %3316 = vmatpush1.msra.mxu0 0.0
    %3317 = vmatprep.subr.mxu0 0.0
    %3318 = vmatpush1.msra.mxu0 0.0
    %3319 = vmatprep.subr.mxu0 0.0
    %3320 = vmatpush1.msra.mxu0 0.0
    %3321 = vmatprep.subr.mxu0 0.0
    %3322 = vmatpush1.msra.mxu0 0.0
    %3323 = vmatprep.subr.mxu0 0.0
    %3324 = vmatpush1.msra.mxu0 0.0
    %3325 = vmatprep.subr.mxu0 0.0
    %3326 = vmatpush1.msra.mxu0 0.0
    %3327 = vmatprep.subr.mxu0 0.0
    %3328 = vmatpush1.msra.mxu0 0.0
    %3329 = vmatprep.subr.mxu0 0.0
    %3330 = vmatpush1.msra.mxu0 0.0
    %3331 = vmatprep.subr.mxu0 0.0
    %3332 = vmatpush1.msra.mxu0 0.0
    %3333 = vmatprep.subr.mxu0 0.0
    %3334 = vmatpush1.msra.mxu0 0.0
    %3335 = vmatprep.subr.mxu0 0.0
    %3336 = vmatpush1.msra.mxu0 0.0
    %3337 = vmatprep.subr.mxu0 0.0
    %3338 = vmatpush1.msra.mxu0 0.0
    %3339 = vmatprep.subr.mxu0 0.0
    %3340 = vmatpush1.msra.mxu0 0.0
    %3341 = vmatprep.subr.mxu0 0.0
    %3342 = vmatpush1.msra.mxu0 0.0
    %3343 = vmatprep.mubr.f32.mxu0 0.0
    %3344 = vmatmul.mubr.f32.gmra.mrb[0].mxu0 %v3277
    %v3345 = vpop.f32.mrb[0].mxu0
    %v3346 = vadd.f32 0.0, %v3345
    %v3347 = vpop.f32.mrb[0].mxu0
    %3348 = vdwg.mxu0
    %v3349 = vpack.c.bf16 %v3346, %v3346
    %v3351 = vsel %vm163, %v3349, 0
    %3353 = vmatprep.subr.bf16.mxu0 0
    %3354 = vmatpush1.bf16.msra.mxu0 %v2505
    %3355 = vmatprep.subr.bf16.mxu0 0
    %3356 = vmatpush1.bf16.msra.mxu0 0
    %3357 = vmatprep.subr.bf16.mxu0 0
    %3358 = vmatpush1.bf16.msra.mxu0 0
    %3359 = vmatprep.subr.bf16.mxu0 0
    %3360 = vmatpush1.bf16.msra.mxu0 0
    %3361 = vmatprep.subr.bf16.mxu0 0
    %3362 = vmatpush1.bf16.msra.mxu0 0
    %3363 = vmatprep.subr.bf16.mxu0 0
    %3364 = vmatpush1.bf16.msra.mxu0 0
    %3365 = vmatprep.subr.bf16.mxu0 0
    %3366 = vmatpush1.bf16.msra.mxu0 0
    %3367 = vmatprep.subr.bf16.mxu0 0
    %3368 = vmatpush1.bf16.msra.mxu0 0
    %3369 = vmatprep.subr.bf16.mxu0 0
    %3370 = vmatpush1.bf16.msra.mxu0 0
    %3371 = vmatprep.subr.bf16.mxu0 0
    %3372 = vmatpush1.bf16.msra.mxu0 0
    %3373 = vmatprep.subr.bf16.mxu0 0
    %3374 = vmatpush1.bf16.msra.mxu0 0
    %3375 = vmatprep.subr.bf16.mxu0 0
    %3376 = vmatpush1.bf16.msra.mxu0 0
    %3377 = vmatprep.subr.bf16.mxu0 0
    %3378 = vmatpush1.bf16.msra.mxu0 0
    %3379 = vmatprep.subr.bf16.mxu0 0
    %3380 = vmatpush1.bf16.msra.mxu0 0
    %3381 = vmatprep.subr.bf16.mxu0 0
    %3382 = vmatpush1.bf16.msra.mxu0 0
    %3383 = vmatprep.subr.bf16.mxu0 0
    %3384 = vmatpush1.bf16.msra.mxu0 0
    %3385 = vmatprep.mubr.bf16.mxu0 0
    %3386 = vmatmul.mubr.bf16.gmra.mrb[0].mxu0 %v3351
    %v3387 = vpop.f32.mrb[0].mxu0
    %v3388 = vadd.f32 0.0, %v3387
    %v3389 = vpop.f32.mrb[0].mxu0
    %v3390 = vpop.f32.mrb[0].mxu0
    %v3391 = vpop.f32.mrb[0].mxu0
    %3392 = vdwg.mxu0
    %v3394 = vsel %vm163, %v3183, 0
    %3396 = vmatprep.subr.bf16.mxu0 0
    %3397 = vmatpush1.bf16.msra.mxu0 %v2551
    %3398 = vmatprep.subr.bf16.mxu0 0
    %3399 = vmatpush1.bf16.msra.mxu0 0
    %3400 = vmatprep.subr.bf16.mxu0 0
    %3401 = vmatpush1.bf16.msra.mxu0 0
    %3402 = vmatprep.subr.bf16.mxu0 0
    %3403 = vmatpush1.bf16.msra.mxu0 0
    %3404 = vmatprep.subr.bf16.mxu0 0
    %3405 = vmatpush1.bf16.msra.mxu0 0
    %3406 = vmatprep.subr.bf16.mxu0 0
    %3407 = vmatpush1.bf16.msra.mxu0 0
    %3408 = vmatprep.subr.bf16.mxu0 0
    %3409 = vmatpush1.bf16.msra.mxu0 0
    %3410 = vmatprep.subr.bf16.mxu0 0
    %3411 = vmatpush1.bf16.msra.mxu0 0
    %3412 = vmatprep.subr.bf16.mxu0 0
    %3413 = vmatpush1.bf16.msra.mxu0 0
    %3414 = vmatprep.subr.bf16.mxu0 0
    %3415 = vmatpush1.bf16.msra.mxu0 0
    %3416 = vmatprep.subr.bf16.mxu0 0
    %3417 = vmatpush1.bf16.msra.mxu0 0
    %3418 = vmatprep.subr.bf16.mxu0 0
    %3419 = vmatpush1.bf16.msra.mxu0 0
    %3420 = vmatprep.subr.bf16.mxu0 0
    %3421 = vmatpush1.bf16.msra.mxu0 0
    %3422 = vmatprep.subr.bf16.mxu0 0
    %3423 = vmatpush1.bf16.msra.mxu0 0
    %3424 = vmatprep.subr.bf16.mxu0 0
    %3425 = vmatpush1.bf16.msra.mxu0 0
    %3426 = vmatprep.subr.bf16.mxu0 0
    %3427 = vmatpush1.bf16.msra.mxu0 0
    %3428 = vmatprep.mubr.bf16.mxu0 0
    %3429 = vmatmul.mubr.bf16.gmra.mrb[0].mxu0 %v3394
    %v3430 = vpop.f32.mrb[0].mxu0
    %v3431 = vadd.f32 %v3388, %v3430
    %v3432 = vpop.f32.mrb[0].mxu0
    %v3433 = vpop.f32.mrb[0].mxu0
    %v3434 = vpop.f32.mrb[0].mxu0
    %3435 = vdwg.mxu0
    %3436 = vrot.lane.b32.xlu0 %v2167, 112
    %v3437 = vpop.permute.xlu0 %3436
    %3438 = vrot.lane.b32.xlu0 %v2167, 80
    %v3439 = vpop.permute.xlu0 %3438
    %v3440 = vsel %vm163, %v3437, 0
    %v3442 = vsel %vm163, %v3439, 0
    %3444 = vmatprep.subr.mxu0 0.0
    %3445 = vmatpush1.xpose.msra.mxu0 %v3442
    %3446 = vmatprep.subr.mxu0 0.0
    %3447 = vmatpush1.xpose.msra.mxu0 0.0
    %3448 = vmatprep.subr.mxu0 0.0
    %3449 = vmatpush1.xpose.msra.mxu0 0.0
    %3450 = vmatprep.subr.mxu0 0.0
    %3451 = vmatpush1.xpose.msra.mxu0 0.0
    %3452 = vmatprep.subr.mxu0 0.0
    %3453 = vmatpush1.xpose.msra.mxu0 0.0
    %3454 = vmatprep.subr.mxu0 0.0
    %3455 = vmatpush1.xpose.msra.mxu0 0.0
    %3456 = vmatprep.subr.mxu0 0.0
    %3457 = vmatpush1.xpose.msra.mxu0 0.0
    %3458 = vmatprep.subr.mxu0 0.0
    %3459 = vmatpush1.xpose.msra.mxu0 0.0
    %3460 = vmatprep.subr.mxu0 0.0
    %3461 = vmatpush1.xpose.msra.mxu0 0.0
    %3462 = vmatprep.subr.mxu0 0.0
    %3463 = vmatpush1.xpose.msra.mxu0 0.0
    %3464 = vmatprep.subr.mxu0 0.0
    %3465 = vmatpush1.xpose.msra.mxu0 0.0
    %3466 = vmatprep.subr.mxu0 0.0
    %3467 = vmatpush1.xpose.msra.mxu0 0.0
    %3468 = vmatprep.subr.mxu0 0.0
    %3469 = vmatpush1.xpose.msra.mxu0 0.0
    %3470 = vmatprep.subr.mxu0 0.0
    %3471 = vmatpush1.xpose.msra.mxu0 0.0
    %3472 = vmatprep.subr.mxu0 0.0
    %3473 = vmatpush1.xpose.msra.mxu0 0.0
    %3474 = vmatprep.subr.mxu0 0.0
    %3475 = vmatpush1.xpose.msra.mxu0 0.0
    %3476 = vmatprep.subr.mxu0 0.0
    %3477 = vmatpush1.xpose.msra.mxu0 0.0
    %3478 = vmatprep.subr.mxu0 0.0
    %3479 = vmatpush1.xpose.msra.mxu0 0.0
    %3480 = vmatprep.subr.mxu0 0.0
    %3481 = vmatpush1.xpose.msra.mxu0 0.0
    %3482 = vmatprep.subr.mxu0 0.0
    %3483 = vmatpush1.xpose.msra.mxu0 0.0
    %3484 = vmatprep.subr.mxu0 0.0
    %3485 = vmatpush1.xpose.msra.mxu0 0.0
    %3486 = vmatprep.subr.mxu0 0.0
    %3487 = vmatpush1.xpose.msra.mxu0 0.0
    %3488 = vmatprep.subr.mxu0 0.0
    %3489 = vmatpush1.xpose.msra.mxu0 0.0
    %3490 = vmatprep.subr.mxu0 0.0
    %3491 = vmatpush1.xpose.msra.mxu0 0.0
    %3492 = vmatprep.subr.mxu0 0.0
    %3493 = vmatpush1.xpose.msra.mxu0 0.0
    %3494 = vmatprep.subr.mxu0 0.0
    %3495 = vmatpush1.xpose.msra.mxu0 0.0
    %3496 = vmatprep.subr.mxu0 0.0
    %3497 = vmatpush1.xpose.msra.mxu0 0.0
    %3498 = vmatprep.subr.mxu0 0.0
    %3499 = vmatpush1.xpose.msra.mxu0 0.0
    %3500 = vmatprep.subr.mxu0 0.0
    %3501 = vmatpush1.xpose.msra.mxu0 0.0
    %3502 = vmatprep.subr.mxu0 0.0
    %3503 = vmatpush1.xpose.msra.mxu0 0.0
    %3504 = vmatprep.subr.mxu0 0.0
    %3505 = vmatpush1.xpose.msra.mxu0 0.0
    %3506 = vmatprep.subr.mxu0 0.0
    %3507 = vmatpush1.xpose.msra.mxu0 0.0
    %3508 = vmatprep.mubr.f32.mxu0 0.0
    %3509 = vmatmul.mubr.f32.gmra.mrb[0].mxu0 %v3440
    %v3510 = vpop.f32.mrb[0].mxu0
    %v3511 = vadd.f32 %v46, %v3510
    %v3512 = vpop.f32.mrb[0].mxu0
    %3513 = vdwg.mxu0
    %v3514 = vsel %vm163, %v3511, -inf
    %3515 = vmax.xlane.f32.xlu0 %v3514
    %v3516 = vpop.xlane.xlu0 %3515
    %v3517 = vsub.f32 %v3511, %v3516
    %v3518 = vmul.f32 %v3517, 1.442695
    %v3519 = vpow.pop %v3518
    %v3520 = vsel %vm163, %v3519, 0.0
    %3521 = vadd.xlane.f32.xlu0 %v3520
    %v3522 = vpop.xlane.xlu0 %3521
    %v3523 = vrcp.pop %v3522
    %v3524 = vmul.f32 %v3519, %v3523
    %3525 = vrot.lane.b32.xlu0 %v2167, 48
    %v3526 = vpop.permute.xlu0 %3525
    %v3529 = vsel %vm163, %v3524, 0
    %3531 = vmatprep.subr.mxu0 0.0
    %3532 = vmatpush1.msra.mxu0 %v3526
    %3533 = vmatprep.subr.mxu0 0.0
    %3534 = vmatpush1.msra.mxu0 0.0
    %3535 = vmatprep.subr.mxu0 0.0
    %3536 = vmatpush1.msra.mxu0 0.0
    %3537 = vmatprep.subr.mxu0 0.0
    %3538 = vmatpush1.msra.mxu0 0.0
    %3539 = vmatprep.subr.mxu0 0.0
    %3540 = vmatpush1.msra.mxu0 0.0
    %3541 = vmatprep.subr.mxu0 0.0
    %3542 = vmatpush1.msra.mxu0 0.0
    %3543 = vmatprep.subr.mxu0 0.0
    %3544 = vmatpush1.msra.mxu0 0.0
    %3545 = vmatprep.subr.mxu0 0.0
    %3546 = vmatpush1.msra.mxu0 0.0
    %3547 = vmatprep.subr.mxu0 0.0
    %3548 = vmatpush1.msra.mxu0 0.0
    %3549 = vmatprep.subr.mxu0 0.0
    %3550 = vmatpush1.msra.mxu0 0.0
    %3551 = vmatprep.subr.mxu0 0.0
    %3552 = vmatpush1.msra.mxu0 0.0
    %3553 = vmatprep.subr.mxu0 0.0
    %3554 = vmatpush1.msra.mxu0 0.0
    %3555 = vmatprep.subr.mxu0 0.0
    %3556 = vmatpush1.msra.mxu0 0.0
    %3557 = vmatprep.subr.mxu0 0.0
    %3558 = vmatpush1.msra.mxu0 0.0
    %3559 = vmatprep.subr.mxu0 0.0
    %3560 = vmatpush1.msra.mxu0 0.0
    %3561 = vmatprep.subr.mxu0 0.0
    %3562 = vmatpush1.msra.mxu0 0.0
    %3563 = vmatprep.subr.mxu0 0.0
    %3564 = vmatpush1.msra.mxu0 0.0
    %3565 = vmatprep.subr.mxu0 0.0
    %3566 = vmatpush1.msra.mxu0 0.0
    %3567 = vmatprep.subr.mxu0 0.0
    %3568 = vmatpush1.msra.mxu0 0.0
    %3569 = vmatprep.subr.mxu0 0.0
    %3570 = vmatpush1.msra.mxu0 0.0
    %3571 = vmatprep.subr.mxu0 0.0
    %3572 = vmatpush1.msra.mxu0 0.0
    %3573 = vmatprep.subr.mxu0 0.0
    %3574 = vmatpush1.msra.mxu0 0.0
    %3575 = vmatprep.subr.mxu0 0.0
    %3576 = vmatpush1.msra.mxu0 0.0
    %3577 = vmatprep.subr.mxu0 0.0
    %3578 = vmatpush1.msra.mxu0 0.0
    %3579 = vmatprep.subr.mxu0 0.0
    %3580 = vmatpush1.msra.mxu0 0.0
    %3581 = vmatprep.subr.mxu0 0.0
    %3582 = vmatpush1.msra.mxu0 0.0
    %3583 = vmatprep.subr.mxu0 0.0
    %3584 = vmatpush1.msra.mxu0 0.0
    %3585 = vmatprep.subr.mxu0 0.0
    %3586 = vmatpush1.msra.mxu0 0.0
    %3587 = vmatprep.subr.mxu0 0.0
    %3588 = vmatpush1.msra.mxu0 0.0
    %3589 = vmatprep.subr.mxu0 0.0
    %3590 = vmatpush1.msra.mxu0 0.0
    %3591 = vmatprep.subr.mxu0 0.0
    %3592 = vmatpush1.msra.mxu0 0.0
    %3593 = vmatprep.subr.mxu0 0.0
    %3594 = vmatpush1.msra.mxu0 0.0
    %3595 = vmatprep.mubr.f32.mxu0 0.0
    %3596 = vmatmul.mubr.f32.gmra.mrb[0].mxu0 %v3529
    %v3597 = vpop.f32.mrb[0].mxu0
    %v3598 = vadd.f32 0.0, %v3597
    %v3599 = vpop.f32.mrb[0].mxu0
    %3600 = vdwg.mxu0
    %v3601 = vpack.c.bf16 %v3598, %v3598
    %v3603 = vsel %vm163, %v3601, 0
    %3605 = vmatprep.subr.bf16.mxu0 0
    %3606 = vmatpush1.bf16.msra.mxu0 %v2763
    %3607 = vmatprep.subr.bf16.mxu0 0
    %3608 = vmatpush1.bf16.msra.mxu0 0
    %3609 = vmatprep.subr.bf16.mxu0 0
    %3610 = vmatpush1.bf16.msra.mxu0 0
    %3611 = vmatprep.subr.bf16.mxu0 0
    %3612 = vmatpush1.bf16.msra.mxu0 0
    %3613 = vmatprep.subr.bf16.mxu0 0
    %3614 = vmatpush1.bf16.msra.mxu0 0
    %3615 = vmatprep.subr.bf16.mxu0 0
    %3616 = vmatpush1.bf16.msra.mxu0 0
    %3617 = vmatprep.subr.bf16.mxu0 0
    %3618 = vmatpush1.bf16.msra.mxu0 0
    %3619 = vmatprep.subr.bf16.mxu0 0
    %3620 = vmatpush1.bf16.msra.mxu0 0
    %3621 = vmatprep.subr.bf16.mxu0 0
    %3622 = vmatpush1.bf16.msra.mxu0 0
    %3623 = vmatprep.subr.bf16.mxu0 0
    %3624 = vmatpush1.bf16.msra.mxu0 0
    %3625 = vmatprep.subr.bf16.mxu0 0
    %3626 = vmatpush1.bf16.msra.mxu0 0
    %3627 = vmatprep.subr.bf16.mxu0 0
    %3628 = vmatpush1.bf16.msra.mxu0 0
    %3629 = vmatprep.subr.bf16.mxu0 0
    %3630 = vmatpush1.bf16.msra.mxu0 0
    %3631 = vmatprep.subr.bf16.mxu0 0
    %3632 = vmatpush1.bf16.msra.mxu0 0
    %3633 = vmatprep.subr.bf16.mxu0 0
    %3634 = vmatpush1.bf16.msra.mxu0 0
    %3635 = vmatprep.subr.bf16.mxu0 0
    %3636 = vmatpush1.bf16.msra.mxu0 0
    %3637 = vmatprep.mubr.bf16.mxu0 0
    %3638 = vmatmul.mubr.bf16.gmra.mrb[0].mxu0 %v3603
    %v3639 = vpop.f32.mrb[0].mxu0
    %v3640 = vadd.f32 0.0, %v3639
    %v3641 = vpop.f32.mrb[0].mxu0
    %v3642 = vpop.f32.mrb[0].mxu0
    %v3643 = vpop.f32.mrb[0].mxu0
    %3644 = vdwg.mxu0
    %v3645 = vadd.f32 %v3431, %v3640
    %3646 = vrot.lane.b32.xlu0 %v2167, 104
    %v3647 = vpop.permute.xlu0 %3646
    %3648 = vrot.lane.b32.xlu0 %v2167, 72
    %v3649 = vpop.permute.xlu0 %3648
    %v3650 = vsel %vm163, %v3647, 0
    %v3652 = vsel %vm163, %v3649, 0
    %3654 = vmatprep.subr.mxu0 0.0
    %3655 = vmatpush1.xpose.msra.mxu0 %v3652
    %3656 = vmatprep.subr.mxu0 0.0
    %3657 = vmatpush1.xpose.msra.mxu0 0.0
    %3658 = vmatprep.subr.mxu0 0.0
    %3659 = vmatpush1.xpose.msra.mxu0 0.0
    %3660 = vmatprep.subr.mxu0 0.0
    %3661 = vmatpush1.xpose.msra.mxu0 0.0
    %3662 = vmatprep.subr.mxu0 0.0
    %3663 = vmatpush1.xpose.msra.mxu0 0.0
    %3664 = vmatprep.subr.mxu0 0.0
    %3665 = vmatpush1.xpose.msra.mxu0 0.0
    %3666 = vmatprep.subr.mxu0 0.0
    %3667 = vmatpush1.xpose.msra.mxu0 0.0
    %3668 = vmatprep.subr.mxu0 0.0
    %3669 = vmatpush1.xpose.msra.mxu0 0.0
    %3670 = vmatprep.subr.mxu0 0.0
    %3671 = vmatpush1.xpose.msra.mxu0 0.0
    %3672 = vmatprep.subr.mxu0 0.0
    %3673 = vmatpush1.xpose.msra.mxu0 0.0
    %3674 = vmatprep.subr.mxu0 0.0
    %3675 = vmatpush1.xpose.msra.mxu0 0.0
    %3676 = vmatprep.subr.mxu0 0.0
    %3677 = vmatpush1.xpose.msra.mxu0 0.0
    %3678 = vmatprep.subr.mxu0 0.0
    %3679 = vmatpush1.xpose.msra.mxu0 0.0
    %3680 = vmatprep.subr.mxu0 0.0
    %3681 = vmatpush1.xpose.msra.mxu0 0.0
    %3682 = vmatprep.subr.mxu0 0.0
    %3683 = vmatpush1.xpose.msra.mxu0 0.0
    %3684 = vmatprep.subr.mxu0 0.0
    %3685 = vmatpush1.xpose.msra.mxu0 0.0
    %3686 = vmatprep.subr.mxu0 0.0
    %3687 = vmatpush1.xpose.msra.mxu0 0.0
    %3688 = vmatprep.subr.mxu0 0.0
    %3689 = vmatpush1.xpose.msra.mxu0 0.0
    %3690 = vmatprep.subr.mxu0 0.0
    %3691 = vmatpush1.xpose.msra.mxu0 0.0
    %3692 = vmatprep.subr.mxu0 0.0
    %3693 = vmatpush1.xpose.msra.mxu0 0.0
    %3694 = vmatprep.subr.mxu0 0.0
    %3695 = vmatpush1.xpose.msra.mxu0 0.0
    %3696 = vmatprep.subr.mxu0 0.0
    %3697 = vmatpush1.xpose.msra.mxu0 0.0
    %3698 = vmatprep.subr.mxu0 0.0
    %3699 = vmatpush1.xpose.msra.mxu0 0.0
    %3700 = vmatprep.subr.mxu0 0.0
    %3701 = vmatpush1.xpose.msra.mxu0 0.0
    %3702 = vmatprep.subr.mxu0 0.0
    %3703 = vmatpush1.xpose.msra.mxu0 0.0
    %3704 = vmatprep.subr.mxu0 0.0
    %3705 = vmatpush1.xpose.msra.mxu0 0.0
    %3706 = vmatprep.subr.mxu0 0.0
    %3707 = vmatpush1.xpose.msra.mxu0 0.0
    %3708 = vmatprep.subr.mxu0 0.0
    %3709 = vmatpush1.xpose.msra.mxu0 0.0
    %3710 = vmatprep.subr.mxu0 0.0
    %3711 = vmatpush1.xpose.msra.mxu0 0.0
    %3712 = vmatprep.subr.mxu0 0.0
    %3713 = vmatpush1.xpose.msra.mxu0 0.0
    %3714 = vmatprep.subr.mxu0 0.0
    %3715 = vmatpush1.xpose.msra.mxu0 0.0
    %3716 = vmatprep.subr.mxu0 0.0
    %3717 = vmatpush1.xpose.msra.mxu0 0.0
    %3718 = vmatprep.mubr.f32.mxu0 0.0
    %3719 = vmatmul.mubr.f32.gmra.mrb[0].mxu0 %v3650
    %v3720 = vpop.f32.mrb[0].mxu0
    %v3721 = vadd.f32 %v46, %v3720
    %v3722 = vpop.f32.mrb[0].mxu0
    %3723 = vdwg.mxu0
    %v3724 = vsel %vm163, %v3721, -inf
    %3725 = vmax.xlane.f32.xlu0 %v3724
    %v3726 = vpop.xlane.xlu0 %3725
    %v3727 = vsub.f32 %v3721, %v3726
    %v3728 = vmul.f32 %v3727, 1.442695
    %v3729 = vpow.pop %v3728
    %v3730 = vsel %vm163, %v3729, 0.0
    %3731 = vadd.xlane.f32.xlu0 %v3730
    %v3732 = vpop.xlane.xlu0 %3731
    %v3733 = vrcp.pop %v3732
    %v3734 = vmul.f32 %v3729, %v3733
    %3735 = vrot.lane.b32.xlu0 %v2167, 40
    %v3736 = vpop.permute.xlu0 %3735
    %v3739 = vsel %vm163, %v3734, 0
    %3741 = vmatprep.subr.mxu0 0.0
    %3742 = vmatpush1.msra.mxu0 %v3736
    %3743 = vmatprep.subr.mxu0 0.0
    %3744 = vmatpush1.msra.mxu0 0.0
    %3745 = vmatprep.subr.mxu0 0.0
    %3746 = vmatpush1.msra.mxu0 0.0
    %3747 = vmatprep.subr.mxu0 0.0
    %3748 = vmatpush1.msra.mxu0 0.0
    %3749 = vmatprep.subr.mxu0 0.0
    %3750 = vmatpush1.msra.mxu0 0.0
    %3751 = vmatprep.subr.mxu0 0.0
    %3752 = vmatpush1.msra.mxu0 0.0
    %3753 = vmatprep.subr.mxu0 0.0
    %3754 = vmatpush1.msra.mxu0 0.0
    %3755 = vmatprep.subr.mxu0 0.0
    %3756 = vmatpush1.msra.mxu0 0.0
    %3757 = vmatprep.subr.mxu0 0.0
    %3758 = vmatpush1.msra.mxu0 0.0
    %3759 = vmatprep.subr.mxu0 0.0
    %3760 = vmatpush1.msra.mxu0 0.0
    %3761 = vmatprep.subr.mxu0 0.0
    %3762 = vmatpush1.msra.mxu0 0.0
    %3763 = vmatprep.subr.mxu0 0.0
    %3764 = vmatpush1.msra.mxu0 0.0
    %3765 = vmatprep.subr.mxu0 0.0
    %3766 = vmatpush1.msra.mxu0 0.0
    %3767 = vmatprep.subr.mxu0 0.0
    %3768 = vmatpush1.msra.mxu0 0.0
    %3769 = vmatprep.subr.mxu0 0.0
    %3770 = vmatpush1.msra.mxu0 0.0
    %3771 = vmatprep.subr.mxu0 0.0
    %3772 = vmatpush1.msra.mxu0 0.0
    %3773 = vmatprep.subr.mxu0 0.0
    %3774 = vmatpush1.msra.mxu0 0.0
    %3775 = vmatprep.subr.mxu0 0.0
    %3776 = vmatpush1.msra.mxu0 0.0
    %3777 = vmatprep.subr.mxu0 0.0
    %3778 = vmatpush1.msra.mxu0 0.0
    %3779 = vmatprep.subr.mxu0 0.0
    %3780 = vmatpush1.msra.mxu0 0.0
    %3781 = vmatprep.subr.mxu0 0.0
    %3782 = vmatpush1.msra.mxu0 0.0
    %3783 = vmatprep.subr.mxu0 0.0
    %3784 = vmatpush1.msra.mxu0 0.0
    %3785 = vmatprep.subr.mxu0 0.0
    %3786 = vmatpush1.msra.mxu0 0.0
    %3787 = vmatprep.subr.mxu0 0.0
    %3788 = vmatpush1.msra.mxu0 0.0
    %3789 = vmatprep.subr.mxu0 0.0
    %3790 = vmatpush1.msra.mxu0 0.0
    %3791 = vmatprep.subr.mxu0 0.0
    %3792 = vmatpush1.msra.mxu0 0.0
    %3793 = vmatprep.subr.mxu0 0.0
    %3794 = vmatpush1.msra.mxu0 0.0
    %3795 = vmatprep.subr.mxu0 0.0
    %3796 = vmatpush1.msra.mxu0 0.0
    %3797 = vmatprep.subr.mxu0 0.0
    %3798 = vmatpush1.msra.mxu0 0.0
    %3799 = vmatprep.subr.mxu0 0.0
    %3800 = vmatpush1.msra.mxu0 0.0
    %3801 = vmatprep.subr.mxu0 0.0
    %3802 = vmatpush1.msra.mxu0 0.0
    %3803 = vmatprep.subr.mxu0 0.0
    %3804 = vmatpush1.msra.mxu0 0.0
    %3805 = vmatprep.mubr.f32.mxu0 0.0
    %3806 = vmatmul.mubr.f32.gmra.mrb[0].mxu0 %v3739
    %v3807 = vpop.f32.mrb[0].mxu0
    %v3808 = vadd.f32 0.0, %v3807
    %v3809 = vpop.f32.mrb[0].mxu0
    %3810 = vdwg.mxu0
    %v3811 = vpack.c.bf16 %v3808, %v3808
    %v3813 = vsel %vm163, %v3811, 0
    %3815 = vmatprep.subr.bf16.mxu0 0
    %3816 = vmatpush1.bf16.msra.mxu0 %v2976
    %3817 = vmatprep.subr.bf16.mxu0 0
    %3818 = vmatpush1.bf16.msra.mxu0 0
    %3819 = vmatprep.subr.bf16.mxu0 0
    %3820 = vmatpush1.bf16.msra.mxu0 0
    %3821 = vmatprep.subr.bf16.mxu0 0
    %3822 = vmatpush1.bf16.msra.mxu0 0
    %3823 = vmatprep.subr.bf16.mxu0 0
    %3824 = vmatpush1.bf16.msra.mxu0 0
    %3825 = vmatprep.subr.bf16.mxu0 0
    %3826 = vmatpush1.bf16.msra.mxu0 0
    %3827 = vmatprep.subr.bf16.mxu0 0
    %3828 = vmatpush1.bf16.msra.mxu0 0
    %3829 = vmatprep.subr.bf16.mxu0 0
    %3830 = vmatpush1.bf16.msra.mxu0 0
    %3831 = vmatprep.subr.bf16.mxu0 0
    %3832 = vmatpush1.bf16.msra.mxu0 0
    %3833 = vmatprep.subr.bf16.mxu0 0
    %3834 = vmatpush1.bf16.msra.mxu0 0
    %3835 = vmatprep.subr.bf16.mxu0 0
    %3836 = vmatpush1.bf16.msra.mxu0 0
    %3837 = vmatprep.subr.bf16.mxu0 0
    %3838 = vmatpush1.bf16.msra.mxu0 0
    %3839 = vmatprep.subr.bf16.mxu0 0
    %3840 = vmatpush1.bf16.msra.mxu0 0
    %3841 = vmatprep.subr.bf16.mxu0 0
    %3842 = vmatpush1.bf16.msra.mxu0 0
    %3843 = vmatprep.subr.bf16.mxu0 0
    %3844 = vmatpush1.bf16.msra.mxu0 0
    %3845 = vmatprep.subr.bf16.mxu0 0
    %3846 = vmatpush1.bf16.msra.mxu0 0
    %3847 = vmatprep.mubr.bf16.mxu0 0
    %3848 = vmatmul.mubr.bf16.gmra.mrb[0].mxu0 %v3813
    %v3849 = vpop.f32.mrb[0].mxu0
    %v3850 = vadd.f32 0.0, %v3849
    %v3851 = vpop.f32.mrb[0].mxu0
    %v3852 = vpop.f32.mrb[0].mxu0
    %v3853 = vpop.f32.mrb[0].mxu0
    %3854 = vdwg.mxu0
    %v3855 = vadd.f32 %v3645, %v3850
    %v3856 = vlaneseq
    %v3857 = vshrl.u32 %v3856, 7
    %v3858 = vsub.s32 1, %v3857
    %v3859 = vrot.slane %v2098, %v3858
    %v3860 = vadd.f32 %v3018, %v3859
    %v3861 = vadd.f32 %v3855, %v3859
    %v3862 = vadd.f32 %v3860, %v2095
    %v3863 = vadd.f32 %v3861, %v2096
    %v3864 = vsel %vm50, %v3862, 0.0
    %3865 = vadd.xlane.f32.xlu0 %v3864
    %v3866 = vpop.xlane.xlu0 %3865
    %v3867 = vsel %vm50, %v3863, 0.0
    %3868 = vadd.xlane.f32.xlu0 %v3867
    %v3869 = vpop.xlane.xlu0 %3868
    %v3870 = vmul.f32 %v3866, %v57
    %v3871 = vmul.f32 %v3869, %v57
    %v3872 = vsub.f32 %v3862, %v3870
    %v3873 = vsub.f32 %v3863, %v3871
    %v3874 = vmul.f32 %v3872, %v3872
    %v3875 = vmul.f32 %v3873, %v3873
    %v3876 = vsel %vm50, %v3874, 0.0
    %3877 = vadd.xlane.f32.xlu0 %v3876
    %v3878 = vpop.xlane.xlu0 %3877
    %v3879 = vsel %vm50, %v3875, 0.0
    %3880 = vadd.xlane.f32.xlu0 %v3879
    %v3881 = vpop.xlane.xlu0 %3880
    %v3882 = vmul.f32 %v3878, %v57
    %v3883 = vmul.f32 %v3881, %v57
    %v3884 = vadd.f32 %v3882, 1e-12
    %v3885 = vadd.f32 %v3883, 1e-12
    %v3886 = vrsqrt.pop %v3884
    %v3887 = vrsqrt.pop %v3885
    %v3888 = vmul.f32 %v3872, %v3886
    %v3889 = vmul.f32 %v3873, %v3887
    %3891 = vrot.lane.b32.xlu0 %v3859, 96
    %v3892 = vpop.permute.xlu0 %3891
    %v3894 = vmul.f32 %v3888, %v3892
    %v3895 = vmul.f32 %v3889, %v3892
    %3896 = vrot.lane.b32.xlu0 %v3859, 64
    %v3897 = vpop.permute.xlu0 %3896
    %v3899 = vadd.f32 %v3894, %v3897
    %v3900 = vadd.f32 %v3895, %v3897
    %v3901 = vpack.c.bf16 %v3900, %v3899
    %s3902 = scalar_lea.vmem %s5, 16
    %v3903 = vld [vmem:[%s3902] sm:$0xf]
    %v3904 = vld [vmem:[%s3902 + $0x4] sm:$0xf]
    %v3905 = vld [vmem:[%s3902 + $0x8] sm:$0xf]
    %v3906 = vld [vmem:[%s3902 + $0xc] sm:$0xf]
    %v3907 = vlaneseq
    %v3908 = vshrl.u32 %v3907, 7
    %v3909 = vsub.s32 2, %v3908
    %v3910 = vrot.slane %v2098, %v3909
    %v3915 = vunpack.c.l.b16 %v3903
    %v3916 = vunpack.c.l.b16 %v3904
    %v3917 = vunpack.c.l.b16 %v3905
    %v3918 = vunpack.c.l.b16 %v3906
    %v3919 = vpack.c.b16 %v3916, %v3915
    %v3920 = vpack.c.b16 %v3918, %v3917
    %v3924 = vsel %vm50, %v3901, 0
    %3926 = vmatprep.subr.bf16.mxu0 0
    %3927 = vmatpush1.bf16.msra.mxu0 %v3919
    %3928 = vmatprep.subr.bf16.mxu0 0
    %3929 = vmatpush1.bf16.msra.mxu0 %v3920
    %3930 = vmatprep.subr.bf16.mxu0 0
    %3931 = vmatpush1.bf16.msra.mxu0 0
    %3932 = vmatprep.subr.bf16.mxu0 0
    %3933 = vmatpush1.bf16.msra.mxu0 0
    %3934 = vmatprep.subr.bf16.mxu0 0
    %3935 = vmatpush1.bf16.msra.mxu0 0
    %3936 = vmatprep.subr.bf16.mxu0 0
    %3937 = vmatpush1.bf16.msra.mxu0 0
    %3938 = vmatprep.subr.bf16.mxu0 0
    %3939 = vmatpush1.bf16.msra.mxu0 0
    %3940 = vmatprep.subr.bf16.mxu0 0
    %3941 = vmatpush1.bf16.msra.mxu0 0
    %3942 = vmatprep.subr.bf16.mxu0 0
    %3943 = vmatpush1.bf16.msra.mxu0 0
    %3944 = vmatprep.subr.bf16.mxu0 0
    %3945 = vmatpush1.bf16.msra.mxu0 0
    %3946 = vmatprep.subr.bf16.mxu0 0
    %3947 = vmatpush1.bf16.msra.mxu0 0
    %3948 = vmatprep.subr.bf16.mxu0 0
    %3949 = vmatpush1.bf16.msra.mxu0 0
    %3950 = vmatprep.subr.bf16.mxu0 0
    %3951 = vmatpush1.bf16.msra.mxu0 0
    %3952 = vmatprep.subr.bf16.mxu0 0
    %3953 = vmatpush1.bf16.msra.mxu0 0
    %3954 = vmatprep.subr.bf16.mxu0 0
    %3955 = vmatpush1.bf16.msra.mxu0 0
    %3956 = vmatprep.subr.bf16.mxu0 0
    %3957 = vmatpush1.bf16.msra.mxu0 0
    %3958 = vmatprep.mubr.bf16.mxu0 0
    %3959 = vmatmul.mubr.bf16.gmra.mrb[0].mxu0 %v3924
    %v3960 = vpop.f32.mrb[0].mxu0
    %v3961 = vadd.f32 %v3910, %v3960
    %v3962 = vpop.f32.mrb[0].mxu0
    %v3963 = vpop.f32.mrb[0].mxu0
    %v3964 = vadd.f32 %v3910, %v3963
    %v3965 = vpop.f32.mrb[0].mxu0
    %3966 = vdwg.mxu0
    %v3967 = vmul.f32 %v3961, %v3961
    %v3968 = vmul.f32 %v3964, %v3964
    %v3969 = vmul.f32 %v3961, %v3967
    %v3970 = vmul.f32 %v3964, %v3968
    %v3971 = vmul.f32 %v3969, 0.044715
    %v3972 = vmul.f32 %v3970, 0.044715
    %v3973 = vadd.f32 %v3961, %v3971
    %v3974 = vadd.f32 %v3964, %v3972
    %v3975 = vmul.f32 %v3973, 0.7978846
    %v3976 = vmul.f32 %v3974, 0.7978846
    %v3977 = vtanh.pop %v3975
    %v3978 = vtanh.pop %v3976
    %v3979 = vadd.f32 %v3977, 1.0
    %v3980 = vadd.f32 %v3978, 1.0
    %v3981 = vmul.f32 %v3979, 0.5
    %v3982 = vmul.f32 %v3980, 0.5
    %v3983 = vmul.f32 %v3961, %v3981
    %v3984 = vmul.f32 %v3964, %v3982
    %v3985 = vpack.c.bf16 %v3984, %v3983
    %s3986 = scalar_lea.vmem %s6, 32
    %v3987 = vld [vmem:[%s3986] sm:$0xf]
    %v3988 = vld [vmem:[%s3986 + $0x4] sm:$0xf]
    %v3989 = vld [vmem:[%s3986 + $0x8] sm:$0xf]
    %v3990 = vld [vmem:[%s3986 + $0xc] sm:$0xf]
    %v3991 = vld [vmem:[%s3986 + $0x10] sm:$0xf]
    %v3992 = vld [vmem:[%s3986 + $0x14] sm:$0xf]
    %v3993 = vld [vmem:[%s3986 + $0x18] sm:$0xf]
    %v3994 = vld [vmem:[%s3986 + $0x1c] sm:$0xf]
    %v3995 = vlaneseq
    %v3996 = vshrl.u32 %v3995, 7
    %v3997 = vsub.s32 3, %v3996
    %v3998 = vrot.slane %v2098, %v3997
    %v4007 = vunpack.c.l.b16 %v3987
    %v4008 = vunpack.c.l.b16 %v3988
    %v4009 = vunpack.c.l.b16 %v3989
    %v4010 = vunpack.c.l.b16 %v3990
    %v4011 = vunpack.c.l.b16 %v3991
    %v4012 = vunpack.c.l.b16 %v3992
    %v4013 = vunpack.c.l.b16 %v3993
    %v4014 = vunpack.c.l.b16 %v3994
    %v4015 = vpack.c.b16 %v4008, %v4007
    %v4016 = vpack.c.b16 %v4010, %v4009
    %v4017 = vpack.c.b16 %v4012, %v4011
    %v4018 = vpack.c.b16 %v4014, %v4013
    %v4024 = vsel %vm2013, %v3985, 0
    %4026 = vmatprep.subr.bf16.mxu0 0
    %4027 = vmatpush1.bf16.msra.mxu0 %v4015
    %4028 = vmatprep.subr.bf16.mxu0 0
    %4029 = vmatpush1.bf16.msra.mxu0 %v4016
    %4030 = vmatprep.subr.bf16.mxu0 0
    %4031 = vmatpush1.bf16.msra.mxu0 %v4017
    %4032 = vmatprep.subr.bf16.mxu0 0
    %4033 = vmatpush1.bf16.msra.mxu0 %v4018
    %4034 = vmatprep.subr.bf16.mxu0 0
    %4035 = vmatpush1.bf16.msra.mxu0 0
    %4036 = vmatprep.subr.bf16.mxu0 0
    %4037 = vmatpush1.bf16.msra.mxu0 0
    %4038 = vmatprep.subr.bf16.mxu0 0
    %4039 = vmatpush1.bf16.msra.mxu0 0
    %4040 = vmatprep.subr.bf16.mxu0 0
    %4041 = vmatpush1.bf16.msra.mxu0 0
    %4042 = vmatprep.subr.bf16.mxu0 0
    %4043 = vmatpush1.bf16.msra.mxu0 0
    %4044 = vmatprep.subr.bf16.mxu0 0
    %4045 = vmatpush1.bf16.msra.mxu0 0
    %4046 = vmatprep.subr.bf16.mxu0 0
    %4047 = vmatpush1.bf16.msra.mxu0 0
    %4048 = vmatprep.subr.bf16.mxu0 0
    %4049 = vmatpush1.bf16.msra.mxu0 0
    %4050 = vmatprep.subr.bf16.mxu0 0
    %4051 = vmatpush1.bf16.msra.mxu0 0
    %4052 = vmatprep.subr.bf16.mxu0 0
    %4053 = vmatpush1.bf16.msra.mxu0 0
    %4054 = vmatprep.subr.bf16.mxu0 0
    %4055 = vmatpush1.bf16.msra.mxu0 0
    %4056 = vmatprep.subr.bf16.mxu0 0
    %4057 = vmatpush1.bf16.msra.mxu0 0
    %4058 = vmatprep.mubr.bf16.mxu0 0
    %4059 = vmatmul.mubr.bf16.gmra.mrb[0].mxu0 %v4024
    %v4060 = vpop.f32.mrb[0].mxu0
    %v4061 = vadd.f32 %v3998, %v4060
    %v4062 = vpop.f32.mrb[0].mxu0
    %v4063 = vpop.f32.mrb[0].mxu0
    %v4064 = vadd.f32 %v3998, %v4063
    %v4065 = vpop.f32.mrb[0].mxu0
    %4066 = vdwg.mxu0
    %v4067 = vadd.f32 %v4061, %v3899
    %v4068 = vadd.f32 %v4064, %v3900
    %v4069 = vsel %vm50, %v4067, 0.0
    %4070 = vadd.xlane.f32.xlu0 %v4069
    %v4071 = vpop.xlane.xlu0 %4070
    %v4072 = vsel %vm50, %v4068, 0.0
    %4073 = vadd.xlane.f32.xlu0 %v4072
    %v4074 = vpop.xlane.xlu0 %4073
    %v4075 = vmul.f32 %v4071, %v57
    %v4076 = vmul.f32 %v4074, %v57
    %v4077 = vsub.f32 %v4067, %v4075
    %v4078 = vsub.f32 %v4068, %v4076
    %v4079 = vmul.f32 %v4077, %v4077
    %v4080 = vmul.f32 %v4078, %v4078
    %v4081 = vsel %vm50, %v4079, 0.0
    %4082 = vadd.xlane.f32.xlu0 %v4081
    %v4083 = vpop.xlane.xlu0 %4082
    %v4084 = vsel %vm50, %v4080, 0.0
    %4085 = vadd.xlane.f32.xlu0 %v4084
    %v4086 = vpop.xlane.xlu0 %4085
    %v4087 = vmul.f32 %v4083, %v57
    %v4088 = vmul.f32 %v4086, %v57
    %v4089 = vadd.f32 %v4087, 1e-12
    %v4090 = vadd.f32 %v4088, 1e-12
    %v4091 = vrsqrt.pop %v4089
    %v4092 = vrsqrt.pop %v4090
    %v4093 = vmul.f32 %v4077, %v4091
    %v4094 = vmul.f32 %v4078, %v4092
    %4096 = vrot.lane.b32.xlu0 %v3998, 96
    %v4097 = vpop.permute.xlu0 %4096
    %v4099 = vmul.f32 %v4093, %v4097
    %v4100 = vmul.f32 %v4094, %v4097
    %4101 = vrot.lane.b32.xlu0 %v3998, 64
    %v4102 = vpop.permute.xlu0 %4101
    %v4104 = vadd.f32 %v4099, %v4102
    %v4105 = vadd.f32 %v4100, %v4102
    %v4107 = vrot.slane %v4105, 7
    %vm4109 = vcmask 1040384
    %v4110 = vsel %vm4109, %v4104, %v4107
    %v4111 = vld [vmem:[%s8] sm:$0xff]
    %v4112 = vld [vmem:[%s8 + $0x8] sm:$0xff]
    %v4113 = vld [vmem:[%s8 + $0x10] sm:$0xff]
    %v4114 = vld [vmem:[%s8 + $0x18] sm:$0xff]
    %v4115 = vld [vmem:[%s8 + $0x20] sm:$0x1]
    %v4116 = vlaneseq
    %v4117 = vshrl.u32 %v4116, 7
    %v4118 = vsub.s32 0, %v4117
    %v4119 = vrot.slane %v4115, %v4118
    %v4121 = vsel %vm50, %v4110, 0
    %4123 = vmatprep.subr.mxu0 0.0
    %4124 = vmatpush1.msra.mxu0 %v4111
    %4125 = vmatprep.subr.mxu0 0.0
    %4126 = vmatpush1.msra.mxu0 %v4112
    %4127 = vmatprep.subr.mxu0 0.0
    %4128 = vmatpush1.msra.mxu0 %v4113
    %4129 = vmatprep.subr.mxu0 0.0
    %4130 = vmatpush1.msra.mxu0 %v4114
    %4131 = vmatprep.subr.mxu0 0.0
    %4132 = vmatpush1.msra.mxu0 0.0
    %4133 = vmatprep.subr.mxu0 0.0
    %4134 = vmatpush1.msra.mxu0 0.0
    %4135 = vmatprep.subr.mxu0 0.0
    %4136 = vmatpush1.msra.mxu0 0.0
    %4137 = vmatprep.subr.mxu0 0.0
    %4138 = vmatpush1.msra.mxu0 0.0
    %4139 = vmatprep.subr.mxu0 0.0
    %4140 = vmatpush1.msra.mxu0 0.0
    %4141 = vmatprep.subr.mxu0 0.0
    %4142 = vmatpush1.msra.mxu0 0.0
    %4143 = vmatprep.subr.mxu0 0.0
    %4144 = vmatpush1.msra.mxu0 0.0
    %4145 = vmatprep.subr.mxu0 0.0
    %4146 = vmatpush1.msra.mxu0 0.0
    %4147 = vmatprep.subr.mxu0 0.0
    %4148 = vmatpush1.msra.mxu0 0.0
    %4149 = vmatprep.subr.mxu0 0.0
    %4150 = vmatpush1.msra.mxu0 0.0
    %4151 = vmatprep.subr.mxu0 0.0
    %4152 = vmatpush1.msra.mxu0 0.0
    %4153 = vmatprep.subr.mxu0 0.0
    %4154 = vmatpush1.msra.mxu0 0.0
    %4155 = vmatprep.subr.mxu0 0.0
    %4156 = vmatpush1.msra.mxu0 0.0
    %4157 = vmatprep.subr.mxu0 0.0
    %4158 = vmatpush1.msra.mxu0 0.0
    %4159 = vmatprep.subr.mxu0 0.0
    %4160 = vmatpush1.msra.mxu0 0.0
    %4161 = vmatprep.subr.mxu0 0.0
    %4162 = vmatpush1.msra.mxu0 0.0
    %4163 = vmatprep.subr.mxu0 0.0
    %4164 = vmatpush1.msra.mxu0 0.0
    %4165 = vmatprep.subr.mxu0 0.0
    %4166 = vmatpush1.msra.mxu0 0.0
    %4167 = vmatprep.subr.mxu0 0.0
    %4168 = vmatpush1.msra.mxu0 0.0
    %4169 = vmatprep.subr.mxu0 0.0
    %4170 = vmatpush1.msra.mxu0 0.0
    %4171 = vmatprep.subr.mxu0 0.0
    %4172 = vmatpush1.msra.mxu0 0.0
    %4173 = vmatprep.subr.mxu0 0.0
    %4174 = vmatpush1.msra.mxu0 0.0
    %4175 = vmatprep.subr.mxu0 0.0
    %4176 = vmatpush1.msra.mxu0 0.0
    %4177 = vmatprep.subr.mxu0 0.0
    %4178 = vmatpush1.msra.mxu0 0.0
    %4179 = vmatprep.subr.mxu0 0.0
    %4180 = vmatpush1.msra.mxu0 0.0
    %4181 = vmatprep.subr.mxu0 0.0
    %4182 = vmatpush1.msra.mxu0 0.0
    %4183 = vmatprep.subr.mxu0 0.0
    %4184 = vmatpush1.msra.mxu0 0.0
    %4185 = vmatprep.subr.mxu0 0.0
    %4186 = vmatpush1.msra.mxu0 0.0
    %4187 = vmatprep.mubr.f32.mxu0 0.0
    %4188 = vmatmul.mubr.f32.gmra.mrb[0].mxu0 %v4121
    %v4189 = vpop.f32.mrb[0].mxu0
    %v4190 = vadd.f32 %v4119, %v4189
    %v4191 = vpop.f32.mrb[0].mxu0
    %4192 = vdwg.mxu0
    %v4193 = vtanh.pop %v4190
    %v4194 = vld [vmem:[%s9] sm:$0xff]
    %v4195 = vld [vmem:[%s9 + $0x8] sm:$0xff]
    %v4196 = vld [vmem:[%s9 + $0x10] sm:$0xff]
    %v4197 = vld [vmem:[%s9 + $0x18] sm:$0xff]
    %v4198 = vld [vmem:[%s9 + $0x20] sm:$0x1]
    %v4199 = vlaneseq
    %v4200 = vshrl.u32 %v4199, 7
    %v4201 = vsub.s32 0, %v4200
    %v4202 = vrot.slane %v4198, %v4201
    %v4204 = vsel %vm50, %v4193, 0
    %4206 = vmatprep.subr.mxu0 0.0
    %4207 = vmatpush1.msra.mxu0 %v4194
    %4208 = vmatprep.subr.mxu0 0.0
    %4209 = vmatpush1.msra.mxu0 %v4195
    %4210 = vmatprep.subr.mxu0 0.0
    %4211 = vmatpush1.msra.mxu0 %v4196
    %4212 = vmatprep.subr.mxu0 0.0
    %4213 = vmatpush1.msra.mxu0 %v4197
    %4214 = vmatprep.subr.mxu0 0.0
    %4215 = vmatpush1.msra.mxu0 0.0
    %4216 = vmatprep.subr.mxu0 0.0
    %4217 = vmatpush1.msra.mxu0 0.0
    %4218 = vmatprep.subr.mxu0 0.0
    %4219 = vmatpush1.msra.mxu0 0.0
    %4220 = vmatprep.subr.mxu0 0.0
    %4221 = vmatpush1.msra.mxu0 0.0
    %4222 = vmatprep.subr.mxu0 0.0
    %4223 = vmatpush1.msra.mxu0 0.0
    %4224 = vmatprep.subr.mxu0 0.0
    %4225 = vmatpush1.msra.mxu0 0.0
    %4226 = vmatprep.subr.mxu0 0.0
    %4227 = vmatpush1.msra.mxu0 0.0
    %4228 = vmatprep.subr.mxu0 0.0
    %4229 = vmatpush1.msra.mxu0 0.0
    %4230 = vmatprep.subr.mxu0 0.0
    %4231 = vmatpush1.msra.mxu0 0.0
    %4232 = vmatprep.subr.mxu0 0.0
    %4233 = vmatpush1.msra.mxu0 0.0
    %4234 = vmatprep.subr.mxu0 0.0
    %4235 = vmatpush1.msra.mxu0 0.0
    %4236 = vmatprep.subr.mxu0 0.0
    %4237 = vmatpush1.msra.mxu0 0.0
    %4238 = vmatprep.subr.mxu0 0.0
    %4239 = vmatpush1.msra.mxu0 0.0
    %4240 = vmatprep.subr.mxu0 0.0
    %4241 = vmatpush1.msra.mxu0 0.0
    %4242 = vmatprep.subr.mxu0 0.0
    %4243 = vmatpush1.msra.mxu0 0.0
    %4244 = vmatprep.subr.mxu0 0.0
    %4245 = vmatpush1.msra.mxu0 0.0
    %4246 = vmatprep.subr.mxu0 0.0
    %4247 = vmatpush1.msra.mxu0 0.0
    %4248 = vmatprep.subr.mxu0 0.0
    %4249 = vmatpush1.msra.mxu0 0.0
    %4250 = vmatprep.subr.mxu0 0.0
    %4251 = vmatpush1.msra.mxu0 0.0
    %4252 = vmatprep.subr.mxu0 0.0
    %4253 = vmatpush1.msra.mxu0 0.0
    %4254 = vmatprep.subr.mxu0 0.0
    %4255 = vmatpush1.msra.mxu0 0.0
    %4256 = vmatprep.subr.mxu0 0.0
    %4257 = vmatpush1.msra.mxu0 0.0
    %4258 = vmatprep.subr.mxu0 0.0
    %4259 = vmatpush1.msra.mxu0 0.0
    %4260 = vmatprep.subr.mxu0 0.0
    %4261 = vmatpush1.msra.mxu0 0.0
    %4262 = vmatprep.subr.mxu0 0.0
    %4263 = vmatpush1.msra.mxu0 0.0
    %4264 = vmatprep.subr.mxu0 0.0
    %4265 = vmatpush1.msra.mxu0 0.0
    %4266 = vmatprep.subr.mxu0 0.0
    %4267 = vmatpush1.msra.mxu0 0.0
    %4268 = vmatprep.subr.mxu0 0.0
    %4269 = vmatpush1.msra.mxu0 0.0
    %4270 = vmatprep.mubr.f32.mxu0 0.0
    %4271 = vmatmul.mubr.f32.gmra.mrb[0].mxu0 %v4204
    %v4272 = vpop.f32.mrb[0].mxu0
    %v4273 = vadd.f32 %v4202, %v4272
    %v4274 = vpop.f32.mrb[0].mxu0
    %4275 = vdwg.mxu0
    %4276 = vst [vmem:[#allocation2] sm:$0x3] %v4273
    // Predicated region
    $region42: #{forward.1} parent=1 // pred_check
      _
    $region43: #{forward.1} parent=1 // pred_check_branch
      %4278 = sbr.rel (0) target = $region45
    $region44: #{forward.1} parent=1 // pred_region
      %s4280 = ssub.s32 32, 32
      %4281 = vsyncadd [#allocation3], %s4280
      %s4283 = sshll.u32 [#allocation2], 4
      %s4284 = int_to_ptr.vmem [resolvable:$true] %s4283
      %4286 = dma.vmem_to_hbm [thread:$0]  %s4284, 32, %s10, [#allocation3]
    $region45: #{forward.1} parent=1 // pred_fallthru
      _
    // Predicated region
    $region46: #{forward.1} parent=1 // pred_check
      _
    $region47: #{forward.1} parent=1 // pred_check_branch
      %4288 = sbr.rel (0) target = $region49
    $region48: #{forward.1} parent=1 // pred_region
      %4289 = dma.done [#allocation3], 32
    $region49: #{forward.1} parent=1 // pred_fallthru
      _
    %4290 = vsyncpa [#allocation3], 1

</llo_original>
